<compile_context>
chip_gen: v7x
topology: tpu7x:2x2x1
jax: 0.10.0
libtpu: 0.0.40
codegen_flags: <defaults>
</compile_context>

<pallas_src>
import jax
import jax.numpy as jnp
from jax.experimental import pallas as pl
from jax.experimental.pallas import tpu as pltpu


# ------------------------------------------------------------------ helpers

def _tile(n, cap):
    """Largest legal tile: `cap` if it divides n, else the full dim (always legal)."""
    if n >= cap and n % cap == 0:
        return cap
    return n


_NODE_TILE_CAP = 128    # tile over the node (row) dimension
_NBR_TILE_CAP = 256     # tile over the neighbor (reduction) dimension


# ------------------------------------------------------------------ kernels

def _query_embed_kernel(x_ref, mask_ref, w_ref, b_ref, o_ref):
    # x: [tq, S, D] f32, mask: [tq, S] i32 (nonzero = valid token)
    # masked mean-pool (VPU mul + XLU sublane reduce) -> bf16 MXU matmul -> ReLU
    x = x_ref[...].astype(jnp.float32)
    valid = (mask_ref[...] != 0).astype(jnp.float32)               # [tq, S]
    pooled = jnp.sum(x * valid[..., None], axis=1)                 # [tq, D]
    cnt = jnp.maximum(jnp.sum(valid, axis=1, keepdims=True), 1.0)  # [tq, 1]
    pooled = pooled / cnt
    h = jnp.dot(pooled.astype(jnp.bfloat16), w_ref[...],
                preferred_element_type=jnp.float32) + b_ref[...]
    o_ref[...] = jnp.maximum(h, 0.0).astype(o_ref.dtype)


def _product_embed_kernel(x_ref, w_ref, b_ref, o_ref):
    # x: [tp, D] bf16, w: [D, H] bf16 -> Linear -> ReLU
    h = jnp.dot(x_ref[...], w_ref[...],
                preferred_element_type=jnp.float32) + b_ref[...]
    o_ref[...] = jnp.maximum(h, 0.0).astype(o_ref.dtype)


def _gnn_half_kernel(a_ref, hn_ref, hs_ref, w_ref, b_ref, o_ref, acc_ref):
    # One node-type update of a weighted hetero GraphConv:
    #   out = ReLU([h_self | A @ h_nbr] @ [W_self ; W_nbr] + b)
    # a : [tm, tk] bf16 weighted adjacency block (dst-tile x src-tile)
    # hn: [tk, H]  bf16 neighbor embeddings (reduction-axis block)
    # hs: [tm, H]  bf16 self embeddings
    # w : [2H, H]  bf16 stacked [W_self ; W_nbr]
    # b : [1, H]   f32
    k = pl.program_id(1)

    @pl.when(k == 0)
    def _():
        acc_ref[...] = jnp.zeros_like(acc_ref)

    acc_ref[...] += jnp.dot(a_ref[...], hn_ref[...],
                            preferred_element_type=jnp.float32)

    @pl.when(k == pl.num_programs(1) - 1)
    def _():
        # fused K=2H projection: one MXU call instead of two thin K=H calls
        hcat = jnp.concatenate(
            [hs_ref[...], acc_ref[...].astype(jnp.bfloat16)], axis=-1)   # [tm, 2H] bf16
        out = jnp.dot(hcat, w_ref[...],
                      preferred_element_type=jnp.float32) + b_ref[...]
        o_ref[...] = jnp.maximum(out, 0.0).astype(o_ref.dtype)


# ------------------------------------------------------------------ wrappers

def query_node_embedder(x, attention_mask, w, b):
    Nq, S, D = x.shape
    H = w.shape[1]
    tq = _tile(Nq, _NODE_TILE_CAP)
    return pl.pallas_call(
        _query_embed_kernel,
        grid=(Nq // tq,),
        in_specs=[
            pl.BlockSpec((tq, S, D), lambda i: (i, 0, 0)),
            pl.BlockSpec((tq, S), lambda i: (i, 0)),
            pl.BlockSpec((D, H), lambda i: (0, 0)),
            pl.BlockSpec((1, H), lambda i: (0, 0)),
        ],
        out_specs=pl.BlockSpec((tq, H), lambda i: (i, 0)),
        out_shape=jax.ShapeDtypeStruct((Nq, H), jnp.bfloat16),
        compiler_params=pltpu.CompilerParams(dimension_semantics=("parallel",)),
    )(x, attention_mask, w.astype(jnp.bfloat16), b)


def product_node_embedder(x, w, b):
    Np, D = x.shape
    H = w.shape[1]
    tp = _tile(Np, _NODE_TILE_CAP)
    return pl.pallas_call(
        _product_embed_kernel,
        grid=(Np // tp,),
        in_specs=[
            pl.BlockSpec((tp, D), lambda i: (i, 0)),
            pl.BlockSpec((D, H), lambda i: (0, 0)),
            pl.BlockSpec((1, H), lambda i: (0, 0)),
        ],
        out_specs=pl.BlockSpec((tp, H), lambda i: (i, 0)),
        out_shape=jax.ShapeDtypeStruct((Np, H), jnp.bfloat16),
        compiler_params=pltpu.CompilerParams(dimension_semantics=("parallel",)),
    )(x.astype(jnp.bfloat16), w.astype(jnp.bfloat16), b)


def _gnn_half(a, h_nbr, h_self, w_stack, b):
    Nd, Ns = a.shape                       # dst-nodes x src-nodes
    H = h_self.shape[1]
    tm = _tile(Nd, _NODE_TILE_CAP)
    tk = _tile(Ns, _NBR_TILE_CAP)
    return pl.pallas_call(
        _gnn_half_kernel,
        grid=(Nd // tm, Ns // tk),
        in_specs=[
            pl.BlockSpec((tm, tk), lambda i, k: (i, k)),     # adjacency tile
            pl.BlockSpec((tk, H), lambda i, k: (k, 0)),      # neighbor embeddings
            pl.BlockSpec((tm, H), lambda i, k: (i, 0)),      # self embeddings
            pl.BlockSpec((2 * H, H), lambda i, k: (0, 0)),   # stacked weights
            pl.BlockSpec((1, H), lambda i, k: (0, 0)),       # bias
        ],
        out_specs=pl.BlockSpec((tm, H), lambda i, k: (i, 0)),
        out_shape=jax.ShapeDtypeStruct((Nd, H), jnp.float32),
        scratch_shapes=[pltpu.VMEM((tm, H), jnp.float32)],
        compiler_params=pltpu.CompilerParams(
            dimension_semantics=("parallel", "arbitrary")),
    )(a, h_nbr, h_self, w_stack, b)


def gnn(embedding, edge_index_dict, edge_weight_dict, params):
    hq = embedding["query"]      # [Nq, H] bf16
    hp = embedding["product"]    # [Np, H] bf16
    Nq = hq.shape[0]
    Np = hp.shape[0]

    ei_qp = edge_index_dict[("query", "to", "product")]   # [2, E] rows: (src_q, dst_p)
    ew_qp = edge_weight_dict[("query", "to", "product")]
    ei_pq = edge_index_dict[("product", "to", "query")]   # [2, E] rows: (src_p, dst_q)
    ew_pq = edge_weight_dict[("product", "to", "query")]

    # Data-dependent scatter stays in XLA glue; adjacency stored bf16 (halves HBM traffic).
    # TODO(synk): for large graphs replace the dense adjacency with a CSR/edge-list
    # formulation using PrefetchScalarGridSpec + data-dependent index_map row gather.
    a_qp = jnp.zeros((Np, Nq), jnp.float32).at[ei_qp[1], ei_qp[0]].add(ew_qp).astype(jnp.bfloat16)
    a_pq = jnp.zeros((Nq, Np), jnp.float32).at[ei_pq[1], ei_pq[0]].add(ew_pq).astype(jnp.bfloat16)

    wq_stack = jnp.concatenate([params["wsq"], params["wnq"]], axis=0).astype(jnp.bfloat16)
    wp_stack = jnp.concatenate([params["wsp"], params["wnp"]], axis=0).astype(jnp.bfloat16)

    oq = _gnn_half(a_pq, hp, hq, wq_stack, params["bq"])
    op = _gnn_half(a_qp, hq, hp, wp_stack, params["bp"])
    return {"query": oq, "product": op}


def node_level_encoder(data, params):
    """Mirror of NodeLevelEncoder.forward."""
    embedding = {}
    embedding["query"] = query_node_embedder(
        data["query"]["x"], data["query"]["attention_mask"],
        params["wq_embed"], params["bq_embed"])
    embedding["product"] = product_node_embedder(
        data["product"]["x"], params["wp_embed"], params["bp_embed"])
    node_embedding = gnn(embedding, data["edge_index_dict"],
                         data["edge_weight_dict"], params)
    return node_embedding


# ------------------------------------------------------------------ reference (pure JAX, mirrors bf16 casts)

def _reference(data, params):
    bf16 = jnp.bfloat16
    x = data["query"]["x"]
    valid = (data["query"]["attention_mask"] != 0).astype(jnp.float32)
    pooled = jnp.sum(x * valid[..., None], axis=1)
    cnt = jnp.maximum(jnp.sum(valid, axis=1, keepdims=True), 1.0)
    pooled = pooled / cnt
    hq = jnp.maximum(
        jnp.dot(pooled.astype(bf16), params["wq_embed"].astype(bf16),
                preferred_element_type=jnp.float32) + params["bq_embed"], 0.0).astype(bf16)
    hp = jnp.maximum(
        jnp.dot(data["product"]["x"].astype(bf16), params["wp_embed"].astype(bf16),
                preferred_element_type=jnp.float32) + params["bp_embed"], 0.0).astype(bf16)

    Nq, Np = hq.shape[0], hp.shape[0]
    ei_qp = data["edge_index_dict"][("query", "to", "product")]
    ew_qp = data["edge_weight_dict"][("query", "to", "product")]
    ei_pq = data["edge_index_dict"][("product", "to", "query")]
    ew_pq = data["edge_weight_dict"][("product", "to", "query")]
    a_qp = jnp.zeros((Np, Nq), jnp.float32).at[ei_qp[1], ei_qp[0]].add(ew_qp).astype(bf16)
    a_pq = jnp.zeros((Nq, Np), jnp.float32).at[ei_pq[1], ei_pq[0]].add(ew_pq).astype(bf16)

    agg_q = jnp.dot(a_pq, hp, preferred_element_type=jnp.float32).astype(bf16)
    agg_p = jnp.dot(a_qp, hq, preferred_element_type=jnp.float32).astype(bf16)

    wq_stack = jnp.concatenate([params["wsq"], params["wnq"]], axis=0).astype(bf16)
    wp_stack = jnp.concatenate([params["wsp"], params["wnp"]], axis=0).astype(bf16)

    oq = jnp.maximum(jnp.dot(jnp.concatenate([hq, agg_q], axis=-1), wq_stack,
                             preferred_element_type=jnp.float32) + params["bq"], 0.0)
    op = jnp.maximum(jnp.dot(jnp.concatenate([hp, agg_p], axis=-1), wp_stack,
                             preferred_element_type=jnp.float32) + params["bp"], 0.0)
    return {"query": oq, "product": op}


# ------------------------------------------------------------------ main

if __name__ == "__main__":
    # Small but TPU-friendly shapes: lane-dense D = H = 128, multi-tile grids.
    Nq, Np, S, D, H = 256, 512, 8, 128, 128
    E_qp, E_pq = 1024, 1024

    key = jax.random.PRNGKey(0)
    ks = jax.random.split(key, 16)

    x_q = jax.random.normal(ks[0], (Nq, S, D), jnp.float32)
    lens = jax.random.randint(ks[1], (Nq,), 1, S + 1)
    attn_mask = (jnp.arange(S)[None, :] < lens[:, None]).astype(jnp.int32)
    x_p = jax.random.normal(ks[2], (Np, D), jnp.float32)

    ei_qp = jnp.stack([jax.random.randint(ks[3], (E_qp,), 0, Nq),
                       jax.random.randint(ks[4], (E_qp,), 0, Np)], axis=0)
    ew_qp = jax.random.uniform(ks[5], (E_qp,), jnp.float32)
    ei_pq = jnp.stack([jax.random.randint(ks[6], (E_pq,), 0, Np),
                       jax.random.randint(ks[7], (E_pq,), 0, Nq)], axis=0)
    ew_pq = jax.random.uniform(ks[8], (E_pq,), jnp.float32)

    data = {
        "query": {"x": x_q, "attention_mask": attn_mask},
        "product": {"x": x_p},
        "edge_index_dict": {("query", "to", "product"): ei_qp,
                            ("product", "to", "query"): ei_pq},
        "edge_weight_dict": {("query", "to", "product"): ew_qp,
                             ("product", "to", "query"): ew_pq},
    }

    def _init(k, shape, scale=0.1):
        return scale * jax.random.normal(k, shape, jnp.float32)

    params = {
        "wq_embed": _init(ks[9], (D, H)),
        "bq_embed": _init(ks[10], (1, H)),
        "wp_embed": _init(ks[11], (D, H)),
        "bp_embed": _init(ks[12], (1, H)),
        "wsq": _init(ks[13], (H, H)),
        "wnq": _init(ks[14], (H, H)),
        "bq": jnp.zeros((1, H), jnp.float32),
        "wsp": _init(ks[15], (H, H)),
        "wnp": _init(jax.random.PRNGKey(1), (H, H)),
        "bp": jnp.zeros((1, H), jnp.float32),
    }

    out = node_level_encoder(data, params)
    out = jax.tree_util.tree_map(jax.block_until_ready, out)

    ref = _reference(data, params)
    assert jnp.allclose(out["query"], ref["query"], atol=1e-2, rtol=1e-2)
    assert jnp.allclose(out["product"], ref["product"], atol=1e-2, rtol=1e-2)

    print("KERNEL_OK")
</pallas_src>

<mosaic_0001>
module attributes {stable_mosaic.version = 11 : i64} {
  func.func @_query_embed_kernel(%arg0: i32, %arg1: memref<128x8x128xf32, #tpu.memory_space<vmem>>, %arg2: memref<128x8xi32, #tpu.memory_space<vmem>>, %arg3: memref<128x128xbf16, #tpu.memory_space<vmem>>, %arg4: memref<1x128xf32, #tpu.memory_space<vmem>>, %arg5: memref<128x128xbf16, #tpu.memory_space<vmem>>) attributes {dimension_semantics = [#tpu.dimension_semantics<parallel>], iteration_bounds = array<i64: 2>, scalar_prefetch = 0 : i64, scratch_operands = 0 : i64, tpu.core_type = #tpu.core_type<tc>, window_params = [{transform_indices = @transform_0, window_bounds = array<i64: 128, 8, 128>}, {transform_indices = @transform_1, window_bounds = array<i64: 128, 8>}, {pipeline_mode = #tpu.pipeline_mode<synchronous>, transform_indices = @transform_2, window_bounds = array<i64: 128, 128>}, {pipeline_mode = #tpu.pipeline_mode<synchronous>, transform_indices = @transform_3, window_bounds = array<i64: 1, 128>}, {transform_indices = @transform_4, window_bounds = array<i64: 128, 128>}]} {
    %c0 = arith.constant 0 : index
    %c0_0 = arith.constant 0 : index
    %c0_1 = arith.constant 0 : index
    %0 = vector.load %arg1[%c0, %c0_0, %c0_1] : memref<128x8x128xf32, #tpu.memory_space<vmem>>, vector<128x8x128xf32>
    %c0_2 = arith.constant 0 : index
    %c0_3 = arith.constant 0 : index
    %1 = vector.load %arg2[%c0_2, %c0_3] : memref<128x8xi32, #tpu.memory_space<vmem>>, vector<128x8xi32>
    %c0_i32 = arith.constant 0 : i32
    %2 = vector.broadcast %c0_i32 : i32 to vector<128x8xi32>
    %3 = arith.cmpi ne, %1, %2 : vector<128x8xi32>
    %4 = arith.extui %3 : vector<128x8xi1> to vector<128x8xi32>
    %5 = arith.sitofp %4 : vector<128x8xi32> to vector<128x8xf32>
    %6 = vector.shape_cast %5 : vector<128x8xf32> to vector<128x8x1xf32>
    %7 = vector.broadcast %6 : vector<128x8x1xf32> to vector<128x8x128xf32>
    %8 = arith.mulf %0, %7 : vector<128x8x128xf32>
    %cst = arith.constant dense<0.000000e+00> : vector<128x128xf32>
    %9 = vector.multi_reduction <add>, %8, %cst [1] : vector<128x8x128xf32> to vector<128x128xf32>
    %cst_4 = arith.constant dense<0.000000e+00> : vector<128xf32>
    %10 = vector.multi_reduction <add>, %5, %cst_4 [1] : vector<128x8xf32> to vector<128xf32>
    %11 = vector.shape_cast %10 : vector<128xf32> to vector<128x1xf32>
    %cst_5 = arith.constant 1.000000e+00 : f32
    %12 = vector.broadcast %cst_5 : f32 to vector<128x1xf32>
    %13 = arith.maximumf %11, %12 : vector<128x1xf32>
    %14 = vector.broadcast %13 : vector<128x1xf32> to vector<128x128xf32>
    %15 = arith.divf %9, %14 : vector<128x128xf32>
    %16 = arith.truncf %15 : vector<128x128xf32> to vector<128x128xbf16>
    %c0_6 = arith.constant 0 : index
    %c0_7 = arith.constant 0 : index
    %17 = vector.load %arg3[%c0_6, %c0_7] : memref<128x128xbf16, #tpu.memory_space<vmem>>, vector<128x128xbf16>
    %cst_8 = arith.constant dense<0.000000e+00> : vector<128x128xf32>
    %18 = tpu.matmul %16, %17, %cst_8 {dimension_numbers = #tpu.dot_dimension_numbers<[1], [0], [0], [1], [0, 0, 1, 1], [], []>} : vector<128x128xbf16>, vector<128x128xbf16>, vector<128x128xf32> -> vector<128x128xf32>
    %c0_9 = arith.constant 0 : index
    %c0_10 = arith.constant 0 : index
    %19 = vector.load %arg4[%c0_9, %c0_10] : memref<1x128xf32, #tpu.memory_space<vmem>>, vector<1x128xf32>
    %20 = vector.broadcast %19 : vector<1x128xf32> to vector<128x128xf32>
    %21 = arith.addf %18, %20 : vector<128x128xf32>
    %cst_11 = arith.constant 0.000000e+00 : f32
    %22 = vector.broadcast %cst_11 : f32 to vector<128x128xf32>
    %23 = arith.maximumf %21, %22 : vector<128x128xf32>
    %24 = arith.truncf %23 : vector<128x128xf32> to vector<128x128xbf16>
    %c0_12 = arith.constant 0 : index
    %c0_13 = arith.constant 0 : index
    %25 = vector.load %arg5[%c0_12, %c0_13] : memref<128x128xbf16, #tpu.memory_space<vmem>>, vector<128x128xbf16>
    tpu.vector_store %arg5[%c0_12, %c0_13], %24 {strides = array<i32>} : memref<128x128xbf16, #tpu.memory_space<vmem>>, vector<128x128xbf16>,
    return
  }
  func.func @transform_0(%arg0: i32) -> (i32, i32, i32) {
    %c0_i32 = arith.constant 0 : i32
    %c0_i32_0 = arith.constant 0 : i32
    %c0_i32_1 = arith.constant 0 : i32
    return %arg0, %c0_i32, %c0_i32_0 : i32, i32, i32
  }
  func.func @transform_1(%arg0: i32) -> (i32, i32) {
    %c0_i32 = arith.constant 0 : i32
    %c0_i32_0 = arith.constant 0 : i32
    return %arg0, %c0_i32 : i32, i32
  }
  func.func @transform_2(%arg0: i32) -> (i32, i32) {
    %c0_i32 = arith.constant 0 : i32
    %c0_i32_0 = arith.constant 0 : i32
    %c0_i32_1 = arith.constant 0 : i32
    return %c0_i32, %c0_i32_0 : i32, i32
  }
  func.func @transform_3(%arg0: i32) -> (i32, i32) {
    %c0_i32 = arith.constant 0 : i32
    %c0_i32_0 = arith.constant 0 : i32
    %c0_i32_1 = arith.constant 0 : i32
    return %c0_i32, %c0_i32_0 : i32, i32
  }
  func.func @transform_4(%arg0: i32) -> (i32, i32) {
    %c0_i32 = arith.constant 0 : i32
    %c0_i32_0 = arith.constant 0 : i32
    return %arg0, %c0_i32 : i32, i32
  }
}

</mosaic_0001>

<llo_original>
// kernel: tpu_custom_call.1
$region0: #{tpu_custom_call.1}
  #allocation0 [shape = 'u32[]', space=smem, size = 0x4, offset = 0x4, fixed_abs, tag = 'smem constant byte address 0x4 - core index']
  #allocation1 [shape = 'u32[144,128]{1,0:T(1,128)}', space=vmem, size = 0x12000, scoped, tag = 'internal scratch']
  %s0 = inlined_call_operand.hbm [shape: f32[256,8,128], index: 0, kind: input, shape index: {}]
  %s1 = inlined_call_operand.vmem [shape: s32[256,8], index: 1, kind: input, shape index: {}]
  %s2 = inlined_call_operand.vmem [shape: bf16[128,128], index: 2, kind: input, shape index: {}]
  %s3 = inlined_call_operand.vmem [shape: f32[1,128], index: 3, kind: input, shape index: {}]
  %s4 = inlined_call_operand.hbm [shape: bf16[256,128], index: 4, kind: output, shape index: {}]
  %s5 = sld [smem:[#allocation0]]
  $region53: #{tpu_custom_call.1} parent=0
    _
  %s7 = ssub.s32 1, %s5
  %s8 = scalar_select 0, %s7, %s5
  $region1: #{tpu_custom_call.1} parent=0
    #allocation2 [shape = 'u8[1048576]{0}', space=vmem, size = 0x100000, scoped, tag = 'input window, operand 0']
    #allocation3 [shape = 's32[2]{0}', space=sflag, size = 0x8, scoped, tag = 'scoped memory for tpu_custom_call.1']
    #allocation4 [shape = 's32[2]{0}', space=sflag, size = 0x8, scoped, tag = 'scoped memory for tpu_custom_call.1']
    #allocation5 [shape = 'u8[65536]{0}', space=vmem, size = 0x10000, scoped, tag = 'output window, operand 0']
    %9 = vsyncpa [#allocation3], 0
    %s10 = scalar_lea.sflag [#allocation3], 1
    %11 = vsyncpa %s10, 0
    %12 = vsyncpa [#allocation4], 0
    %s13 = scalar_lea.sflag [#allocation4], 1
    %14 = vsyncpa %s13, 0
    loop: start=0, step=1, limit=4
    $region2: #{tpu_custom_call.1} parent=1 // loop_pre_header
      _
    $region3: #{tpu_custom_call.1} parent=1 // loop_header
      %s16 = sphi 0, %s20
      %p17 = scmp.ge.s32.totalorder %s16, 4
      %s26 = sphi 0, %s28
      %s29 = sphi 0, %s26
      %s30 = sphi 0, %s29
      %s46 = sphi 0, %s30
      %s52 = sphi 0, %s54
      %s55 = sphi 0, %s52
      %s56 = sphi 0, %s55
      %s72 = sphi 0, %s56
      %s76 = sphi 0, %s76
      %s78 = sphi 0, %s76
      %s79 = sphi 0, %s78
      %s93 = sphi 0, %s79
      %s97 = sphi 0, %s97
      %s99 = sphi 0, %s97
      %s100 = sphi 0, %s99
      %s114 = sphi 0, %s100
      %s120 = sphi 0, %s122
      %s123 = sphi 0, %s120
      %s124 = sphi 0, %s123
      %s140 = sphi 0, %s124
    $region4: #{tpu_custom_call.1} parent=1 // loop_header_branch
      %19 = sbr.rel (%p17) target = $region8
    $region5: #{tpu_custom_call.1} parent=1 // loop_body
      %s21 = ssub.s32 %s16, 1
      %s22 = ssub.s32 %s16, 2
      %s23 = sadd.s32 %s16, 1
      %s24 = ssub.s32 %s16, %s23
      %p25 = scmp.eq.s32.totalorder %s24, 0
      %s27 = sadd.s32 %s26, 1
      %s28 = scalar_select %p25, %s26, %s27
      %p31 = pneg %p25
      %p32 = scmp.eq.s32.totalorder %s16, 1
      %p33 = por %p31, %p32
      %p34 = scmp.ne.s32.totalorder %s26, %s29
      %p35 = scmp.eq.s32.totalorder %s16, 0
      %p36 = por %p34, %p35
      %p37 = scmp.ne.s32.totalorder %s26, %s29
      %p38 = scmp.eq.s32.totalorder %s21, 1
      %p39 = por %p37, %p38
      %p40 = scmp.ne.s32.totalorder %s29, %s30
      %p41 = scmp.eq.s32.totalorder %s21, 0
      %p42 = por %p40, %p41
      %p43 = scmp.ne.s32.totalorder %s29, %s30
      %p44 = scmp.eq.s32.totalorder %s22, 1
      %p45 = por %p43, %p44
      %p47 = scmp.ne.s32.totalorder %s30, %s46
      %p48 = scmp.eq.s32.totalorder %s22, 0
      %p49 = por %p47, %p48
      %s50 = ssub.s32 %s16, %s23
      %p51 = scmp.eq.s32.totalorder %s50, 0
      %s53 = sadd.s32 %s52, 1
      %s54 = scalar_select %p51, %s52, %s53
      %p57 = pneg %p51
      %p58 = scmp.eq.s32.totalorder %s16, 1
      %p59 = por %p57, %p58
      %p60 = scmp.ne.s32.totalorder %s52, %s55
      %p61 = scmp.eq.s32.totalorder %s16, 0
      %p62 = por %p60, %p61
      %p63 = scmp.ne.s32.totalorder %s52, %s55
      %p64 = scmp.eq.s32.totalorder %s21, 1
      %p65 = por %p63, %p64
      %p66 = scmp.ne.s32.totalorder %s55, %s56
      %p67 = scmp.eq.s32.totalorder %s21, 0
      %p68 = por %p66, %p67
      %p69 = scmp.ne.s32.totalorder %s55, %s56
      %p70 = scmp.eq.s32.totalorder %s22, 1
      %p71 = por %p69, %p70
      %p73 = scmp.ne.s32.totalorder %s56, %s72
      %p74 = scmp.eq.s32.totalorder %s22, 0
      %p75 = por %p73, %p74
      %s77 = sadd.s32 %s76, 1
      %p80 = scmp.eq.s32.totalorder %s16, 1
      %p81 = scmp.ne.s32.totalorder %s76, %s78
      %p82 = scmp.eq.s32.totalorder %s16, 0
      %p83 = por %p81, %p82
      %p84 = scmp.ne.s32.totalorder %s76, %s78
      %p85 = scmp.eq.s32.totalorder %s21, 1
      %p86 = por %p84, %p85
      %p87 = scmp.ne.s32.totalorder %s78, %s79
      %p88 = scmp.eq.s32.totalorder %s21, 0
      %p89 = por %p87, %p88
      %p90 = scmp.ne.s32.totalorder %s78, %s79
      %p91 = scmp.eq.s32.totalorder %s22, 1
      %p92 = por %p90, %p91
      %p94 = scmp.ne.s32.totalorder %s79, %s93
      %p95 = scmp.eq.s32.totalorder %s22, 0
      %p96 = por %p94, %p95
      %s98 = sadd.s32 %s97, 1
      %p101 = scmp.eq.s32.totalorder %s16, 1
      %p102 = scmp.ne.s32.totalorder %s97, %s99
      %p103 = scmp.eq.s32.totalorder %s16, 0
      %p104 = por %p102, %p103
      %p105 = scmp.ne.s32.totalorder %s97, %s99
      %p106 = scmp.eq.s32.totalorder %s21, 1
      %p107 = por %p105, %p106
      %p108 = scmp.ne.s32.totalorder %s99, %s100
      %p109 = scmp.eq.s32.totalorder %s21, 0
      %p110 = por %p108, %p109
      %p111 = scmp.ne.s32.totalorder %s99, %s100
      %p112 = scmp.eq.s32.totalorder %s22, 1
      %p113 = por %p111, %p112
      %p115 = scmp.ne.s32.totalorder %s100, %s114
      %p116 = scmp.eq.s32.totalorder %s22, 0
      %p117 = por %p115, %p116
      %s118 = ssub.s32 %s16, %s23
      %p119 = scmp.eq.s32.totalorder %s118, 0
      %s121 = sadd.s32 %s120, 1
      %s122 = scalar_select %p119, %s120, %s121
      %p125 = pneg %p119
      %p126 = scmp.eq.s32.totalorder %s16, 1
      %p127 = por %p125, %p126
      %p128 = scmp.ne.s32.totalorder %s120, %s123
      %p129 = scmp.eq.s32.totalorder %s16, 0
      %p130 = por %p128, %p129
      %p131 = scmp.ne.s32.totalorder %s120, %s123
      %p132 = scmp.eq.s32.totalorder %s21, 1
      %p133 = por %p131, %p132
      %p134 = scmp.ne.s32.totalorder %s123, %s124
      %p135 = scmp.eq.s32.totalorder %s21, 0
      %p136 = por %p134, %p135
      %p137 = scmp.ne.s32.totalorder %s123, %s124
      %p138 = scmp.eq.s32.totalorder %s22, 1
      %p139 = por %p137, %p138
      %p141 = scmp.ne.s32.totalorder %s124, %s140
      %p142 = scmp.eq.s32.totalorder %s22, 0
      %p143 = por %p141, %p142
      %p144 = scmp.le.s32.totalorder 1, %s16
      %p145 = scmp.lt.s32.totalorder %s16, 3
      %p146 = pnand %p144, %p145
      %p147 = pneg %p146
      // Predicated region
      $region9: #{tpu_custom_call.1} parent=5 // pred_check
        _
      $region10: #{tpu_custom_call.1} parent=5 // pred_check_branch
        %149 = sbr.rel (%p146) target = $region12
      $region11: #{tpu_custom_call.1} parent=5 // pred_region
        %s150 = ssub.s32 %s16, 1
        // Predicated region
        $region13: #{tpu_custom_call.1} parent=11 // pred_check
          %p151 = pneg %p89
        $region14: #{tpu_custom_call.1} parent=11 // pred_check_branch
          %153 = sbr.rel (%p151) target = $region16
        $region15: #{tpu_custom_call.1} parent=11 // pred_region
          _
        $region16: #{tpu_custom_call.1} parent=11 // pred_fallthru
          _
        // Predicated region
        $region17: #{tpu_custom_call.1} parent=11 // pred_check
          %p154 = pneg %p110
        $region18: #{tpu_custom_call.1} parent=11 // pred_check_branch
          %156 = sbr.rel (%p154) target = $region20
        $region19: #{tpu_custom_call.1} parent=11 // pred_region
          _
        $region20: #{tpu_custom_call.1} parent=11 // pred_fallthru
          _
      $region12: #{tpu_custom_call.1} parent=5 // pred_fallthru
        _
      %p157 = scmp.lt.s32.totalorder %s16, 2
      // Predicated region
      $region21: #{tpu_custom_call.1} parent=5 // pred_check
        %p158 = pneg %p157
      $region22: #{tpu_custom_call.1} parent=5 // pred_check_branch
        %160 = sbr.rel (%p158) target = $region24
      $region23: #{tpu_custom_call.1} parent=5 // pred_region
        // Predicated region
        $region25: #{tpu_custom_call.1} parent=23 // pred_check
          %p161 = pneg %p36
        $region26: #{tpu_custom_call.1} parent=23 // pred_check_branch
          %163 = sbr.rel (%p161) target = $region28
        $region27: #{tpu_custom_call.1} parent=23 // pred_region
          %s164 = sand.u32 %s26, 1
          %s165 = scalar_lea.sflag [#allocation3], %s164
          %s166 = sand.u32 %s26, 1
          %s167 = smul.addr %s166, 1024
          %s168 = scalar_lea.vmem [#allocation2], %s167
          %s169 = smul.u32 128, %s16
          %s171 = ssub.s32 16384, 16384
          %172 = vsyncadd %s165, %s171
          %s173 = smul.addr %s169, 128
          %s174 = scalar_lea.hbm %s0, %s173
          %s175 = sshll.u32 %s168, 4
          %s176 = int_to_ptr.vmem [resolvable:$true] %s175
          %181 = dma.hbm_to_vmem [thread:$0]  %s174, 16384, %s176, %s165, 128, 128, 8
        $region28: #{tpu_custom_call.1} parent=23 // pred_fallthru
          _
        // Predicated region
        $region29: #{tpu_custom_call.1} parent=23 // pred_check
          %p182 = pneg %p62
        $region30: #{tpu_custom_call.1} parent=23 // pred_check_branch
          %184 = sbr.rel (%p182) target = $region32
        $region31: #{tpu_custom_call.1} parent=23 // pred_region
          %s185 = smul.u32 16, %s16
          %p186 = scmp.lt.s32.totalorder %s185, 31
          %s187 = scalar_select %p186, %s185, 31
          %s188 = smul.addr %s187, 8
          %s189 = scalar_lea.vmem %s1, %s188
          %s190 = smul.u32 16, %s16
        $region32: #{tpu_custom_call.1} parent=23 // pred_fallthru
          _
      $region24: #{tpu_custom_call.1} parent=5 // pred_fallthru
        _
      %p191 = scmp.le.s32.totalorder 1, %s16
      %p192 = scmp.lt.s32.totalorder %s16, 3
      %p193 = pnand %p191, %p192
      %p194 = pneg %p193
      // Predicated region
      $region33: #{tpu_custom_call.1} parent=5 // pred_check
        _
      $region34: #{tpu_custom_call.1} parent=5 // pred_check_branch
        %196 = sbr.rel (%p193) target = $region36
      $region35: #{tpu_custom_call.1} parent=5 // pred_region
        %s197 = ssub.s32 %s16, 1
        %s198 = sand.u32 %s29, 1
        %s199 = scalar_lea.sflag [#allocation3], %s198
        %s200 = sand.u32 %s29, 1
        %s201 = smul.addr %s200, 1024
        %s202 = scalar_lea.vmem [#allocation2], %s201
        // Predicated region
        $region37: #{tpu_custom_call.1} parent=35 // pred_check
          %p203 = pneg %p42
        $region38: #{tpu_custom_call.1} parent=35 // pred_check_branch
          %205 = sbr.rel (%p203) target = $region40
        $region39: #{tpu_custom_call.1} parent=35 // pred_region
          %206 = dma.done %s199, 16384
        $region40: #{tpu_custom_call.1} parent=35 // pred_fallthru
          _
        %s207 = sand.u32 %s29, 1
        %s208 = scalar_lea.sflag [#allocation3], %s207
        %s209 = sand.u32 %s29, 1
        %s210 = smul.addr %s209, 1024
        %s211 = scalar_lea.vmem [#allocation2], %s210
        %p212 = pneg %p42
        %p213 = pneg %p39
        %s214 = smul.u32 16, %s21
        %p215 = scmp.lt.s32.totalorder %s214, 31
        %s216 = scalar_select %p215, %s214, 31
        %s217 = smul.addr %s216, 8
        %s218 = scalar_lea.vmem %s1, %s217
        %p219 = pneg %p68
        %p220 = pneg %p65
        %p221 = pneg %p89
        %p222 = pneg %p86
        %p223 = pneg %p110
        %p224 = pneg %p107
        %p225 = pneg %p136
        %p226 = pneg %p133
        %s227 = sand.u32 %s123, 1
        %s228 = scalar_lea.sflag [#allocation4], %s227
        %s229 = sand.u32 %s123, 1
        %s230 = smul.addr %s229, 64
        %s231 = scalar_lea.vmem [#allocation5], %s230
        %s232 = smul.u32 128, %s21
        %s233 = smul.u32 16, %s21
        %p234 = scmp.lt.s32.totalorder %s233, 31
        %s235 = scalar_select %p234, %s233, 31
        %s236 = smul.addr %s235, 8
        %s237 = scalar_lea.vmem %s1, %s236
        %s238 = smul.u32 16, %s21
        %s239 = smul.u32 16, %s21
        %v241 = vld [vmem:[%s202] sm:$0xff]
        %v242 = vld [vmem:[%s202 + $0x8] sm:$0xff]
        %v243 = vld [vmem:[%s202 + $0x10] sm:$0xff]
        %v244 = vld [vmem:[%s202 + $0x18] sm:$0xff]
        %v245 = vld [vmem:[%s202 + $0x20] sm:$0xff]
        %v246 = vld [vmem:[%s202 + $0x28] sm:$0xff]
        %v247 = vld [vmem:[%s202 + $0x30] sm:$0xff]
        %v248 = vld [vmem:[%s202 + $0x38] sm:$0xff]
        %v249 = vld [vmem:[%s202 + $0x40] sm:$0xff]
        %v250 = vld [vmem:[%s202 + $0x48] sm:$0xff]
        %v251 = vld [vmem:[%s202 + $0x50] sm:$0xff]
        %v252 = vld [vmem:[%s202 + $0x58] sm:$0xff]
        %v253 = vld [vmem:[%s202 + $0x60] sm:$0xff]
        %v254 = vld [vmem:[%s202 + $0x68] sm:$0xff]
        %v255 = vld [vmem:[%s202 + $0x70] sm:$0xff]
        %v256 = vld [vmem:[%s202 + $0x78] sm:$0xff]
        %v257 = vld [vmem:[%s202 + $0x80] sm:$0xff]
        %v258 = vld [vmem:[%s202 + $0x88] sm:$0xff]
        %v259 = vld [vmem:[%s202 + $0x90] sm:$0xff]
        %v260 = vld [vmem:[%s202 + $0x98] sm:$0xff]
        %v261 = vld [vmem:[%s202 + $0xa0] sm:$0xff]
        %v262 = vld [vmem:[%s202 + $0xa8] sm:$0xff]
        %v263 = vld [vmem:[%s202 + $0xb0] sm:$0xff]
        %v264 = vld [vmem:[%s202 + $0xb8] sm:$0xff]
        %v265 = vld [vmem:[%s202 + $0xc0] sm:$0xff]
        %v266 = vld [vmem:[%s202 + $0xc8] sm:$0xff]
        %v267 = vld [vmem:[%s202 + $0xd0] sm:$0xff]
        %v268 = vld [vmem:[%s202 + $0xd8] sm:$0xff]
        %v269 = vld [vmem:[%s202 + $0xe0] sm:$0xff]
        %v270 = vld [vmem:[%s202 + $0xe8] sm:$0xff]
        %v271 = vld [vmem:[%s202 + $0xf0] sm:$0xff]
        %v272 = vld [vmem:[%s202 + $0xf8] sm:$0xff]
        %v273 = vld [vmem:[%s202 + $0x100] sm:$0xff]
        %v274 = vld [vmem:[%s202 + $0x108] sm:$0xff]
        %v275 = vld [vmem:[%s202 + $0x110] sm:$0xff]
        %v276 = vld [vmem:[%s202 + $0x118] sm:$0xff]
        %v277 = vld [vmem:[%s202 + $0x120] sm:$0xff]
        %v278 = vld [vmem:[%s202 + $0x128] sm:$0xff]
        %v279 = vld [vmem:[%s202 + $0x130] sm:$0xff]
        %v280 = vld [vmem:[%s202 + $0x138] sm:$0xff]
        %v281 = vld [vmem:[%s202 + $0x140] sm:$0xff]
        %v282 = vld [vmem:[%s202 + $0x148] sm:$0xff]
        %v283 = vld [vmem:[%s202 + $0x150] sm:$0xff]
        %v284 = vld [vmem:[%s202 + $0x158] sm:$0xff]
        %v285 = vld [vmem:[%s202 + $0x160] sm:$0xff]
        %v286 = vld [vmem:[%s202 + $0x168] sm:$0xff]
        %v287 = vld [vmem:[%s202 + $0x170] sm:$0xff]
        %v288 = vld [vmem:[%s202 + $0x178] sm:$0xff]
        %v289 = vld [vmem:[%s202 + $0x180] sm:$0xff]
        %v290 = vld [vmem:[%s202 + $0x188] sm:$0xff]
        %v291 = vld [vmem:[%s202 + $0x190] sm:$0xff]
        %v292 = vld [vmem:[%s202 + $0x198] sm:$0xff]
        %v293 = vld [vmem:[%s202 + $0x1a0] sm:$0xff]
        %v294 = vld [vmem:[%s202 + $0x1a8] sm:$0xff]
        %v295 = vld [vmem:[%s202 + $0x1b0] sm:$0xff]
        %v296 = vld [vmem:[%s202 + $0x1b8] sm:$0xff]
        %v297 = vld [vmem:[%s202 + $0x1c0] sm:$0xff]
        %v298 = vld [vmem:[%s202 + $0x1c8] sm:$0xff]
        %v299 = vld [vmem:[%s202 + $0x1d0] sm:$0xff]
        %v300 = vld [vmem:[%s202 + $0x1d8] sm:$0xff]
        %v301 = vld [vmem:[%s202 + $0x1e0] sm:$0xff]
        %v302 = vld [vmem:[%s202 + $0x1e8] sm:$0xff]
        %v303 = vld [vmem:[%s202 + $0x1f0] sm:$0xff]
        %v304 = vld [vmem:[%s202 + $0x1f8] sm:$0xff]
        %v305 = vld [vmem:[%s202 + $0x200] sm:$0xff]
        %v306 = vld [vmem:[%s202 + $0x208] sm:$0xff]
        %v307 = vld [vmem:[%s202 + $0x210] sm:$0xff]
        %v308 = vld [vmem:[%s202 + $0x218] sm:$0xff]
        %v309 = vld [vmem:[%s202 + $0x220] sm:$0xff]
        %v310 = vld [vmem:[%s202 + $0x228] sm:$0xff]
        %v311 = vld [vmem:[%s202 + $0x230] sm:$0xff]
        %v312 = vld [vmem:[%s202 + $0x238] sm:$0xff]
        %v313 = vld [vmem:[%s202 + $0x240] sm:$0xff]
        %v314 = vld [vmem:[%s202 + $0x248] sm:$0xff]
        %v315 = vld [vmem:[%s202 + $0x250] sm:$0xff]
        %v316 = vld [vmem:[%s202 + $0x258] sm:$0xff]
        %v317 = vld [vmem:[%s202 + $0x260] sm:$0xff]
        %v318 = vld [vmem:[%s202 + $0x268] sm:$0xff]
        %v319 = vld [vmem:[%s202 + $0x270] sm:$0xff]
        %v320 = vld [vmem:[%s202 + $0x278] sm:$0xff]
        %v321 = vld [vmem:[%s202 + $0x280] sm:$0xff]
        %v322 = vld [vmem:[%s202 + $0x288] sm:$0xff]
        %v323 = vld [vmem:[%s202 + $0x290] sm:$0xff]
        %v324 = vld [vmem:[%s202 + $0x298] sm:$0xff]
        %v325 = vld [vmem:[%s202 + $0x2a0] sm:$0xff]
        %v326 = vld [vmem:[%s202 + $0x2a8] sm:$0xff]
        %v327 = vld [vmem:[%s202 + $0x2b0] sm:$0xff]
        %v328 = vld [vmem:[%s202 + $0x2b8] sm:$0xff]
        %v329 = vld [vmem:[%s202 + $0x2c0] sm:$0xff]
        %v330 = vld [vmem:[%s202 + $0x2c8] sm:$0xff]
        %v331 = vld [vmem:[%s202 + $0x2d0] sm:$0xff]
        %v332 = vld [vmem:[%s202 + $0x2d8] sm:$0xff]
        %v333 = vld [vmem:[%s202 + $0x2e0] sm:$0xff]
        %v334 = vld [vmem:[%s202 + $0x2e8] sm:$0xff]
        %v335 = vld [vmem:[%s202 + $0x2f0] sm:$0xff]
        %v336 = vld [vmem:[%s202 + $0x2f8] sm:$0xff]
        %v337 = vld [vmem:[%s202 + $0x300] sm:$0xff]
        %v338 = vld [vmem:[%s202 + $0x308] sm:$0xff]
        %v339 = vld [vmem:[%s202 + $0x310] sm:$0xff]
        %v340 = vld [vmem:[%s202 + $0x318] sm:$0xff]
        %v341 = vld [vmem:[%s202 + $0x320] sm:$0xff]
        %v342 = vld [vmem:[%s202 + $0x328] sm:$0xff]
        %v343 = vld [vmem:[%s202 + $0x330] sm:$0xff]
        %v344 = vld [vmem:[%s202 + $0x338] sm:$0xff]
        %v345 = vld [vmem:[%s202 + $0x340] sm:$0xff]
        %v346 = vld [vmem:[%s202 + $0x348] sm:$0xff]
        %v347 = vld [vmem:[%s202 + $0x350] sm:$0xff]
        %v348 = vld [vmem:[%s202 + $0x358] sm:$0xff]
        %v349 = vld [vmem:[%s202 + $0x360] sm:$0xff]
        %v350 = vld [vmem:[%s202 + $0x368] sm:$0xff]
        %v351 = vld [vmem:[%s202 + $0x370] sm:$0xff]
        %v352 = vld [vmem:[%s202 + $0x378] sm:$0xff]
        %v353 = vld [vmem:[%s202 + $0x380] sm:$0xff]
        %v354 = vld [vmem:[%s202 + $0x388] sm:$0xff]
        %v355 = vld [vmem:[%s202 + $0x390] sm:$0xff]
        %v356 = vld [vmem:[%s202 + $0x398] sm:$0xff]
        %v357 = vld [vmem:[%s202 + $0x3a0] sm:$0xff]
        %v358 = vld [vmem:[%s202 + $0x3a8] sm:$0xff]
        %v359 = vld [vmem:[%s202 + $0x3b0] sm:$0xff]
        %v360 = vld [vmem:[%s202 + $0x3b8] sm:$0xff]
        %v361 = vld [vmem:[%s202 + $0x3c0] sm:$0xff]
        %v362 = vld [vmem:[%s202 + $0x3c8] sm:$0xff]
        %v363 = vld [vmem:[%s202 + $0x3d0] sm:$0xff]
        %v364 = vld [vmem:[%s202 + $0x3d8] sm:$0xff]
        %v365 = vld [vmem:[%s202 + $0x3e0] sm:$0xff]
        %v366 = vld [vmem:[%s202 + $0x3e8] sm:$0xff]
        %v367 = vld [vmem:[%s202 + $0x3f0] sm:$0xff]
        %v368 = vld [vmem:[%s202 + $0x3f8] sm:$0xff]
        %v369 = vld [vmem:[%s237] sm:$0xff]
        %v370 = vld [vmem:[%s237 + $0x8] sm:$0xff]
        %v371 = vld [vmem:[%s237 + $0x10] sm:$0xff]
        %v372 = vld [vmem:[%s237 + $0x18] sm:$0xff]
        %v373 = vld [vmem:[%s237 + $0x20] sm:$0xff]
        %v374 = vld [vmem:[%s237 + $0x28] sm:$0xff]
        %v375 = vld [vmem:[%s237 + $0x30] sm:$0xff]
        %v376 = vld [vmem:[%s237 + $0x38] sm:$0xff]
        %v377 = vld [vmem:[%s237 + $0x40] sm:$0xff]
        %v378 = vld [vmem:[%s237 + $0x48] sm:$0xff]
        %v379 = vld [vmem:[%s237 + $0x50] sm:$0xff]
        %v380 = vld [vmem:[%s237 + $0x58] sm:$0xff]
        %v381 = vld [vmem:[%s237 + $0x60] sm:$0xff]
        %v382 = vld [vmem:[%s237 + $0x68] sm:$0xff]
        %v383 = vld [vmem:[%s237 + $0x70] sm:$0xff]
        %v384 = vld [vmem:[%s237 + $0x78] sm:$0xff]
        %vm385 = vcmp.ne.s32.totalorder %v369, 0
        %vm386 = vcmp.ne.s32.totalorder %v370, 0
        %vm387 = vcmp.ne.s32.totalorder %v371, 0
        %vm388 = vcmp.ne.s32.totalorder %v372, 0
        %vm389 = vcmp.ne.s32.totalorder %v373, 0
        %vm390 = vcmp.ne.s32.totalorder %v374, 0
        %vm391 = vcmp.ne.s32.totalorder %v375, 0
        %vm392 = vcmp.ne.s32.totalorder %v376, 0
        %vm393 = vcmp.ne.s32.totalorder %v377, 0
        %vm394 = vcmp.ne.s32.totalorder %v378, 0
        %vm395 = vcmp.ne.s32.totalorder %v379, 0
        %vm396 = vcmp.ne.s32.totalorder %v380, 0
        %vm397 = vcmp.ne.s32.totalorder %v381, 0
        %vm398 = vcmp.ne.s32.totalorder %v382, 0
        %vm399 = vcmp.ne.s32.totalorder %v383, 0
        %vm400 = vcmp.ne.s32.totalorder %v384, 0
        %v401 = vsel %vm385, 1, 0
        %v402 = vsel %vm386, 1, 0
        %v403 = vsel %vm387, 1, 0
        %v404 = vsel %vm388, 1, 0
        %v405 = vsel %vm389, 1, 0
        %v406 = vsel %vm390, 1, 0
        %v407 = vsel %vm391, 1, 0
        %v408 = vsel %vm392, 1, 0
        %v409 = vsel %vm393, 1, 0
        %v410 = vsel %vm394, 1, 0
        %v411 = vsel %vm395, 1, 0
        %v412 = vsel %vm396, 1, 0
        %v413 = vsel %vm397, 1, 0
        %v414 = vsel %vm398, 1, 0
        %v415 = vsel %vm399, 1, 0
        %v416 = vsel %vm400, 1, 0
        %v417 = vcvt.s32.f32 %v401
        %v418 = vcvt.s32.f32 %v402
        %v419 = vcvt.s32.f32 %v403
        %v420 = vcvt.s32.f32 %v404
        %v421 = vcvt.s32.f32 %v405
        %v422 = vcvt.s32.f32 %v406
        %v423 = vcvt.s32.f32 %v407
        %v424 = vcvt.s32.f32 %v408
        %v425 = vcvt.s32.f32 %v409
        %v426 = vcvt.s32.f32 %v410
        %v427 = vcvt.s32.f32 %v411
        %v428 = vcvt.s32.f32 %v412
        %v429 = vcvt.s32.f32 %v413
        %v430 = vcvt.s32.f32 %v414
        %v431 = vcvt.s32.f32 %v415
        %v432 = vcvt.s32.f32 %v416
        %v433 = vlaneseq
        %v434 = vshrl.u32 %v433, 7
        %v435 = vsub.s32 0, %v434
        %v436 = vrot.slane %v417, %v435
        %438 = vbcast.lane.b32.xlu0 %v436, 256
        %v439 = vpop.permute.xlu0 %438
        %v440 = vlaneseq
        %v441 = vshrl.u32 %v440, 7
        %v442 = vsub.s32 1, %v441
        %v443 = vrot.slane %v417, %v442
        %445 = vbcast.lane.b32.xlu0 %v443, 256
        %v446 = vpop.permute.xlu0 %445
        %v447 = vlaneseq
        %v448 = vshrl.u32 %v447, 7
        %v449 = vsub.s32 2, %v448
        %v450 = vrot.slane %v417, %v449
        %452 = vbcast.lane.b32.xlu0 %v450, 256
        %v453 = vpop.permute.xlu0 %452
        %v454 = vlaneseq
        %v455 = vshrl.u32 %v454, 7
        %v456 = vsub.s32 3, %v455
        %v457 = vrot.slane %v417, %v456
        %459 = vbcast.lane.b32.xlu0 %v457, 256
        %v460 = vpop.permute.xlu0 %459
        %v461 = vlaneseq
        %v462 = vshrl.u32 %v461, 7
        %v463 = vsub.s32 4, %v462
        %v464 = vrot.slane %v417, %v463
        %466 = vbcast.lane.b32.xlu0 %v464, 256
        %v467 = vpop.permute.xlu0 %466
        %v468 = vlaneseq
        %v469 = vshrl.u32 %v468, 7
        %v470 = vsub.s32 5, %v469
        %v471 = vrot.slane %v417, %v470
        %473 = vbcast.lane.b32.xlu0 %v471, 256
        %v474 = vpop.permute.xlu0 %473
        %v475 = vlaneseq
        %v476 = vshrl.u32 %v475, 7
        %v477 = vsub.s32 6, %v476
        %v478 = vrot.slane %v417, %v477
        %480 = vbcast.lane.b32.xlu0 %v478, 256
        %v481 = vpop.permute.xlu0 %480
        %v482 = vlaneseq
        %v483 = vshrl.u32 %v482, 7
        %v484 = vsub.s32 7, %v483
        %v485 = vrot.slane %v417, %v484
        %487 = vbcast.lane.b32.xlu0 %v485, 256
        %v488 = vpop.permute.xlu0 %487
        %v489 = vlaneseq
        %v490 = vshrl.u32 %v489, 7
        %v491 = vsub.s32 0, %v490
        %v492 = vrot.slane %v418, %v491
        %494 = vbcast.lane.b32.xlu0 %v492, 256
        %v495 = vpop.permute.xlu0 %494
        %v496 = vlaneseq
        %v497 = vshrl.u32 %v496, 7
        %v498 = vsub.s32 1, %v497
        %v499 = vrot.slane %v418, %v498
        %501 = vbcast.lane.b32.xlu0 %v499, 256
        %v502 = vpop.permute.xlu0 %501
        %v503 = vlaneseq
        %v504 = vshrl.u32 %v503, 7
        %v505 = vsub.s32 2, %v504
        %v506 = vrot.slane %v418, %v505
        %508 = vbcast.lane.b32.xlu0 %v506, 256
        %v509 = vpop.permute.xlu0 %508
        %v510 = vlaneseq
        %v511 = vshrl.u32 %v510, 7
        %v512 = vsub.s32 3, %v511
        %v513 = vrot.slane %v418, %v512
        %515 = vbcast.lane.b32.xlu0 %v513, 256
        %v516 = vpop.permute.xlu0 %515
        %v517 = vlaneseq
        %v518 = vshrl.u32 %v517, 7
        %v519 = vsub.s32 4, %v518
        %v520 = vrot.slane %v418, %v519
        %522 = vbcast.lane.b32.xlu0 %v520, 256
        %v523 = vpop.permute.xlu0 %522
        %v524 = vlaneseq
        %v525 = vshrl.u32 %v524, 7
        %v526 = vsub.s32 5, %v525
        %v527 = vrot.slane %v418, %v526
        %529 = vbcast.lane.b32.xlu0 %v527, 256
        %v530 = vpop.permute.xlu0 %529
        %v531 = vlaneseq
        %v532 = vshrl.u32 %v531, 7
        %v533 = vsub.s32 6, %v532
        %v534 = vrot.slane %v418, %v533
        %536 = vbcast.lane.b32.xlu0 %v534, 256
        %v537 = vpop.permute.xlu0 %536
        %v538 = vlaneseq
        %v539 = vshrl.u32 %v538, 7
        %v540 = vsub.s32 7, %v539
        %v541 = vrot.slane %v418, %v540
        %543 = vbcast.lane.b32.xlu0 %v541, 256
        %v544 = vpop.permute.xlu0 %543
        %v545 = vlaneseq
        %v546 = vshrl.u32 %v545, 7
        %v547 = vsub.s32 0, %v546
        %v548 = vrot.slane %v419, %v547
        %550 = vbcast.lane.b32.xlu0 %v548, 256
        %v551 = vpop.permute.xlu0 %550
        %v552 = vlaneseq
        %v553 = vshrl.u32 %v552, 7
        %v554 = vsub.s32 1, %v553
        %v555 = vrot.slane %v419, %v554
        %557 = vbcast.lane.b32.xlu0 %v555, 256
        %v558 = vpop.permute.xlu0 %557
        %v559 = vlaneseq
        %v560 = vshrl.u32 %v559, 7
        %v561 = vsub.s32 2, %v560
        %v562 = vrot.slane %v419, %v561
        %564 = vbcast.lane.b32.xlu0 %v562, 256
        %v565 = vpop.permute.xlu0 %564
        %v566 = vlaneseq
        %v567 = vshrl.u32 %v566, 7
        %v568 = vsub.s32 3, %v567
        %v569 = vrot.slane %v419, %v568
        %571 = vbcast.lane.b32.xlu0 %v569, 256
        %v572 = vpop.permute.xlu0 %571
        %v573 = vlaneseq
        %v574 = vshrl.u32 %v573, 7
        %v575 = vsub.s32 4, %v574
        %v576 = vrot.slane %v419, %v575
        %578 = vbcast.lane.b32.xlu0 %v576, 256
        %v579 = vpop.permute.xlu0 %578
        %v580 = vlaneseq
        %v581 = vshrl.u32 %v580, 7
        %v582 = vsub.s32 5, %v581
        %v583 = vrot.slane %v419, %v582
        %585 = vbcast.lane.b32.xlu0 %v583, 256
        %v586 = vpop.permute.xlu0 %585
        %v587 = vlaneseq
        %v588 = vshrl.u32 %v587, 7
        %v589 = vsub.s32 6, %v588
        %v590 = vrot.slane %v419, %v589
        %592 = vbcast.lane.b32.xlu0 %v590, 256
        %v593 = vpop.permute.xlu0 %592
        %v594 = vlaneseq
        %v595 = vshrl.u32 %v594, 7
        %v596 = vsub.s32 7, %v595
        %v597 = vrot.slane %v419, %v596
        %599 = vbcast.lane.b32.xlu0 %v597, 256
        %v600 = vpop.permute.xlu0 %599
        %v601 = vlaneseq
        %v602 = vshrl.u32 %v601, 7
        %v603 = vsub.s32 0, %v602
        %v604 = vrot.slane %v420, %v603
        %606 = vbcast.lane.b32.xlu0 %v604, 256
        %v607 = vpop.permute.xlu0 %606
        %v608 = vlaneseq
        %v609 = vshrl.u32 %v608, 7
        %v610 = vsub.s32 1, %v609
        %v611 = vrot.slane %v420, %v610
        %613 = vbcast.lane.b32.xlu0 %v611, 256
        %v614 = vpop.permute.xlu0 %613
        %v615 = vlaneseq
        %v616 = vshrl.u32 %v615, 7
        %v617 = vsub.s32 2, %v616
        %v618 = vrot.slane %v420, %v617
        %620 = vbcast.lane.b32.xlu0 %v618, 256
        %v621 = vpop.permute.xlu0 %620
        %v622 = vlaneseq
        %v623 = vshrl.u32 %v622, 7
        %v624 = vsub.s32 3, %v623
        %v625 = vrot.slane %v420, %v624
        %627 = vbcast.lane.b32.xlu0 %v625, 256
        %v628 = vpop.permute.xlu0 %627
        %v629 = vlaneseq
        %v630 = vshrl.u32 %v629, 7
        %v631 = vsub.s32 4, %v630
        %v632 = vrot.slane %v420, %v631
        %634 = vbcast.lane.b32.xlu0 %v632, 256
        %v635 = vpop.permute.xlu0 %634
        %v636 = vlaneseq
        %v637 = vshrl.u32 %v636, 7
        %v638 = vsub.s32 5, %v637
        %v639 = vrot.slane %v420, %v638
        %641 = vbcast.lane.b32.xlu0 %v639, 256
        %v642 = vpop.permute.xlu0 %641
        %v643 = vlaneseq
        %v644 = vshrl.u32 %v643, 7
        %v645 = vsub.s32 6, %v644
        %v646 = vrot.slane %v420, %v645
        %648 = vbcast.lane.b32.xlu0 %v646, 256
        %v649 = vpop.permute.xlu0 %648
        %v650 = vlaneseq
        %v651 = vshrl.u32 %v650, 7
        %v652 = vsub.s32 7, %v651
        %v653 = vrot.slane %v420, %v652
        %655 = vbcast.lane.b32.xlu0 %v653, 256
        %v656 = vpop.permute.xlu0 %655
        %v657 = vlaneseq
        %v658 = vshrl.u32 %v657, 7
        %v659 = vsub.s32 0, %v658
        %v660 = vrot.slane %v421, %v659
        %662 = vbcast.lane.b32.xlu0 %v660, 256
        %v663 = vpop.permute.xlu0 %662
        %v664 = vlaneseq
        %v665 = vshrl.u32 %v664, 7
        %v666 = vsub.s32 1, %v665
        %v667 = vrot.slane %v421, %v666
        %669 = vbcast.lane.b32.xlu0 %v667, 256
        %v670 = vpop.permute.xlu0 %669
        %v671 = vlaneseq
        %v672 = vshrl.u32 %v671, 7
        %v673 = vsub.s32 2, %v672
        %v674 = vrot.slane %v421, %v673
        %676 = vbcast.lane.b32.xlu0 %v674, 256
        %v677 = vpop.permute.xlu0 %676
        %v678 = vlaneseq
        %v679 = vshrl.u32 %v678, 7
        %v680 = vsub.s32 3, %v679
        %v681 = vrot.slane %v421, %v680
        %683 = vbcast.lane.b32.xlu0 %v681, 256
        %v684 = vpop.permute.xlu0 %683
        %v685 = vlaneseq
        %v686 = vshrl.u32 %v685, 7
        %v687 = vsub.s32 4, %v686
        %v688 = vrot.slane %v421, %v687
        %690 = vbcast.lane.b32.xlu0 %v688, 256
        %v691 = vpop.permute.xlu0 %690
        %v692 = vlaneseq
        %v693 = vshrl.u32 %v692, 7
        %v694 = vsub.s32 5, %v693
        %v695 = vrot.slane %v421, %v694
        %697 = vbcast.lane.b32.xlu0 %v695, 256
        %v698 = vpop.permute.xlu0 %697
        %v699 = vlaneseq
        %v700 = vshrl.u32 %v699, 7
        %v701 = vsub.s32 6, %v700
        %v702 = vrot.slane %v421, %v701
        %704 = vbcast.lane.b32.xlu0 %v702, 256
        %v705 = vpop.permute.xlu0 %704
        %v706 = vlaneseq
        %v707 = vshrl.u32 %v706, 7
        %v708 = vsub.s32 7, %v707
        %v709 = vrot.slane %v421, %v708
        %711 = vbcast.lane.b32.xlu0 %v709, 256
        %v712 = vpop.permute.xlu0 %711
        %v713 = vlaneseq
        %v714 = vshrl.u32 %v713, 7
        %v715 = vsub.s32 0, %v714
        %v716 = vrot.slane %v422, %v715
        %718 = vbcast.lane.b32.xlu0 %v716, 256
        %v719 = vpop.permute.xlu0 %718
        %v720 = vlaneseq
        %v721 = vshrl.u32 %v720, 7
        %v722 = vsub.s32 1, %v721
        %v723 = vrot.slane %v422, %v722
        %725 = vbcast.lane.b32.xlu0 %v723, 256
        %v726 = vpop.permute.xlu0 %725
        %v727 = vlaneseq
        %v728 = vshrl.u32 %v727, 7
        %v729 = vsub.s32 2, %v728
        %v730 = vrot.slane %v422, %v729
        %732 = vbcast.lane.b32.xlu0 %v730, 256
        %v733 = vpop.permute.xlu0 %732
        %v734 = vlaneseq
        %v735 = vshrl.u32 %v734, 7
        %v736 = vsub.s32 3, %v735
        %v737 = vrot.slane %v422, %v736
        %739 = vbcast.lane.b32.xlu0 %v737, 256
        %v740 = vpop.permute.xlu0 %739
        %v741 = vlaneseq
        %v742 = vshrl.u32 %v741, 7
        %v743 = vsub.s32 4, %v742
        %v744 = vrot.slane %v422, %v743
        %746 = vbcast.lane.b32.xlu0 %v744, 256
        %v747 = vpop.permute.xlu0 %746
        %v748 = vlaneseq
        %v749 = vshrl.u32 %v748, 7
        %v750 = vsub.s32 5, %v749
        %v751 = vrot.slane %v422, %v750
        %753 = vbcast.lane.b32.xlu0 %v751, 256
        %v754 = vpop.permute.xlu0 %753
        %v755 = vlaneseq
        %v756 = vshrl.u32 %v755, 7
        %v757 = vsub.s32 6, %v756
        %v758 = vrot.slane %v422, %v757
        %760 = vbcast.lane.b32.xlu0 %v758, 256
        %v761 = vpop.permute.xlu0 %760
        %v762 = vlaneseq
        %v763 = vshrl.u32 %v762, 7
        %v764 = vsub.s32 7, %v763
        %v765 = vrot.slane %v422, %v764
        %767 = vbcast.lane.b32.xlu0 %v765, 256
        %v768 = vpop.permute.xlu0 %767
        %v769 = vlaneseq
        %v770 = vshrl.u32 %v769, 7
        %v771 = vsub.s32 0, %v770
        %v772 = vrot.slane %v423, %v771
        %774 = vbcast.lane.b32.xlu0 %v772, 256
        %v775 = vpop.permute.xlu0 %774
        %v776 = vlaneseq
        %v777 = vshrl.u32 %v776, 7
        %v778 = vsub.s32 1, %v777
        %v779 = vrot.slane %v423, %v778
        %781 = vbcast.lane.b32.xlu0 %v779, 256
        %v782 = vpop.permute.xlu0 %781
        %v783 = vlaneseq
        %v784 = vshrl.u32 %v783, 7
        %v785 = vsub.s32 2, %v784
        %v786 = vrot.slane %v423, %v785
        %788 = vbcast.lane.b32.xlu0 %v786, 256
        %v789 = vpop.permute.xlu0 %788
        %v790 = vlaneseq
        %v791 = vshrl.u32 %v790, 7
        %v792 = vsub.s32 3, %v791
        %v793 = vrot.slane %v423, %v792
        %795 = vbcast.lane.b32.xlu0 %v793, 256
        %v796 = vpop.permute.xlu0 %795
        %v797 = vlaneseq
        %v798 = vshrl.u32 %v797, 7
        %v799 = vsub.s32 4, %v798
        %v800 = vrot.slane %v423, %v799
        %802 = vbcast.lane.b32.xlu0 %v800, 256
        %v803 = vpop.permute.xlu0 %802
        %v804 = vlaneseq
        %v805 = vshrl.u32 %v804, 7
        %v806 = vsub.s32 5, %v805
        %v807 = vrot.slane %v423, %v806
        %809 = vbcast.lane.b32.xlu0 %v807, 256
        %v810 = vpop.permute.xlu0 %809
        %v811 = vlaneseq
        %v812 = vshrl.u32 %v811, 7
        %v813 = vsub.s32 6, %v812
        %v814 = vrot.slane %v423, %v813
        %816 = vbcast.lane.b32.xlu0 %v814, 256
        %v817 = vpop.permute.xlu0 %816
        %v818 = vlaneseq
        %v819 = vshrl.u32 %v818, 7
        %v820 = vsub.s32 7, %v819
        %v821 = vrot.slane %v423, %v820
        %823 = vbcast.lane.b32.xlu0 %v821, 256
        %v824 = vpop.permute.xlu0 %823
        %v825 = vlaneseq
        %v826 = vshrl.u32 %v825, 7
        %v827 = vsub.s32 0, %v826
        %v828 = vrot.slane %v424, %v827
        %830 = vbcast.lane.b32.xlu0 %v828, 256
        %v831 = vpop.permute.xlu0 %830
        %v832 = vlaneseq
        %v833 = vshrl.u32 %v832, 7
        %v834 = vsub.s32 1, %v833
        %v835 = vrot.slane %v424, %v834
        %837 = vbcast.lane.b32.xlu0 %v835, 256
        %v838 = vpop.permute.xlu0 %837
        %v839 = vlaneseq
        %v840 = vshrl.u32 %v839, 7
        %v841 = vsub.s32 2, %v840
        %v842 = vrot.slane %v424, %v841
        %844 = vbcast.lane.b32.xlu0 %v842, 256
        %v845 = vpop.permute.xlu0 %844
        %v846 = vlaneseq
        %v847 = vshrl.u32 %v846, 7
        %v848 = vsub.s32 3, %v847
        %v849 = vrot.slane %v424, %v848
        %851 = vbcast.lane.b32.xlu0 %v849, 256
        %v852 = vpop.permute.xlu0 %851
        %v853 = vlaneseq
        %v854 = vshrl.u32 %v853, 7
        %v855 = vsub.s32 4, %v854
        %v856 = vrot.slane %v424, %v855
        %858 = vbcast.lane.b32.xlu0 %v856, 256
        %v859 = vpop.permute.xlu0 %858
        %v860 = vlaneseq
        %v861 = vshrl.u32 %v860, 7
        %v862 = vsub.s32 5, %v861
        %v863 = vrot.slane %v424, %v862
        %865 = vbcast.lane.b32.xlu0 %v863, 256
        %v866 = vpop.permute.xlu0 %865
        %v867 = vlaneseq
        %v868 = vshrl.u32 %v867, 7
        %v869 = vsub.s32 6, %v868
        %v870 = vrot.slane %v424, %v869
        %872 = vbcast.lane.b32.xlu0 %v870, 256
        %v873 = vpop.permute.xlu0 %872
        %v874 = vlaneseq
        %v875 = vshrl.u32 %v874, 7
        %v876 = vsub.s32 7, %v875
        %v877 = vrot.slane %v424, %v876
        %879 = vbcast.lane.b32.xlu0 %v877, 256
        %v880 = vpop.permute.xlu0 %879
        %v881 = vlaneseq
        %v882 = vshrl.u32 %v881, 7
        %v883 = vsub.s32 0, %v882
        %v884 = vrot.slane %v425, %v883
        %886 = vbcast.lane.b32.xlu0 %v884, 256
        %v887 = vpop.permute.xlu0 %886
        %v888 = vlaneseq
        %v889 = vshrl.u32 %v888, 7
        %v890 = vsub.s32 1, %v889
        %v891 = vrot.slane %v425, %v890
        %893 = vbcast.lane.b32.xlu0 %v891, 256
        %v894 = vpop.permute.xlu0 %893
        %v895 = vlaneseq
        %v896 = vshrl.u32 %v895, 7
        %v897 = vsub.s32 2, %v896
        %v898 = vrot.slane %v425, %v897
        %900 = vbcast.lane.b32.xlu0 %v898, 256
        %v901 = vpop.permute.xlu0 %900
        %v902 = vlaneseq
        %v903 = vshrl.u32 %v902, 7
        %v904 = vsub.s32 3, %v903
        %v905 = vrot.slane %v425, %v904
        %907 = vbcast.lane.b32.xlu0 %v905, 256
        %v908 = vpop.permute.xlu0 %907
        %v909 = vlaneseq
        %v910 = vshrl.u32 %v909, 7
        %v911 = vsub.s32 4, %v910
        %v912 = vrot.slane %v425, %v911
        %914 = vbcast.lane.b32.xlu0 %v912, 256
        %v915 = vpop.permute.xlu0 %914
        %v916 = vlaneseq
        %v917 = vshrl.u32 %v916, 7
        %v918 = vsub.s32 5, %v917
        %v919 = vrot.slane %v425, %v918
        %921 = vbcast.lane.b32.xlu0 %v919, 256
        %v922 = vpop.permute.xlu0 %921
        %v923 = vlaneseq
        %v924 = vshrl.u32 %v923, 7
        %v925 = vsub.s32 6, %v924
        %v926 = vrot.slane %v425, %v925
        %928 = vbcast.lane.b32.xlu0 %v926, 256
        %v929 = vpop.permute.xlu0 %928
        %v930 = vlaneseq
        %v931 = vshrl.u32 %v930, 7
        %v932 = vsub.s32 7, %v931
        %v933 = vrot.slane %v425, %v932
        %935 = vbcast.lane.b32.xlu0 %v933, 256
        %v936 = vpop.permute.xlu0 %935
        %v937 = vlaneseq
        %v938 = vshrl.u32 %v937, 7
        %v939 = vsub.s32 0, %v938
        %v940 = vrot.slane %v426, %v939
        %942 = vbcast.lane.b32.xlu0 %v940, 256
        %v943 = vpop.permute.xlu0 %942
        %v944 = vlaneseq
        %v945 = vshrl.u32 %v944, 7
        %v946 = vsub.s32 1, %v945
        %v947 = vrot.slane %v426, %v946
        %949 = vbcast.lane.b32.xlu0 %v947, 256
        %v950 = vpop.permute.xlu0 %949
        %v951 = vlaneseq
        %v952 = vshrl.u32 %v951, 7
        %v953 = vsub.s32 2, %v952
        %v954 = vrot.slane %v426, %v953
        %956 = vbcast.lane.b32.xlu0 %v954, 256
        %v957 = vpop.permute.xlu0 %956
        %v958 = vlaneseq
        %v959 = vshrl.u32 %v958, 7
        %v960 = vsub.s32 3, %v959
        %v961 = vrot.slane %v426, %v960
        %963 = vbcast.lane.b32.xlu0 %v961, 256
        %v964 = vpop.permute.xlu0 %963
        %v965 = vlaneseq
        %v966 = vshrl.u32 %v965, 7
        %v967 = vsub.s32 4, %v966
        %v968 = vrot.slane %v426, %v967
        %970 = vbcast.lane.b32.xlu0 %v968, 256
        %v971 = vpop.permute.xlu0 %970
        %v972 = vlaneseq
        %v973 = vshrl.u32 %v972, 7
        %v974 = vsub.s32 5, %v973
        %v975 = vrot.slane %v426, %v974
        %977 = vbcast.lane.b32.xlu0 %v975, 256
        %v978 = vpop.permute.xlu0 %977
        %v979 = vlaneseq
        %v980 = vshrl.u32 %v979, 7
        %v981 = vsub.s32 6, %v980
        %v982 = vrot.slane %v426, %v981
        %984 = vbcast.lane.b32.xlu0 %v982, 256
        %v985 = vpop.permute.xlu0 %984
        %v986 = vlaneseq
        %v987 = vshrl.u32 %v986, 7
        %v988 = vsub.s32 7, %v987
        %v989 = vrot.slane %v426, %v988
        %991 = vbcast.lane.b32.xlu0 %v989, 256
        %v992 = vpop.permute.xlu0 %991
        %v993 = vlaneseq
        %v994 = vshrl.u32 %v993, 7
        %v995 = vsub.s32 0, %v994
        %v996 = vrot.slane %v427, %v995
        %998 = vbcast.lane.b32.xlu0 %v996, 256
        %v999 = vpop.permute.xlu0 %998
        %v1000 = vlaneseq
        %v1001 = vshrl.u32 %v1000, 7
        %v1002 = vsub.s32 1, %v1001
        %v1003 = vrot.slane %v427, %v1002
        %1005 = vbcast.lane.b32.xlu0 %v1003, 256
        %v1006 = vpop.permute.xlu0 %1005
        %v1007 = vlaneseq
        %v1008 = vshrl.u32 %v1007, 7
        %v1009 = vsub.s32 2, %v1008
        %v1010 = vrot.slane %v427, %v1009
        %1012 = vbcast.lane.b32.xlu0 %v1010, 256
        %v1013 = vpop.permute.xlu0 %1012
        %v1014 = vlaneseq
        %v1015 = vshrl.u32 %v1014, 7
        %v1016 = vsub.s32 3, %v1015
        %v1017 = vrot.slane %v427, %v1016
        %1019 = vbcast.lane.b32.xlu0 %v1017, 256
        %v1020 = vpop.permute.xlu0 %1019
        %v1021 = vlaneseq
        %v1022 = vshrl.u32 %v1021, 7
        %v1023 = vsub.s32 4, %v1022
        %v1024 = vrot.slane %v427, %v1023
        %1026 = vbcast.lane.b32.xlu0 %v1024, 256
        %v1027 = vpop.permute.xlu0 %1026
        %v1028 = vlaneseq
        %v1029 = vshrl.u32 %v1028, 7
        %v1030 = vsub.s32 5, %v1029
        %v1031 = vrot.slane %v427, %v1030
        %1033 = vbcast.lane.b32.xlu0 %v1031, 256
        %v1034 = vpop.permute.xlu0 %1033
        %v1035 = vlaneseq
        %v1036 = vshrl.u32 %v1035, 7
        %v1037 = vsub.s32 6, %v1036
        %v1038 = vrot.slane %v427, %v1037
        %1040 = vbcast.lane.b32.xlu0 %v1038, 256
        %v1041 = vpop.permute.xlu0 %1040
        %v1042 = vlaneseq
        %v1043 = vshrl.u32 %v1042, 7
        %v1044 = vsub.s32 7, %v1043
        %v1045 = vrot.slane %v427, %v1044
        %1047 = vbcast.lane.b32.xlu0 %v1045, 256
        %v1048 = vpop.permute.xlu0 %1047
        %v1049 = vlaneseq
        %v1050 = vshrl.u32 %v1049, 7
        %v1051 = vsub.s32 0, %v1050
        %v1052 = vrot.slane %v428, %v1051
        %1054 = vbcast.lane.b32.xlu0 %v1052, 256
        %v1055 = vpop.permute.xlu0 %1054
        %v1056 = vlaneseq
        %v1057 = vshrl.u32 %v1056, 7
        %v1058 = vsub.s32 1, %v1057
        %v1059 = vrot.slane %v428, %v1058
        %1061 = vbcast.lane.b32.xlu0 %v1059, 256
        %v1062 = vpop.permute.xlu0 %1061
        %v1063 = vlaneseq
        %v1064 = vshrl.u32 %v1063, 7
        %v1065 = vsub.s32 2, %v1064
        %v1066 = vrot.slane %v428, %v1065
        %1068 = vbcast.lane.b32.xlu0 %v1066, 256
        %v1069 = vpop.permute.xlu0 %1068
        %v1070 = vlaneseq
        %v1071 = vshrl.u32 %v1070, 7
        %v1072 = vsub.s32 3, %v1071
        %v1073 = vrot.slane %v428, %v1072
        %1075 = vbcast.lane.b32.xlu0 %v1073, 256
        %v1076 = vpop.permute.xlu0 %1075
        %v1077 = vlaneseq
        %v1078 = vshrl.u32 %v1077, 7
        %v1079 = vsub.s32 4, %v1078
        %v1080 = vrot.slane %v428, %v1079
        %1082 = vbcast.lane.b32.xlu0 %v1080, 256
        %v1083 = vpop.permute.xlu0 %1082
        %v1084 = vlaneseq
        %v1085 = vshrl.u32 %v1084, 7
        %v1086 = vsub.s32 5, %v1085
        %v1087 = vrot.slane %v428, %v1086
        %1089 = vbcast.lane.b32.xlu0 %v1087, 256
        %v1090 = vpop.permute.xlu0 %1089
        %v1091 = vlaneseq
        %v1092 = vshrl.u32 %v1091, 7
        %v1093 = vsub.s32 6, %v1092
        %v1094 = vrot.slane %v428, %v1093
        %1096 = vbcast.lane.b32.xlu0 %v1094, 256
        %v1097 = vpop.permute.xlu0 %1096
        %v1098 = vlaneseq
        %v1099 = vshrl.u32 %v1098, 7
        %v1100 = vsub.s32 7, %v1099
        %v1101 = vrot.slane %v428, %v1100
        %1103 = vbcast.lane.b32.xlu0 %v1101, 256
        %v1104 = vpop.permute.xlu0 %1103
        %v1105 = vlaneseq
        %v1106 = vshrl.u32 %v1105, 7
        %v1107 = vsub.s32 0, %v1106
        %v1108 = vrot.slane %v429, %v1107
        %1110 = vbcast.lane.b32.xlu0 %v1108, 256
        %v1111 = vpop.permute.xlu0 %1110
        %v1112 = vlaneseq
        %v1113 = vshrl.u32 %v1112, 7
        %v1114 = vsub.s32 1, %v1113
        %v1115 = vrot.slane %v429, %v1114
        %1117 = vbcast.lane.b32.xlu0 %v1115, 256
        %v1118 = vpop.permute.xlu0 %1117
        %v1119 = vlaneseq
        %v1120 = vshrl.u32 %v1119, 7
        %v1121 = vsub.s32 2, %v1120
        %v1122 = vrot.slane %v429, %v1121
        %1124 = vbcast.lane.b32.xlu0 %v1122, 256
        %v1125 = vpop.permute.xlu0 %1124
        %v1126 = vlaneseq
        %v1127 = vshrl.u32 %v1126, 7
        %v1128 = vsub.s32 3, %v1127
        %v1129 = vrot.slane %v429, %v1128
        %1131 = vbcast.lane.b32.xlu0 %v1129, 256
        %v1132 = vpop.permute.xlu0 %1131
        %v1133 = vlaneseq
        %v1134 = vshrl.u32 %v1133, 7
        %v1135 = vsub.s32 4, %v1134
        %v1136 = vrot.slane %v429, %v1135
        %1138 = vbcast.lane.b32.xlu0 %v1136, 256
        %v1139 = vpop.permute.xlu0 %1138
        %v1140 = vlaneseq
        %v1141 = vshrl.u32 %v1140, 7
        %v1142 = vsub.s32 5, %v1141
        %v1143 = vrot.slane %v429, %v1142
        %1145 = vbcast.lane.b32.xlu0 %v1143, 256
        %v1146 = vpop.permute.xlu0 %1145
        %v1147 = vlaneseq
        %v1148 = vshrl.u32 %v1147, 7
        %v1149 = vsub.s32 6, %v1148
        %v1150 = vrot.slane %v429, %v1149
        %1152 = vbcast.lane.b32.xlu0 %v1150, 256
        %v1153 = vpop.permute.xlu0 %1152
        %v1154 = vlaneseq
        %v1155 = vshrl.u32 %v1154, 7
        %v1156 = vsub.s32 7, %v1155
        %v1157 = vrot.slane %v429, %v1156
        %1159 = vbcast.lane.b32.xlu0 %v1157, 256
        %v1160 = vpop.permute.xlu0 %1159
        %v1161 = vlaneseq
        %v1162 = vshrl.u32 %v1161, 7
        %v1163 = vsub.s32 0, %v1162
        %v1164 = vrot.slane %v430, %v1163
        %1166 = vbcast.lane.b32.xlu0 %v1164, 256
        %v1167 = vpop.permute.xlu0 %1166
        %v1168 = vlaneseq
        %v1169 = vshrl.u32 %v1168, 7
        %v1170 = vsub.s32 1, %v1169
        %v1171 = vrot.slane %v430, %v1170
        %1173 = vbcast.lane.b32.xlu0 %v1171, 256
        %v1174 = vpop.permute.xlu0 %1173
        %v1175 = vlaneseq
        %v1176 = vshrl.u32 %v1175, 7
        %v1177 = vsub.s32 2, %v1176
        %v1178 = vrot.slane %v430, %v1177
        %1180 = vbcast.lane.b32.xlu0 %v1178, 256
        %v1181 = vpop.permute.xlu0 %1180
        %v1182 = vlaneseq
        %v1183 = vshrl.u32 %v1182, 7
        %v1184 = vsub.s32 3, %v1183
        %v1185 = vrot.slane %v430, %v1184
        %1187 = vbcast.lane.b32.xlu0 %v1185, 256
        %v1188 = vpop.permute.xlu0 %1187
        %v1189 = vlaneseq
        %v1190 = vshrl.u32 %v1189, 7
        %v1191 = vsub.s32 4, %v1190
        %v1192 = vrot.slane %v430, %v1191
        %1194 = vbcast.lane.b32.xlu0 %v1192, 256
        %v1195 = vpop.permute.xlu0 %1194
        %v1196 = vlaneseq
        %v1197 = vshrl.u32 %v1196, 7
        %v1198 = vsub.s32 5, %v1197
        %v1199 = vrot.slane %v430, %v1198
        %1201 = vbcast.lane.b32.xlu0 %v1199, 256
        %v1202 = vpop.permute.xlu0 %1201
        %v1203 = vlaneseq
        %v1204 = vshrl.u32 %v1203, 7
        %v1205 = vsub.s32 6, %v1204
        %v1206 = vrot.slane %v430, %v1205
        %1208 = vbcast.lane.b32.xlu0 %v1206, 256
        %v1209 = vpop.permute.xlu0 %1208
        %v1210 = vlaneseq
        %v1211 = vshrl.u32 %v1210, 7
        %v1212 = vsub.s32 7, %v1211
        %v1213 = vrot.slane %v430, %v1212
        %1215 = vbcast.lane.b32.xlu0 %v1213, 256
        %v1216 = vpop.permute.xlu0 %1215
        %v1217 = vlaneseq
        %v1218 = vshrl.u32 %v1217, 7
        %v1219 = vsub.s32 0, %v1218
        %v1220 = vrot.slane %v431, %v1219
        %1222 = vbcast.lane.b32.xlu0 %v1220, 256
        %v1223 = vpop.permute.xlu0 %1222
        %v1224 = vlaneseq
        %v1225 = vshrl.u32 %v1224, 7
        %v1226 = vsub.s32 1, %v1225
        %v1227 = vrot.slane %v431, %v1226
        %1229 = vbcast.lane.b32.xlu0 %v1227, 256
        %v1230 = vpop.permute.xlu0 %1229
        %v1231 = vlaneseq
        %v1232 = vshrl.u32 %v1231, 7
        %v1233 = vsub.s32 2, %v1232
        %v1234 = vrot.slane %v431, %v1233
        %1236 = vbcast.lane.b32.xlu0 %v1234, 256
        %v1237 = vpop.permute.xlu0 %1236
        %v1238 = vlaneseq
        %v1239 = vshrl.u32 %v1238, 7
        %v1240 = vsub.s32 3, %v1239
        %v1241 = vrot.slane %v431, %v1240
        %1243 = vbcast.lane.b32.xlu0 %v1241, 256
        %v1244 = vpop.permute.xlu0 %1243
        %v1245 = vlaneseq
        %v1246 = vshrl.u32 %v1245, 7
        %v1247 = vsub.s32 4, %v1246
        %v1248 = vrot.slane %v431, %v1247
        %1250 = vbcast.lane.b32.xlu0 %v1248, 256
        %v1251 = vpop.permute.xlu0 %1250
        %v1252 = vlaneseq
        %v1253 = vshrl.u32 %v1252, 7
        %v1254 = vsub.s32 5, %v1253
        %v1255 = vrot.slane %v431, %v1254
        %1257 = vbcast.lane.b32.xlu0 %v1255, 256
        %v1258 = vpop.permute.xlu0 %1257
        %v1259 = vlaneseq
        %v1260 = vshrl.u32 %v1259, 7
        %v1261 = vsub.s32 6, %v1260
        %v1262 = vrot.slane %v431, %v1261
        %1264 = vbcast.lane.b32.xlu0 %v1262, 256
        %v1265 = vpop.permute.xlu0 %1264
        %v1266 = vlaneseq
        %v1267 = vshrl.u32 %v1266, 7
        %v1268 = vsub.s32 7, %v1267
        %v1269 = vrot.slane %v431, %v1268
        %1271 = vbcast.lane.b32.xlu0 %v1269, 256
        %v1272 = vpop.permute.xlu0 %1271
        %v1273 = vlaneseq
        %v1274 = vshrl.u32 %v1273, 7
        %v1275 = vsub.s32 0, %v1274
        %v1276 = vrot.slane %v432, %v1275
        %1278 = vbcast.lane.b32.xlu0 %v1276, 256
        %v1279 = vpop.permute.xlu0 %1278
        %v1280 = vlaneseq
        %v1281 = vshrl.u32 %v1280, 7
        %v1282 = vsub.s32 1, %v1281
        %v1283 = vrot.slane %v432, %v1282
        %1285 = vbcast.lane.b32.xlu0 %v1283, 256
        %v1286 = vpop.permute.xlu0 %1285
        %v1287 = vlaneseq
        %v1288 = vshrl.u32 %v1287, 7
        %v1289 = vsub.s32 2, %v1288
        %v1290 = vrot.slane %v432, %v1289
        %1292 = vbcast.lane.b32.xlu0 %v1290, 256
        %v1293 = vpop.permute.xlu0 %1292
        %v1294 = vlaneseq
        %v1295 = vshrl.u32 %v1294, 7
        %v1296 = vsub.s32 3, %v1295
        %v1297 = vrot.slane %v432, %v1296
        %1299 = vbcast.lane.b32.xlu0 %v1297, 256
        %v1300 = vpop.permute.xlu0 %1299
        %v1301 = vlaneseq
        %v1302 = vshrl.u32 %v1301, 7
        %v1303 = vsub.s32 4, %v1302
        %v1304 = vrot.slane %v432, %v1303
        %1306 = vbcast.lane.b32.xlu0 %v1304, 256
        %v1307 = vpop.permute.xlu0 %1306
        %v1308 = vlaneseq
        %v1309 = vshrl.u32 %v1308, 7
        %v1310 = vsub.s32 5, %v1309
        %v1311 = vrot.slane %v432, %v1310
        %1313 = vbcast.lane.b32.xlu0 %v1311, 256
        %v1314 = vpop.permute.xlu0 %1313
        %v1315 = vlaneseq
        %v1316 = vshrl.u32 %v1315, 7
        %v1317 = vsub.s32 6, %v1316
        %v1318 = vrot.slane %v432, %v1317
        %1320 = vbcast.lane.b32.xlu0 %v1318, 256
        %v1321 = vpop.permute.xlu0 %1320
        %v1322 = vlaneseq
        %v1323 = vshrl.u32 %v1322, 7
        %v1324 = vsub.s32 7, %v1323
        %v1325 = vrot.slane %v432, %v1324
        %1327 = vbcast.lane.b32.xlu0 %v1325, 256
        %v1328 = vpop.permute.xlu0 %1327
        %v1329 = vmul.f32 %v241, %v439
        %v1330 = vmul.f32 %v242, %v446
        %v1331 = vmul.f32 %v243, %v453
        %v1332 = vmul.f32 %v244, %v460
        %v1333 = vmul.f32 %v245, %v467
        %v1334 = vmul.f32 %v246, %v474
        %v1335 = vmul.f32 %v247, %v481
        %v1336 = vmul.f32 %v248, %v488
        %v1337 = vmul.f32 %v249, %v495
        %v1338 = vmul.f32 %v250, %v502
        %v1339 = vmul.f32 %v251, %v509
        %v1340 = vmul.f32 %v252, %v516
        %v1341 = vmul.f32 %v253, %v523
        %v1342 = vmul.f32 %v254, %v530
        %v1343 = vmul.f32 %v255, %v537
        %v1344 = vmul.f32 %v256, %v544
        %v1345 = vmul.f32 %v257, %v551
        %v1346 = vmul.f32 %v258, %v558
        %v1347 = vmul.f32 %v259, %v565
        %v1348 = vmul.f32 %v260, %v572
        %v1349 = vmul.f32 %v261, %v579
        %v1350 = vmul.f32 %v262, %v586
        %v1351 = vmul.f32 %v263, %v593
        %v1352 = vmul.f32 %v264, %v600
        %v1353 = vmul.f32 %v265, %v607
        %v1354 = vmul.f32 %v266, %v614
        %v1355 = vmul.f32 %v267, %v621
        %v1356 = vmul.f32 %v268, %v628
        %v1357 = vmul.f32 %v269, %v635
        %v1358 = vmul.f32 %v270, %v642
        %v1359 = vmul.f32 %v271, %v649
        %v1360 = vmul.f32 %v272, %v656
        %v1361 = vmul.f32 %v273, %v663
        %v1362 = vmul.f32 %v274, %v670
        %v1363 = vmul.f32 %v275, %v677
        %v1364 = vmul.f32 %v276, %v684
        %v1365 = vmul.f32 %v277, %v691
        %v1366 = vmul.f32 %v278, %v698
        %v1367 = vmul.f32 %v279, %v705
        %v1368 = vmul.f32 %v280, %v712
        %v1369 = vmul.f32 %v281, %v719
        %v1370 = vmul.f32 %v282, %v726
        %v1371 = vmul.f32 %v283, %v733
        %v1372 = vmul.f32 %v284, %v740
        %v1373 = vmul.f32 %v285, %v747
        %v1374 = vmul.f32 %v286, %v754
        %v1375 = vmul.f32 %v287, %v761
        %v1376 = vmul.f32 %v288, %v768
        %v1377 = vmul.f32 %v289, %v775
        %v1378 = vmul.f32 %v290, %v782
        %v1379 = vmul.f32 %v291, %v789
        %v1380 = vmul.f32 %v292, %v796
        %v1381 = vmul.f32 %v293, %v803
        %v1382 = vmul.f32 %v294, %v810
        %v1383 = vmul.f32 %v295, %v817
        %v1384 = vmul.f32 %v296, %v824
        %v1385 = vmul.f32 %v297, %v831
        %v1386 = vmul.f32 %v298, %v838
        %v1387 = vmul.f32 %v299, %v845
        %v1388 = vmul.f32 %v300, %v852
        %v1389 = vmul.f32 %v301, %v859
        %v1390 = vmul.f32 %v302, %v866
        %v1391 = vmul.f32 %v303, %v873
        %v1392 = vmul.f32 %v304, %v880
        %v1393 = vmul.f32 %v305, %v887
        %v1394 = vmul.f32 %v306, %v894
        %v1395 = vmul.f32 %v307, %v901
        %v1396 = vmul.f32 %v308, %v908
        %v1397 = vmul.f32 %v309, %v915
        %v1398 = vmul.f32 %v310, %v922
        %v1399 = vmul.f32 %v311, %v929
        %v1400 = vmul.f32 %v312, %v936
        %v1401 = vmul.f32 %v313, %v943
        %v1402 = vmul.f32 %v314, %v950
        %v1403 = vmul.f32 %v315, %v957
        %v1404 = vmul.f32 %v316, %v964
        %v1405 = vmul.f32 %v317, %v971
        %v1406 = vmul.f32 %v318, %v978
        %v1407 = vmul.f32 %v319, %v985
        %v1408 = vmul.f32 %v320, %v992
        %v1409 = vmul.f32 %v321, %v999
        %v1410 = vmul.f32 %v322, %v1006
        %v1411 = vmul.f32 %v323, %v1013
        %v1412 = vmul.f32 %v324, %v1020
        %v1413 = vmul.f32 %v325, %v1027
        %v1414 = vmul.f32 %v326, %v1034
        %v1415 = vmul.f32 %v327, %v1041
        %v1416 = vmul.f32 %v328, %v1048
        %v1417 = vmul.f32 %v329, %v1055
        %v1418 = vmul.f32 %v330, %v1062
        %v1419 = vmul.f32 %v331, %v1069
        %v1420 = vmul.f32 %v332, %v1076
        %v1421 = vmul.f32 %v333, %v1083
        %v1422 = vmul.f32 %v334, %v1090
        %v1423 = vmul.f32 %v335, %v1097
        %v1424 = vmul.f32 %v336, %v1104
        %v1425 = vmul.f32 %v337, %v1111
        %v1426 = vmul.f32 %v338, %v1118
        %v1427 = vmul.f32 %v339, %v1125
        %v1428 = vmul.f32 %v340, %v1132
        %v1429 = vmul.f32 %v341, %v1139
        %v1430 = vmul.f32 %v342, %v1146
        %v1431 = vmul.f32 %v343, %v1153
        %v1432 = vmul.f32 %v344, %v1160
        %v1433 = vmul.f32 %v345, %v1167
        %v1434 = vmul.f32 %v346, %v1174
        %v1435 = vmul.f32 %v347, %v1181
        %v1436 = vmul.f32 %v348, %v1188
        %v1437 = vmul.f32 %v349, %v1195
        %v1438 = vmul.f32 %v350, %v1202
        %v1439 = vmul.f32 %v351, %v1209
        %v1440 = vmul.f32 %v352, %v1216
        %v1441 = vmul.f32 %v353, %v1223
        %v1442 = vmul.f32 %v354, %v1230
        %v1443 = vmul.f32 %v355, %v1237
        %v1444 = vmul.f32 %v356, %v1244
        %v1445 = vmul.f32 %v357, %v1251
        %v1446 = vmul.f32 %v358, %v1258
        %v1447 = vmul.f32 %v359, %v1265
        %v1448 = vmul.f32 %v360, %v1272
        %v1449 = vmul.f32 %v361, %v1279
        %v1450 = vmul.f32 %v362, %v1286
        %v1451 = vmul.f32 %v363, %v1293
        %v1452 = vmul.f32 %v364, %v1300
        %v1453 = vmul.f32 %v365, %v1307
        %v1454 = vmul.f32 %v366, %v1314
        %v1455 = vmul.f32 %v367, %v1321
        %v1456 = vmul.f32 %v368, %v1328
        %v1457 = vrot.slane %v1329, 4
        %v1458 = vadd.f32 %v1329, %v1457
        %v1459 = vrot.slane %v1458, 2
        %v1460 = vadd.f32 %v1458, %v1459
        %v1461 = vrot.slane %v1460, 1
        %v1462 = vadd.f32 %v1460, %v1461
        %v1463 = vrot.slane %v1330, 4
        %v1464 = vadd.f32 %v1330, %v1463
        %v1465 = vrot.slane %v1464, 2
        %v1466 = vadd.f32 %v1464, %v1465
        %v1467 = vrot.slane %v1466, 1
        %v1468 = vadd.f32 %v1466, %v1467
        %v1469 = vrot.slane %v1331, 4
        %v1470 = vadd.f32 %v1331, %v1469
        %v1471 = vrot.slane %v1470, 2
        %v1472 = vadd.f32 %v1470, %v1471
        %v1473 = vrot.slane %v1472, 1
        %v1474 = vadd.f32 %v1472, %v1473
        %v1475 = vrot.slane %v1332, 4
        %v1476 = vadd.f32 %v1332, %v1475
        %v1477 = vrot.slane %v1476, 2
        %v1478 = vadd.f32 %v1476, %v1477
        %v1479 = vrot.slane %v1478, 1
        %v1480 = vadd.f32 %v1478, %v1479
        %v1481 = vrot.slane %v1333, 4
        %v1482 = vadd.f32 %v1333, %v1481
        %v1483 = vrot.slane %v1482, 2
        %v1484 = vadd.f32 %v1482, %v1483
        %v1485 = vrot.slane %v1484, 1
        %v1486 = vadd.f32 %v1484, %v1485
        %v1487 = vrot.slane %v1334, 4
        %v1488 = vadd.f32 %v1334, %v1487
        %v1489 = vrot.slane %v1488, 2
        %v1490 = vadd.f32 %v1488, %v1489
        %v1491 = vrot.slane %v1490, 1
        %v1492 = vadd.f32 %v1490, %v1491
        %v1493 = vrot.slane %v1335, 4
        %v1494 = vadd.f32 %v1335, %v1493
        %v1495 = vrot.slane %v1494, 2
        %v1496 = vadd.f32 %v1494, %v1495
        %v1497 = vrot.slane %v1496, 1
        %v1498 = vadd.f32 %v1496, %v1497
        %v1499 = vrot.slane %v1336, 4
        %v1500 = vadd.f32 %v1336, %v1499
        %v1501 = vrot.slane %v1500, 2
        %v1502 = vadd.f32 %v1500, %v1501
        %v1503 = vrot.slane %v1502, 1
        %v1504 = vadd.f32 %v1502, %v1503
        %v1505 = vrot.slane %v1337, 4
        %v1506 = vadd.f32 %v1337, %v1505
        %v1507 = vrot.slane %v1506, 2
        %v1508 = vadd.f32 %v1506, %v1507
        %v1509 = vrot.slane %v1508, 1
        %v1510 = vadd.f32 %v1508, %v1509
        %v1511 = vrot.slane %v1338, 4
        %v1512 = vadd.f32 %v1338, %v1511
        %v1513 = vrot.slane %v1512, 2
        %v1514 = vadd.f32 %v1512, %v1513
        %v1515 = vrot.slane %v1514, 1
        %v1516 = vadd.f32 %v1514, %v1515
        %v1517 = vrot.slane %v1339, 4
        %v1518 = vadd.f32 %v1339, %v1517
        %v1519 = vrot.slane %v1518, 2
        %v1520 = vadd.f32 %v1518, %v1519
        %v1521 = vrot.slane %v1520, 1
        %v1522 = vadd.f32 %v1520, %v1521
        %v1523 = vrot.slane %v1340, 4
        %v1524 = vadd.f32 %v1340, %v1523
        %v1525 = vrot.slane %v1524, 2
        %v1526 = vadd.f32 %v1524, %v1525
        %v1527 = vrot.slane %v1526, 1
        %v1528 = vadd.f32 %v1526, %v1527
        %v1529 = vrot.slane %v1341, 4
        %v1530 = vadd.f32 %v1341, %v1529
        %v1531 = vrot.slane %v1530, 2
        %v1532 = vadd.f32 %v1530, %v1531
        %v1533 = vrot.slane %v1532, 1
        %v1534 = vadd.f32 %v1532, %v1533
        %v1535 = vrot.slane %v1342, 4
        %v1536 = vadd.f32 %v1342, %v1535
        %v1537 = vrot.slane %v1536, 2
        %v1538 = vadd.f32 %v1536, %v1537
        %v1539 = vrot.slane %v1538, 1
        %v1540 = vadd.f32 %v1538, %v1539
        %v1541 = vrot.slane %v1343, 4
        %v1542 = vadd.f32 %v1343, %v1541
        %v1543 = vrot.slane %v1542, 2
        %v1544 = vadd.f32 %v1542, %v1543
        %v1545 = vrot.slane %v1544, 1
        %v1546 = vadd.f32 %v1544, %v1545
        %v1547 = vrot.slane %v1344, 4
        %v1548 = vadd.f32 %v1344, %v1547
        %v1549 = vrot.slane %v1548, 2
        %v1550 = vadd.f32 %v1548, %v1549
        %v1551 = vrot.slane %v1550, 1
        %v1552 = vadd.f32 %v1550, %v1551
        %v1553 = vrot.slane %v1345, 4
        %v1554 = vadd.f32 %v1345, %v1553
        %v1555 = vrot.slane %v1554, 2
        %v1556 = vadd.f32 %v1554, %v1555
        %v1557 = vrot.slane %v1556, 1
        %v1558 = vadd.f32 %v1556, %v1557
        %v1559 = vrot.slane %v1346, 4
        %v1560 = vadd.f32 %v1346, %v1559
        %v1561 = vrot.slane %v1560, 2
        %v1562 = vadd.f32 %v1560, %v1561
        %v1563 = vrot.slane %v1562, 1
        %v1564 = vadd.f32 %v1562, %v1563
        %v1565 = vrot.slane %v1347, 4
        %v1566 = vadd.f32 %v1347, %v1565
        %v1567 = vrot.slane %v1566, 2
        %v1568 = vadd.f32 %v1566, %v1567
        %v1569 = vrot.slane %v1568, 1
        %v1570 = vadd.f32 %v1568, %v1569
        %v1571 = vrot.slane %v1348, 4
        %v1572 = vadd.f32 %v1348, %v1571
        %v1573 = vrot.slane %v1572, 2
        %v1574 = vadd.f32 %v1572, %v1573
        %v1575 = vrot.slane %v1574, 1
        %v1576 = vadd.f32 %v1574, %v1575
        %v1577 = vrot.slane %v1349, 4
        %v1578 = vadd.f32 %v1349, %v1577
        %v1579 = vrot.slane %v1578, 2
        %v1580 = vadd.f32 %v1578, %v1579
        %v1581 = vrot.slane %v1580, 1
        %v1582 = vadd.f32 %v1580, %v1581
        %v1583 = vrot.slane %v1350, 4
        %v1584 = vadd.f32 %v1350, %v1583
        %v1585 = vrot.slane %v1584, 2
        %v1586 = vadd.f32 %v1584, %v1585
        %v1587 = vrot.slane %v1586, 1
        %v1588 = vadd.f32 %v1586, %v1587
        %v1589 = vrot.slane %v1351, 4
        %v1590 = vadd.f32 %v1351, %v1589
        %v1591 = vrot.slane %v1590, 2
        %v1592 = vadd.f32 %v1590, %v1591
        %v1593 = vrot.slane %v1592, 1
        %v1594 = vadd.f32 %v1592, %v1593
        %v1595 = vrot.slane %v1352, 4
        %v1596 = vadd.f32 %v1352, %v1595
        %v1597 = vrot.slane %v1596, 2
        %v1598 = vadd.f32 %v1596, %v1597
        %v1599 = vrot.slane %v1598, 1
        %v1600 = vadd.f32 %v1598, %v1599
        %v1601 = vrot.slane %v1353, 4
        %v1602 = vadd.f32 %v1353, %v1601
        %v1603 = vrot.slane %v1602, 2
        %v1604 = vadd.f32 %v1602, %v1603
        %v1605 = vrot.slane %v1604, 1
        %v1606 = vadd.f32 %v1604, %v1605
        %v1607 = vrot.slane %v1354, 4
        %v1608 = vadd.f32 %v1354, %v1607
        %v1609 = vrot.slane %v1608, 2
        %v1610 = vadd.f32 %v1608, %v1609
        %v1611 = vrot.slane %v1610, 1
        %v1612 = vadd.f32 %v1610, %v1611
        %v1613 = vrot.slane %v1355, 4
        %v1614 = vadd.f32 %v1355, %v1613
        %v1615 = vrot.slane %v1614, 2
        %v1616 = vadd.f32 %v1614, %v1615
        %v1617 = vrot.slane %v1616, 1
        %v1618 = vadd.f32 %v1616, %v1617
        %v1619 = vrot.slane %v1356, 4
        %v1620 = vadd.f32 %v1356, %v1619
        %v1621 = vrot.slane %v1620, 2
        %v1622 = vadd.f32 %v1620, %v1621
        %v1623 = vrot.slane %v1622, 1
        %v1624 = vadd.f32 %v1622, %v1623
        %v1625 = vrot.slane %v1357, 4
        %v1626 = vadd.f32 %v1357, %v1625
        %v1627 = vrot.slane %v1626, 2
        %v1628 = vadd.f32 %v1626, %v1627
        %v1629 = vrot.slane %v1628, 1
        %v1630 = vadd.f32 %v1628, %v1629
        %v1631 = vrot.slane %v1358, 4
        %v1632 = vadd.f32 %v1358, %v1631
        %v1633 = vrot.slane %v1632, 2
        %v1634 = vadd.f32 %v1632, %v1633
        %v1635 = vrot.slane %v1634, 1
        %v1636 = vadd.f32 %v1634, %v1635
        %v1637 = vrot.slane %v1359, 4
        %v1638 = vadd.f32 %v1359, %v1637
        %v1639 = vrot.slane %v1638, 2
        %v1640 = vadd.f32 %v1638, %v1639
        %v1641 = vrot.slane %v1640, 1
        %v1642 = vadd.f32 %v1640, %v1641
        %v1643 = vrot.slane %v1360, 4
        %v1644 = vadd.f32 %v1360, %v1643
        %v1645 = vrot.slane %v1644, 2
        %v1646 = vadd.f32 %v1644, %v1645
        %v1647 = vrot.slane %v1646, 1
        %v1648 = vadd.f32 %v1646, %v1647
        %v1649 = vrot.slane %v1361, 4
        %v1650 = vadd.f32 %v1361, %v1649
        %v1651 = vrot.slane %v1650, 2
        %v1652 = vadd.f32 %v1650, %v1651
        %v1653 = vrot.slane %v1652, 1
        %v1654 = vadd.f32 %v1652, %v1653
        %v1655 = vrot.slane %v1362, 4
        %v1656 = vadd.f32 %v1362, %v1655
        %v1657 = vrot.slane %v1656, 2
        %v1658 = vadd.f32 %v1656, %v1657
        %v1659 = vrot.slane %v1658, 1
        %v1660 = vadd.f32 %v1658, %v1659
        %v1661 = vrot.slane %v1363, 4
        %v1662 = vadd.f32 %v1363, %v1661
        %v1663 = vrot.slane %v1662, 2
        %v1664 = vadd.f32 %v1662, %v1663
        %v1665 = vrot.slane %v1664, 1
        %v1666 = vadd.f32 %v1664, %v1665
        %v1667 = vrot.slane %v1364, 4
        %v1668 = vadd.f32 %v1364, %v1667
        %v1669 = vrot.slane %v1668, 2
        %v1670 = vadd.f32 %v1668, %v1669
        %v1671 = vrot.slane %v1670, 1
        %v1672 = vadd.f32 %v1670, %v1671
        %v1673 = vrot.slane %v1365, 4
        %v1674 = vadd.f32 %v1365, %v1673
        %v1675 = vrot.slane %v1674, 2
        %v1676 = vadd.f32 %v1674, %v1675
        %v1677 = vrot.slane %v1676, 1
        %v1678 = vadd.f32 %v1676, %v1677
        %v1679 = vrot.slane %v1366, 4
        %v1680 = vadd.f32 %v1366, %v1679
        %v1681 = vrot.slane %v1680, 2
        %v1682 = vadd.f32 %v1680, %v1681
        %v1683 = vrot.slane %v1682, 1
        %v1684 = vadd.f32 %v1682, %v1683
        %v1685 = vrot.slane %v1367, 4
        %v1686 = vadd.f32 %v1367, %v1685
        %v1687 = vrot.slane %v1686, 2
        %v1688 = vadd.f32 %v1686, %v1687
        %v1689 = vrot.slane %v1688, 1
        %v1690 = vadd.f32 %v1688, %v1689
        %v1691 = vrot.slane %v1368, 4
        %v1692 = vadd.f32 %v1368, %v1691
        %v1693 = vrot.slane %v1692, 2
        %v1694 = vadd.f32 %v1692, %v1693
        %v1695 = vrot.slane %v1694, 1
        %v1696 = vadd.f32 %v1694, %v1695
        %v1697 = vrot.slane %v1369, 4
        %v1698 = vadd.f32 %v1369, %v1697
        %v1699 = vrot.slane %v1698, 2
        %v1700 = vadd.f32 %v1698, %v1699
        %v1701 = vrot.slane %v1700, 1
        %v1702 = vadd.f32 %v1700, %v1701
        %v1703 = vrot.slane %v1370, 4
        %v1704 = vadd.f32 %v1370, %v1703
        %v1705 = vrot.slane %v1704, 2
        %v1706 = vadd.f32 %v1704, %v1705
        %v1707 = vrot.slane %v1706, 1
        %v1708 = vadd.f32 %v1706, %v1707
        %v1709 = vrot.slane %v1371, 4
        %v1710 = vadd.f32 %v1371, %v1709
        %v1711 = vrot.slane %v1710, 2
        %v1712 = vadd.f32 %v1710, %v1711
        %v1713 = vrot.slane %v1712, 1
        %v1714 = vadd.f32 %v1712, %v1713
        %v1715 = vrot.slane %v1372, 4
        %v1716 = vadd.f32 %v1372, %v1715
        %v1717 = vrot.slane %v1716, 2
        %v1718 = vadd.f32 %v1716, %v1717
        %v1719 = vrot.slane %v1718, 1
        %v1720 = vadd.f32 %v1718, %v1719
        %v1721 = vrot.slane %v1373, 4
        %v1722 = vadd.f32 %v1373, %v1721
        %v1723 = vrot.slane %v1722, 2
        %v1724 = vadd.f32 %v1722, %v1723
        %v1725 = vrot.slane %v1724, 1
        %v1726 = vadd.f32 %v1724, %v1725
        %v1727 = vrot.slane %v1374, 4
        %v1728 = vadd.f32 %v1374, %v1727
        %v1729 = vrot.slane %v1728, 2
        %v1730 = vadd.f32 %v1728, %v1729
        %v1731 = vrot.slane %v1730, 1
        %v1732 = vadd.f32 %v1730, %v1731
        %v1733 = vrot.slane %v1375, 4
        %v1734 = vadd.f32 %v1375, %v1733
        %v1735 = vrot.slane %v1734, 2
        %v1736 = vadd.f32 %v1734, %v1735
        %v1737 = vrot.slane %v1736, 1
        %v1738 = vadd.f32 %v1736, %v1737
        %v1739 = vrot.slane %v1376, 4
        %v1740 = vadd.f32 %v1376, %v1739
        %v1741 = vrot.slane %v1740, 2
        %v1742 = vadd.f32 %v1740, %v1741
        %v1743 = vrot.slane %v1742, 1
        %v1744 = vadd.f32 %v1742, %v1743
        %v1745 = vrot.slane %v1377, 4
        %v1746 = vadd.f32 %v1377, %v1745
        %v1747 = vrot.slane %v1746, 2
        %v1748 = vadd.f32 %v1746, %v1747
        %v1749 = vrot.slane %v1748, 1
        %v1750 = vadd.f32 %v1748, %v1749
        %v1751 = vrot.slane %v1378, 4
        %v1752 = vadd.f32 %v1378, %v1751
        %v1753 = vrot.slane %v1752, 2
        %v1754 = vadd.f32 %v1752, %v1753
        %v1755 = vrot.slane %v1754, 1
        %v1756 = vadd.f32 %v1754, %v1755
        %v1757 = vrot.slane %v1379, 4
        %v1758 = vadd.f32 %v1379, %v1757
        %v1759 = vrot.slane %v1758, 2
        %v1760 = vadd.f32 %v1758, %v1759
        %v1761 = vrot.slane %v1760, 1
        %v1762 = vadd.f32 %v1760, %v1761
        %v1763 = vrot.slane %v1380, 4
        %v1764 = vadd.f32 %v1380, %v1763
        %v1765 = vrot.slane %v1764, 2
        %v1766 = vadd.f32 %v1764, %v1765
        %v1767 = vrot.slane %v1766, 1
        %v1768 = vadd.f32 %v1766, %v1767
        %v1769 = vrot.slane %v1381, 4
        %v1770 = vadd.f32 %v1381, %v1769
        %v1771 = vrot.slane %v1770, 2
        %v1772 = vadd.f32 %v1770, %v1771
        %v1773 = vrot.slane %v1772, 1
        %v1774 = vadd.f32 %v1772, %v1773
        %v1775 = vrot.slane %v1382, 4
        %v1776 = vadd.f32 %v1382, %v1775
        %v1777 = vrot.slane %v1776, 2
        %v1778 = vadd.f32 %v1776, %v1777
        %v1779 = vrot.slane %v1778, 1
        %v1780 = vadd.f32 %v1778, %v1779
        %v1781 = vrot.slane %v1383, 4
        %v1782 = vadd.f32 %v1383, %v1781
        %v1783 = vrot.slane %v1782, 2
        %v1784 = vadd.f32 %v1782, %v1783
        %v1785 = vrot.slane %v1784, 1
        %v1786 = vadd.f32 %v1784, %v1785
        %v1787 = vrot.slane %v1384, 4
        %v1788 = vadd.f32 %v1384, %v1787
        %v1789 = vrot.slane %v1788, 2
        %v1790 = vadd.f32 %v1788, %v1789
        %v1791 = vrot.slane %v1790, 1
        %v1792 = vadd.f32 %v1790, %v1791
        %v1793 = vrot.slane %v1385, 4
        %v1794 = vadd.f32 %v1385, %v1793
        %v1795 = vrot.slane %v1794, 2
        %v1796 = vadd.f32 %v1794, %v1795
        %v1797 = vrot.slane %v1796, 1
        %v1798 = vadd.f32 %v1796, %v1797
        %v1799 = vrot.slane %v1386, 4
        %v1800 = vadd.f32 %v1386, %v1799
        %v1801 = vrot.slane %v1800, 2
        %v1802 = vadd.f32 %v1800, %v1801
        %v1803 = vrot.slane %v1802, 1
        %v1804 = vadd.f32 %v1802, %v1803
        %v1805 = vrot.slane %v1387, 4
        %v1806 = vadd.f32 %v1387, %v1805
        %v1807 = vrot.slane %v1806, 2
        %v1808 = vadd.f32 %v1806, %v1807
        %v1809 = vrot.slane %v1808, 1
        %v1810 = vadd.f32 %v1808, %v1809
        %v1811 = vrot.slane %v1388, 4
        %v1812 = vadd.f32 %v1388, %v1811
        %v1813 = vrot.slane %v1812, 2
        %v1814 = vadd.f32 %v1812, %v1813
        %v1815 = vrot.slane %v1814, 1
        %v1816 = vadd.f32 %v1814, %v1815
        %v1817 = vrot.slane %v1389, 4
        %v1818 = vadd.f32 %v1389, %v1817
        %v1819 = vrot.slane %v1818, 2
        %v1820 = vadd.f32 %v1818, %v1819
        %v1821 = vrot.slane %v1820, 1
        %v1822 = vadd.f32 %v1820, %v1821
        %v1823 = vrot.slane %v1390, 4
        %v1824 = vadd.f32 %v1390, %v1823
        %v1825 = vrot.slane %v1824, 2
        %v1826 = vadd.f32 %v1824, %v1825
        %v1827 = vrot.slane %v1826, 1
        %v1828 = vadd.f32 %v1826, %v1827
        %v1829 = vrot.slane %v1391, 4
        %v1830 = vadd.f32 %v1391, %v1829
        %v1831 = vrot.slane %v1830, 2
        %v1832 = vadd.f32 %v1830, %v1831
        %v1833 = vrot.slane %v1832, 1
        %v1834 = vadd.f32 %v1832, %v1833
        %v1835 = vrot.slane %v1392, 4
        %v1836 = vadd.f32 %v1392, %v1835
        %v1837 = vrot.slane %v1836, 2
        %v1838 = vadd.f32 %v1836, %v1837
        %v1839 = vrot.slane %v1838, 1
        %v1840 = vadd.f32 %v1838, %v1839
        %v1841 = vrot.slane %v1393, 4
        %v1842 = vadd.f32 %v1393, %v1841
        %v1843 = vrot.slane %v1842, 2
        %v1844 = vadd.f32 %v1842, %v1843
        %v1845 = vrot.slane %v1844, 1
        %v1846 = vadd.f32 %v1844, %v1845
        %v1847 = vrot.slane %v1394, 4
        %v1848 = vadd.f32 %v1394, %v1847
        %v1849 = vrot.slane %v1848, 2
        %v1850 = vadd.f32 %v1848, %v1849
        %v1851 = vrot.slane %v1850, 1
        %v1852 = vadd.f32 %v1850, %v1851
        %v1853 = vrot.slane %v1395, 4
        %v1854 = vadd.f32 %v1395, %v1853
        %v1855 = vrot.slane %v1854, 2
        %v1856 = vadd.f32 %v1854, %v1855
        %v1857 = vrot.slane %v1856, 1
        %v1858 = vadd.f32 %v1856, %v1857
        %v1859 = vrot.slane %v1396, 4
        %v1860 = vadd.f32 %v1396, %v1859
        %v1861 = vrot.slane %v1860, 2
        %v1862 = vadd.f32 %v1860, %v1861
        %v1863 = vrot.slane %v1862, 1
        %v1864 = vadd.f32 %v1862, %v1863
        %v1865 = vrot.slane %v1397, 4
        %v1866 = vadd.f32 %v1397, %v1865
        %v1867 = vrot.slane %v1866, 2
        %v1868 = vadd.f32 %v1866, %v1867
        %v1869 = vrot.slane %v1868, 1
        %v1870 = vadd.f32 %v1868, %v1869
        %v1871 = vrot.slane %v1398, 4
        %v1872 = vadd.f32 %v1398, %v1871
        %v1873 = vrot.slane %v1872, 2
        %v1874 = vadd.f32 %v1872, %v1873
        %v1875 = vrot.slane %v1874, 1
        %v1876 = vadd.f32 %v1874, %v1875
        %v1877 = vrot.slane %v1399, 4
        %v1878 = vadd.f32 %v1399, %v1877
        %v1879 = vrot.slane %v1878, 2
        %v1880 = vadd.f32 %v1878, %v1879
        %v1881 = vrot.slane %v1880, 1
        %v1882 = vadd.f32 %v1880, %v1881
        %v1883 = vrot.slane %v1400, 4
        %v1884 = vadd.f32 %v1400, %v1883
        %v1885 = vrot.slane %v1884, 2
        %v1886 = vadd.f32 %v1884, %v1885
        %v1887 = vrot.slane %v1886, 1
        %v1888 = vadd.f32 %v1886, %v1887
        %v1889 = vrot.slane %v1401, 4
        %v1890 = vadd.f32 %v1401, %v1889
        %v1891 = vrot.slane %v1890, 2
        %v1892 = vadd.f32 %v1890, %v1891
        %v1893 = vrot.slane %v1892, 1
        %v1894 = vadd.f32 %v1892, %v1893
        %v1895 = vrot.slane %v1402, 4
        %v1896 = vadd.f32 %v1402, %v1895
        %v1897 = vrot.slane %v1896, 2
        %v1898 = vadd.f32 %v1896, %v1897
        %v1899 = vrot.slane %v1898, 1
        %v1900 = vadd.f32 %v1898, %v1899
        %v1901 = vrot.slane %v1403, 4
        %v1902 = vadd.f32 %v1403, %v1901
        %v1903 = vrot.slane %v1902, 2
        %v1904 = vadd.f32 %v1902, %v1903
        %v1905 = vrot.slane %v1904, 1
        %v1906 = vadd.f32 %v1904, %v1905
        %v1907 = vrot.slane %v1404, 4
        %v1908 = vadd.f32 %v1404, %v1907
        %v1909 = vrot.slane %v1908, 2
        %v1910 = vadd.f32 %v1908, %v1909
        %v1911 = vrot.slane %v1910, 1
        %v1912 = vadd.f32 %v1910, %v1911
        %v1913 = vrot.slane %v1405, 4
        %v1914 = vadd.f32 %v1405, %v1913
        %v1915 = vrot.slane %v1914, 2
        %v1916 = vadd.f32 %v1914, %v1915
        %v1917 = vrot.slane %v1916, 1
        %v1918 = vadd.f32 %v1916, %v1917
        %v1919 = vrot.slane %v1406, 4
        %v1920 = vadd.f32 %v1406, %v1919
        %v1921 = vrot.slane %v1920, 2
        %v1922 = vadd.f32 %v1920, %v1921
        %v1923 = vrot.slane %v1922, 1
        %v1924 = vadd.f32 %v1922, %v1923
        %v1925 = vrot.slane %v1407, 4
        %v1926 = vadd.f32 %v1407, %v1925
        %v1927 = vrot.slane %v1926, 2
        %v1928 = vadd.f32 %v1926, %v1927
        %v1929 = vrot.slane %v1928, 1
        %v1930 = vadd.f32 %v1928, %v1929
        %v1931 = vrot.slane %v1408, 4
        %v1932 = vadd.f32 %v1408, %v1931
        %v1933 = vrot.slane %v1932, 2
        %v1934 = vadd.f32 %v1932, %v1933
        %v1935 = vrot.slane %v1934, 1
        %v1936 = vadd.f32 %v1934, %v1935
        %v1937 = vrot.slane %v1409, 4
        %v1938 = vadd.f32 %v1409, %v1937
        %v1939 = vrot.slane %v1938, 2
        %v1940 = vadd.f32 %v1938, %v1939
        %v1941 = vrot.slane %v1940, 1
        %v1942 = vadd.f32 %v1940, %v1941
        %v1943 = vrot.slane %v1410, 4
        %v1944 = vadd.f32 %v1410, %v1943
        %v1945 = vrot.slane %v1944, 2
        %v1946 = vadd.f32 %v1944, %v1945
        %v1947 = vrot.slane %v1946, 1
        %v1948 = vadd.f32 %v1946, %v1947
        %v1949 = vrot.slane %v1411, 4
        %v1950 = vadd.f32 %v1411, %v1949
        %v1951 = vrot.slane %v1950, 2
        %v1952 = vadd.f32 %v1950, %v1951
        %v1953 = vrot.slane %v1952, 1
        %v1954 = vadd.f32 %v1952, %v1953
        %v1955 = vrot.slane %v1412, 4
        %v1956 = vadd.f32 %v1412, %v1955
        %v1957 = vrot.slane %v1956, 2
        %v1958 = vadd.f32 %v1956, %v1957
        %v1959 = vrot.slane %v1958, 1
        %v1960 = vadd.f32 %v1958, %v1959
        %v1961 = vrot.slane %v1413, 4
        %v1962 = vadd.f32 %v1413, %v1961
        %v1963 = vrot.slane %v1962, 2
        %v1964 = vadd.f32 %v1962, %v1963
        %v1965 = vrot.slane %v1964, 1
        %v1966 = vadd.f32 %v1964, %v1965
        %v1967 = vrot.slane %v1414, 4
        %v1968 = vadd.f32 %v1414, %v1967
        %v1969 = vrot.slane %v1968, 2
        %v1970 = vadd.f32 %v1968, %v1969
        %v1971 = vrot.slane %v1970, 1
        %v1972 = vadd.f32 %v1970, %v1971
        %v1973 = vrot.slane %v1415, 4
        %v1974 = vadd.f32 %v1415, %v1973
        %v1975 = vrot.slane %v1974, 2
        %v1976 = vadd.f32 %v1974, %v1975
        %v1977 = vrot.slane %v1976, 1
        %v1978 = vadd.f32 %v1976, %v1977
        %v1979 = vrot.slane %v1416, 4
        %v1980 = vadd.f32 %v1416, %v1979
        %v1981 = vrot.slane %v1980, 2
        %v1982 = vadd.f32 %v1980, %v1981
        %v1983 = vrot.slane %v1982, 1
        %v1984 = vadd.f32 %v1982, %v1983
        %v1985 = vrot.slane %v1417, 4
        %v1986 = vadd.f32 %v1417, %v1985
        %v1987 = vrot.slane %v1986, 2
        %v1988 = vadd.f32 %v1986, %v1987
        %v1989 = vrot.slane %v1988, 1
        %v1990 = vadd.f32 %v1988, %v1989
        %v1991 = vrot.slane %v1418, 4
        %v1992 = vadd.f32 %v1418, %v1991
        %v1993 = vrot.slane %v1992, 2
        %v1994 = vadd.f32 %v1992, %v1993
        %v1995 = vrot.slane %v1994, 1
        %v1996 = vadd.f32 %v1994, %v1995
        %v1997 = vrot.slane %v1419, 4
        %v1998 = vadd.f32 %v1419, %v1997
        %v1999 = vrot.slane %v1998, 2
        %v2000 = vadd.f32 %v1998, %v1999
        %v2001 = vrot.slane %v2000, 1
        %v2002 = vadd.f32 %v2000, %v2001
        %v2003 = vrot.slane %v1420, 4
        %v2004 = vadd.f32 %v1420, %v2003
        %v2005 = vrot.slane %v2004, 2
        %v2006 = vadd.f32 %v2004, %v2005
        %v2007 = vrot.slane %v2006, 1
        %v2008 = vadd.f32 %v2006, %v2007
        %v2009 = vrot.slane %v1421, 4
        %v2010 = vadd.f32 %v1421, %v2009
        %v2011 = vrot.slane %v2010, 2
        %v2012 = vadd.f32 %v2010, %v2011
        %v2013 = vrot.slane %v2012, 1
        %v2014 = vadd.f32 %v2012, %v2013
        %v2015 = vrot.slane %v1422, 4
        %v2016 = vadd.f32 %v1422, %v2015
        %v2017 = vrot.slane %v2016, 2
        %v2018 = vadd.f32 %v2016, %v2017
        %v2019 = vrot.slane %v2018, 1
        %v2020 = vadd.f32 %v2018, %v2019
        %v2021 = vrot.slane %v1423, 4
        %v2022 = vadd.f32 %v1423, %v2021
        %v2023 = vrot.slane %v2022, 2
        %v2024 = vadd.f32 %v2022, %v2023
        %v2025 = vrot.slane %v2024, 1
        %v2026 = vadd.f32 %v2024, %v2025
        %v2027 = vrot.slane %v1424, 4
        %v2028 = vadd.f32 %v1424, %v2027
        %v2029 = vrot.slane %v2028, 2
        %v2030 = vadd.f32 %v2028, %v2029
        %v2031 = vrot.slane %v2030, 1
        %v2032 = vadd.f32 %v2030, %v2031
        %v2033 = vrot.slane %v1425, 4
        %v2034 = vadd.f32 %v1425, %v2033
        %v2035 = vrot.slane %v2034, 2
        %v2036 = vadd.f32 %v2034, %v2035
        %v2037 = vrot.slane %v2036, 1
        %v2038 = vadd.f32 %v2036, %v2037
        %v2039 = vrot.slane %v1426, 4
        %v2040 = vadd.f32 %v1426, %v2039
        %v2041 = vrot.slane %v2040, 2
        %v2042 = vadd.f32 %v2040, %v2041
        %v2043 = vrot.slane %v2042, 1
        %v2044 = vadd.f32 %v2042, %v2043
        %v2045 = vrot.slane %v1427, 4
        %v2046 = vadd.f32 %v1427, %v2045
        %v2047 = vrot.slane %v2046, 2
        %v2048 = vadd.f32 %v2046, %v2047
        %v2049 = vrot.slane %v2048, 1
        %v2050 = vadd.f32 %v2048, %v2049
        %v2051 = vrot.slane %v1428, 4
        %v2052 = vadd.f32 %v1428, %v2051
        %v2053 = vrot.slane %v2052, 2
        %v2054 = vadd.f32 %v2052, %v2053
        %v2055 = vrot.slane %v2054, 1
        %v2056 = vadd.f32 %v2054, %v2055
        %v2057 = vrot.slane %v1429, 4
        %v2058 = vadd.f32 %v1429, %v2057
        %v2059 = vrot.slane %v2058, 2
        %v2060 = vadd.f32 %v2058, %v2059
        %v2061 = vrot.slane %v2060, 1
        %v2062 = vadd.f32 %v2060, %v2061
        %v2063 = vrot.slane %v1430, 4
        %v2064 = vadd.f32 %v1430, %v2063
        %v2065 = vrot.slane %v2064, 2
        %v2066 = vadd.f32 %v2064, %v2065
        %v2067 = vrot.slane %v2066, 1
        %v2068 = vadd.f32 %v2066, %v2067
        %v2069 = vrot.slane %v1431, 4
        %v2070 = vadd.f32 %v1431, %v2069
        %v2071 = vrot.slane %v2070, 2
        %v2072 = vadd.f32 %v2070, %v2071
        %v2073 = vrot.slane %v2072, 1
        %v2074 = vadd.f32 %v2072, %v2073
        %v2075 = vrot.slane %v1432, 4
        %v2076 = vadd.f32 %v1432, %v2075
        %v2077 = vrot.slane %v2076, 2
        %v2078 = vadd.f32 %v2076, %v2077
        %v2079 = vrot.slane %v2078, 1
        %v2080 = vadd.f32 %v2078, %v2079
        %v2081 = vrot.slane %v1433, 4
        %v2082 = vadd.f32 %v1433, %v2081
        %v2083 = vrot.slane %v2082, 2
        %v2084 = vadd.f32 %v2082, %v2083
        %v2085 = vrot.slane %v2084, 1
        %v2086 = vadd.f32 %v2084, %v2085
        %v2087 = vrot.slane %v1434, 4
        %v2088 = vadd.f32 %v1434, %v2087
        %v2089 = vrot.slane %v2088, 2
        %v2090 = vadd.f32 %v2088, %v2089
        %v2091 = vrot.slane %v2090, 1
        %v2092 = vadd.f32 %v2090, %v2091
        %v2093 = vrot.slane %v1435, 4
        %v2094 = vadd.f32 %v1435, %v2093
        %v2095 = vrot.slane %v2094, 2
        %v2096 = vadd.f32 %v2094, %v2095
        %v2097 = vrot.slane %v2096, 1
        %v2098 = vadd.f32 %v2096, %v2097
        %v2099 = vrot.slane %v1436, 4
        %v2100 = vadd.f32 %v1436, %v2099
        %v2101 = vrot.slane %v2100, 2
        %v2102 = vadd.f32 %v2100, %v2101
        %v2103 = vrot.slane %v2102, 1
        %v2104 = vadd.f32 %v2102, %v2103
        %v2105 = vrot.slane %v1437, 4
        %v2106 = vadd.f32 %v1437, %v2105
        %v2107 = vrot.slane %v2106, 2
        %v2108 = vadd.f32 %v2106, %v2107
        %v2109 = vrot.slane %v2108, 1
        %v2110 = vadd.f32 %v2108, %v2109
        %v2111 = vrot.slane %v1438, 4
        %v2112 = vadd.f32 %v1438, %v2111
        %v2113 = vrot.slane %v2112, 2
        %v2114 = vadd.f32 %v2112, %v2113
        %v2115 = vrot.slane %v2114, 1
        %v2116 = vadd.f32 %v2114, %v2115
        %v2117 = vrot.slane %v1439, 4
        %v2118 = vadd.f32 %v1439, %v2117
        %v2119 = vrot.slane %v2118, 2
        %v2120 = vadd.f32 %v2118, %v2119
        %v2121 = vrot.slane %v2120, 1
        %v2122 = vadd.f32 %v2120, %v2121
        %v2123 = vrot.slane %v1440, 4
        %v2124 = vadd.f32 %v1440, %v2123
        %v2125 = vrot.slane %v2124, 2
        %v2126 = vadd.f32 %v2124, %v2125
        %v2127 = vrot.slane %v2126, 1
        %v2128 = vadd.f32 %v2126, %v2127
        %v2129 = vrot.slane %v1441, 4
        %v2130 = vadd.f32 %v1441, %v2129
        %v2131 = vrot.slane %v2130, 2
        %v2132 = vadd.f32 %v2130, %v2131
        %v2133 = vrot.slane %v2132, 1
        %v2134 = vadd.f32 %v2132, %v2133
        %v2135 = vrot.slane %v1442, 4
        %v2136 = vadd.f32 %v1442, %v2135
        %v2137 = vrot.slane %v2136, 2
        %v2138 = vadd.f32 %v2136, %v2137
        %v2139 = vrot.slane %v2138, 1
        %v2140 = vadd.f32 %v2138, %v2139
        %v2141 = vrot.slane %v1443, 4
        %v2142 = vadd.f32 %v1443, %v2141
        %v2143 = vrot.slane %v2142, 2
        %v2144 = vadd.f32 %v2142, %v2143
        %v2145 = vrot.slane %v2144, 1
        %v2146 = vadd.f32 %v2144, %v2145
        %v2147 = vrot.slane %v1444, 4
        %v2148 = vadd.f32 %v1444, %v2147
        %v2149 = vrot.slane %v2148, 2
        %v2150 = vadd.f32 %v2148, %v2149
        %v2151 = vrot.slane %v2150, 1
        %v2152 = vadd.f32 %v2150, %v2151
        %v2153 = vrot.slane %v1445, 4
        %v2154 = vadd.f32 %v1445, %v2153
        %v2155 = vrot.slane %v2154, 2
        %v2156 = vadd.f32 %v2154, %v2155
        %v2157 = vrot.slane %v2156, 1
        %v2158 = vadd.f32 %v2156, %v2157
        %v2159 = vrot.slane %v1446, 4
        %v2160 = vadd.f32 %v1446, %v2159
        %v2161 = vrot.slane %v2160, 2
        %v2162 = vadd.f32 %v2160, %v2161
        %v2163 = vrot.slane %v2162, 1
        %v2164 = vadd.f32 %v2162, %v2163
        %v2165 = vrot.slane %v1447, 4
        %v2166 = vadd.f32 %v1447, %v2165
        %v2167 = vrot.slane %v2166, 2
        %v2168 = vadd.f32 %v2166, %v2167
        %v2169 = vrot.slane %v2168, 1
        %v2170 = vadd.f32 %v2168, %v2169
        %v2171 = vrot.slane %v1448, 4
        %v2172 = vadd.f32 %v1448, %v2171
        %v2173 = vrot.slane %v2172, 2
        %v2174 = vadd.f32 %v2172, %v2173
        %v2175 = vrot.slane %v2174, 1
        %v2176 = vadd.f32 %v2174, %v2175
        %v2177 = vrot.slane %v1449, 4
        %v2178 = vadd.f32 %v1449, %v2177
        %v2179 = vrot.slane %v2178, 2
        %v2180 = vadd.f32 %v2178, %v2179
        %v2181 = vrot.slane %v2180, 1
        %v2182 = vadd.f32 %v2180, %v2181
        %v2183 = vrot.slane %v1450, 4
        %v2184 = vadd.f32 %v1450, %v2183
        %v2185 = vrot.slane %v2184, 2
        %v2186 = vadd.f32 %v2184, %v2185
        %v2187 = vrot.slane %v2186, 1
        %v2188 = vadd.f32 %v2186, %v2187
        %v2189 = vrot.slane %v1451, 4
        %v2190 = vadd.f32 %v1451, %v2189
        %v2191 = vrot.slane %v2190, 2
        %v2192 = vadd.f32 %v2190, %v2191
        %v2193 = vrot.slane %v2192, 1
        %v2194 = vadd.f32 %v2192, %v2193
        %v2195 = vrot.slane %v1452, 4
        %v2196 = vadd.f32 %v1452, %v2195
        %v2197 = vrot.slane %v2196, 2
        %v2198 = vadd.f32 %v2196, %v2197
        %v2199 = vrot.slane %v2198, 1
        %v2200 = vadd.f32 %v2198, %v2199
        %v2201 = vrot.slane %v1453, 4
        %v2202 = vadd.f32 %v1453, %v2201
        %v2203 = vrot.slane %v2202, 2
        %v2204 = vadd.f32 %v2202, %v2203
        %v2205 = vrot.slane %v2204, 1
        %v2206 = vadd.f32 %v2204, %v2205
        %v2207 = vrot.slane %v1454, 4
        %v2208 = vadd.f32 %v1454, %v2207
        %v2209 = vrot.slane %v2208, 2
        %v2210 = vadd.f32 %v2208, %v2209
        %v2211 = vrot.slane %v2210, 1
        %v2212 = vadd.f32 %v2210, %v2211
        %v2213 = vrot.slane %v1455, 4
        %v2214 = vadd.f32 %v1455, %v2213
        %v2215 = vrot.slane %v2214, 2
        %v2216 = vadd.f32 %v2214, %v2215
        %v2217 = vrot.slane %v2216, 1
        %v2218 = vadd.f32 %v2216, %v2217
        %v2219 = vrot.slane %v1456, 4
        %v2220 = vadd.f32 %v1456, %v2219
        %v2221 = vrot.slane %v2220, 2
        %v2222 = vadd.f32 %v2220, %v2221
        %v2223 = vrot.slane %v2222, 1
        %v2224 = vadd.f32 %v2222, %v2223
        %vm2225 = vcmask 64512
        %v2226 = vsel %vm2225, %v417, 0.0
        %2227 = vadd.xlane.f32.xlu0 %v2226
        %v2228 = vpop.xlane.xlu0 %2227
        %v2229 = vsel %vm2225, %v418, 0.0
        %2230 = vadd.xlane.f32.xlu0 %v2229
        %v2231 = vpop.xlane.xlu0 %2230
        %v2232 = vsel %vm2225, %v419, 0.0
        %2233 = vadd.xlane.f32.xlu0 %v2232
        %v2234 = vpop.xlane.xlu0 %2233
        %v2235 = vsel %vm2225, %v420, 0.0
        %2236 = vadd.xlane.f32.xlu0 %v2235
        %v2237 = vpop.xlane.xlu0 %2236
        %v2238 = vsel %vm2225, %v421, 0.0
        %2239 = vadd.xlane.f32.xlu0 %v2238
        %v2240 = vpop.xlane.xlu0 %2239
        %v2241 = vsel %vm2225, %v422, 0.0
        %2242 = vadd.xlane.f32.xlu0 %v2241
        %v2243 = vpop.xlane.xlu0 %2242
        %v2244 = vsel %vm2225, %v423, 0.0
        %2245 = vadd.xlane.f32.xlu0 %v2244
        %v2246 = vpop.xlane.xlu0 %2245
        %v2247 = vsel %vm2225, %v424, 0.0
        %2248 = vadd.xlane.f32.xlu0 %v2247
        %v2249 = vpop.xlane.xlu0 %2248
        %v2250 = vsel %vm2225, %v425, 0.0
        %2251 = vadd.xlane.f32.xlu0 %v2250
        %v2252 = vpop.xlane.xlu0 %2251
        %v2253 = vsel %vm2225, %v426, 0.0
        %2254 = vadd.xlane.f32.xlu0 %v2253
        %v2255 = vpop.xlane.xlu0 %2254
        %v2256 = vsel %vm2225, %v427, 0.0
        %2257 = vadd.xlane.f32.xlu0 %v2256
        %v2258 = vpop.xlane.xlu0 %2257
        %v2259 = vsel %vm2225, %v428, 0.0
        %2260 = vadd.xlane.f32.xlu0 %v2259
        %v2261 = vpop.xlane.xlu0 %2260
        %v2262 = vsel %vm2225, %v429, 0.0
        %2263 = vadd.xlane.f32.xlu0 %v2262
        %v2264 = vpop.xlane.xlu0 %2263
        %v2265 = vsel %vm2225, %v430, 0.0
        %2266 = vadd.xlane.f32.xlu0 %v2265
        %v2267 = vpop.xlane.xlu0 %2266
        %v2268 = vsel %vm2225, %v431, 0.0
        %2269 = vadd.xlane.f32.xlu0 %v2268
        %v2270 = vpop.xlane.xlu0 %2269
        %v2271 = vsel %vm2225, %v432, 0.0
        %2272 = vadd.xlane.f32.xlu0 %v2271
        %v2273 = vpop.xlane.xlu0 %2272
        %v2274 = vmax.f32 %v2228, 1.0
        %v2275 = vmax.f32 %v2231, 1.0
        %v2276 = vmax.f32 %v2234, 1.0
        %v2277 = vmax.f32 %v2237, 1.0
        %v2278 = vmax.f32 %v2240, 1.0
        %v2279 = vmax.f32 %v2243, 1.0
        %v2280 = vmax.f32 %v2246, 1.0
        %v2281 = vmax.f32 %v2249, 1.0
        %v2282 = vmax.f32 %v2252, 1.0
        %v2283 = vmax.f32 %v2255, 1.0
        %v2284 = vmax.f32 %v2258, 1.0
        %v2285 = vmax.f32 %v2261, 1.0
        %v2286 = vmax.f32 %v2264, 1.0
        %v2287 = vmax.f32 %v2267, 1.0
        %v2288 = vmax.f32 %v2270, 1.0
        %v2289 = vmax.f32 %v2273, 1.0
        %v2306 = vrot.slane %v2274, 1
        %v2307 = vrot.slane %v2274, 2
        %v2308 = vrot.slane %v2274, 3
        %v2309 = vrot.slane %v2274, 4
        %v2310 = vrot.slane %v2274, 5
        %v2311 = vrot.slane %v2274, 6
        %v2312 = vrot.slane %v2274, 7
        %v2313 = vrot.slane %v2275, 1
        %v2314 = vrot.slane %v2275, 2
        %v2315 = vrot.slane %v2275, 3
        %v2316 = vrot.slane %v2275, 4
        %v2317 = vrot.slane %v2275, 5
        %v2318 = vrot.slane %v2275, 6
        %v2319 = vrot.slane %v2275, 7
        %v2320 = vrot.slane %v2276, 1
        %v2321 = vrot.slane %v2276, 2
        %v2322 = vrot.slane %v2276, 3
        %v2323 = vrot.slane %v2276, 4
        %v2324 = vrot.slane %v2276, 5
        %v2325 = vrot.slane %v2276, 6
        %v2326 = vrot.slane %v2276, 7
        %v2327 = vrot.slane %v2277, 1
        %v2328 = vrot.slane %v2277, 2
        %v2329 = vrot.slane %v2277, 3
        %v2330 = vrot.slane %v2277, 4
        %v2331 = vrot.slane %v2277, 5
        %v2332 = vrot.slane %v2277, 6
        %v2333 = vrot.slane %v2277, 7
        %v2334 = vrot.slane %v2278, 1
        %v2335 = vrot.slane %v2278, 2
        %v2336 = vrot.slane %v2278, 3
        %v2337 = vrot.slane %v2278, 4
        %v2338 = vrot.slane %v2278, 5
        %v2339 = vrot.slane %v2278, 6
        %v2340 = vrot.slane %v2278, 7
        %v2341 = vrot.slane %v2279, 1
        %v2342 = vrot.slane %v2279, 2
        %v2343 = vrot.slane %v2279, 3
        %v2344 = vrot.slane %v2279, 4
        %v2345 = vrot.slane %v2279, 5
        %v2346 = vrot.slane %v2279, 6
        %v2347 = vrot.slane %v2279, 7
        %v2348 = vrot.slane %v2280, 1
        %v2349 = vrot.slane %v2280, 2
        %v2350 = vrot.slane %v2280, 3
        %v2351 = vrot.slane %v2280, 4
        %v2352 = vrot.slane %v2280, 5
        %v2353 = vrot.slane %v2280, 6
        %v2354 = vrot.slane %v2280, 7
        %v2355 = vrot.slane %v2281, 1
        %v2356 = vrot.slane %v2281, 2
        %v2357 = vrot.slane %v2281, 3
        %v2358 = vrot.slane %v2281, 4
        %v2359 = vrot.slane %v2281, 5
        %v2360 = vrot.slane %v2281, 6
        %v2361 = vrot.slane %v2281, 7
        %v2362 = vrot.slane %v2282, 1
        %v2363 = vrot.slane %v2282, 2
        %v2364 = vrot.slane %v2282, 3
        %v2365 = vrot.slane %v2282, 4
        %v2366 = vrot.slane %v2282, 5
        %v2367 = vrot.slane %v2282, 6
        %v2368 = vrot.slane %v2282, 7
        %v2369 = vrot.slane %v2283, 1
        %v2370 = vrot.slane %v2283, 2
        %v2371 = vrot.slane %v2283, 3
        %v2372 = vrot.slane %v2283, 4
        %v2373 = vrot.slane %v2283, 5
        %v2374 = vrot.slane %v2283, 6
        %v2375 = vrot.slane %v2283, 7
        %v2376 = vrot.slane %v2284, 1
        %v2377 = vrot.slane %v2284, 2
        %v2378 = vrot.slane %v2284, 3
        %v2379 = vrot.slane %v2284, 4
        %v2380 = vrot.slane %v2284, 5
        %v2381 = vrot.slane %v2284, 6
        %v2382 = vrot.slane %v2284, 7
        %v2383 = vrot.slane %v2285, 1
        %v2384 = vrot.slane %v2285, 2
        %v2385 = vrot.slane %v2285, 3
        %v2386 = vrot.slane %v2285, 4
        %v2387 = vrot.slane %v2285, 5
        %v2388 = vrot.slane %v2285, 6
        %v2389 = vrot.slane %v2285, 7
        %v2390 = vrot.slane %v2286, 1
        %v2391 = vrot.slane %v2286, 2
        %v2392 = vrot.slane %v2286, 3
        %v2393 = vrot.slane %v2286, 4
        %v2394 = vrot.slane %v2286, 5
        %v2395 = vrot.slane %v2286, 6
        %v2396 = vrot.slane %v2286, 7
        %v2397 = vrot.slane %v2287, 1
        %v2398 = vrot.slane %v2287, 2
        %v2399 = vrot.slane %v2287, 3
        %v2400 = vrot.slane %v2287, 4
        %v2401 = vrot.slane %v2287, 5
        %v2402 = vrot.slane %v2287, 6
        %v2403 = vrot.slane %v2287, 7
        %v2404 = vrot.slane %v2288, 1
        %v2405 = vrot.slane %v2288, 2
        %v2406 = vrot.slane %v2288, 3
        %v2407 = vrot.slane %v2288, 4
        %v2408 = vrot.slane %v2288, 5
        %v2409 = vrot.slane %v2288, 6
        %v2410 = vrot.slane %v2288, 7
        %v2411 = vrot.slane %v2289, 1
        %v2412 = vrot.slane %v2289, 2
        %v2413 = vrot.slane %v2289, 3
        %v2414 = vrot.slane %v2289, 4
        %v2415 = vrot.slane %v2289, 5
        %v2416 = vrot.slane %v2289, 6
        %v2417 = vrot.slane %v2289, 7
        %v2546 = vrcp.pop %v2274
        %v2547 = vmul.f32 %v1462, %v2546
        %v2548 = vrcp.pop %v2306
        %v2549 = vmul.f32 %v1468, %v2548
        %v2550 = vrcp.pop %v2307
        %v2551 = vmul.f32 %v1474, %v2550
        %v2552 = vrcp.pop %v2308
        %v2553 = vmul.f32 %v1480, %v2552
        %v2554 = vrcp.pop %v2309
        %v2555 = vmul.f32 %v1486, %v2554
        %v2556 = vrcp.pop %v2310
        %v2557 = vmul.f32 %v1492, %v2556
        %v2558 = vrcp.pop %v2311
        %v2559 = vmul.f32 %v1498, %v2558
        %v2560 = vrcp.pop %v2312
        %v2561 = vmul.f32 %v1504, %v2560
        %v2562 = vrcp.pop %v2275
        %v2563 = vmul.f32 %v1510, %v2562
        %v2564 = vrcp.pop %v2313
        %v2565 = vmul.f32 %v1516, %v2564
        %v2566 = vrcp.pop %v2314
        %v2567 = vmul.f32 %v1522, %v2566
        %v2568 = vrcp.pop %v2315
        %v2569 = vmul.f32 %v1528, %v2568
        %v2570 = vrcp.pop %v2316
        %v2571 = vmul.f32 %v1534, %v2570
        %v2572 = vrcp.pop %v2317
        %v2573 = vmul.f32 %v1540, %v2572
        %v2574 = vrcp.pop %v2318
        %v2575 = vmul.f32 %v1546, %v2574
        %v2576 = vrcp.pop %v2319
        %v2577 = vmul.f32 %v1552, %v2576
        %v2578 = vrcp.pop %v2276
        %v2579 = vmul.f32 %v1558, %v2578
        %v2580 = vrcp.pop %v2320
        %v2581 = vmul.f32 %v1564, %v2580
        %v2582 = vrcp.pop %v2321
        %v2583 = vmul.f32 %v1570, %v2582
        %v2584 = vrcp.pop %v2322
        %v2585 = vmul.f32 %v1576, %v2584
        %v2586 = vrcp.pop %v2323
        %v2587 = vmul.f32 %v1582, %v2586
        %v2588 = vrcp.pop %v2324
        %v2589 = vmul.f32 %v1588, %v2588
        %v2590 = vrcp.pop %v2325
        %v2591 = vmul.f32 %v1594, %v2590
        %v2592 = vrcp.pop %v2326
        %v2593 = vmul.f32 %v1600, %v2592
        %v2594 = vrcp.pop %v2277
        %v2595 = vmul.f32 %v1606, %v2594
        %v2596 = vrcp.pop %v2327
        %v2597 = vmul.f32 %v1612, %v2596
        %v2598 = vrcp.pop %v2328
        %v2599 = vmul.f32 %v1618, %v2598
        %v2600 = vrcp.pop %v2329
        %v2601 = vmul.f32 %v1624, %v2600
        %v2602 = vrcp.pop %v2330
        %v2603 = vmul.f32 %v1630, %v2602
        %v2604 = vrcp.pop %v2331
        %v2605 = vmul.f32 %v1636, %v2604
        %v2606 = vrcp.pop %v2332
        %v2607 = vmul.f32 %v1642, %v2606
        %v2608 = vrcp.pop %v2333
        %v2609 = vmul.f32 %v1648, %v2608
        %v2610 = vrcp.pop %v2278
        %v2611 = vmul.f32 %v1654, %v2610
        %v2612 = vrcp.pop %v2334
        %v2613 = vmul.f32 %v1660, %v2612
        %v2614 = vrcp.pop %v2335
        %v2615 = vmul.f32 %v1666, %v2614
        %v2616 = vrcp.pop %v2336
        %v2617 = vmul.f32 %v1672, %v2616
        %v2618 = vrcp.pop %v2337
        %v2619 = vmul.f32 %v1678, %v2618
        %v2620 = vrcp.pop %v2338
        %v2621 = vmul.f32 %v1684, %v2620
        %v2622 = vrcp.pop %v2339
        %v2623 = vmul.f32 %v1690, %v2622
        %v2624 = vrcp.pop %v2340
        %v2625 = vmul.f32 %v1696, %v2624
        %v2626 = vrcp.pop %v2279
        %v2627 = vmul.f32 %v1702, %v2626
        %v2628 = vrcp.pop %v2341
        %v2629 = vmul.f32 %v1708, %v2628
        %v2630 = vrcp.pop %v2342
        %v2631 = vmul.f32 %v1714, %v2630
        %v2632 = vrcp.pop %v2343
        %v2633 = vmul.f32 %v1720, %v2632
        %v2634 = vrcp.pop %v2344
        %v2635 = vmul.f32 %v1726, %v2634
        %v2636 = vrcp.pop %v2345
        %v2637 = vmul.f32 %v1732, %v2636
        %v2638 = vrcp.pop %v2346
        %v2639 = vmul.f32 %v1738, %v2638
        %v2640 = vrcp.pop %v2347
        %v2641 = vmul.f32 %v1744, %v2640
        %v2642 = vrcp.pop %v2280
        %v2643 = vmul.f32 %v1750, %v2642
        %v2644 = vrcp.pop %v2348
        %v2645 = vmul.f32 %v1756, %v2644
        %v2646 = vrcp.pop %v2349
        %v2647 = vmul.f32 %v1762, %v2646
        %v2648 = vrcp.pop %v2350
        %v2649 = vmul.f32 %v1768, %v2648
        %v2650 = vrcp.pop %v2351
        %v2651 = vmul.f32 %v1774, %v2650
        %v2652 = vrcp.pop %v2352
        %v2653 = vmul.f32 %v1780, %v2652
        %v2654 = vrcp.pop %v2353
        %v2655 = vmul.f32 %v1786, %v2654
        %v2656 = vrcp.pop %v2354
        %v2657 = vmul.f32 %v1792, %v2656
        %v2658 = vrcp.pop %v2281
        %v2659 = vmul.f32 %v1798, %v2658
        %v2660 = vrcp.pop %v2355
        %v2661 = vmul.f32 %v1804, %v2660
        %v2662 = vrcp.pop %v2356
        %v2663 = vmul.f32 %v1810, %v2662
        %v2664 = vrcp.pop %v2357
        %v2665 = vmul.f32 %v1816, %v2664
        %v2666 = vrcp.pop %v2358
        %v2667 = vmul.f32 %v1822, %v2666
        %v2668 = vrcp.pop %v2359
        %v2669 = vmul.f32 %v1828, %v2668
        %v2670 = vrcp.pop %v2360
        %v2671 = vmul.f32 %v1834, %v2670
        %v2672 = vrcp.pop %v2361
        %v2673 = vmul.f32 %v1840, %v2672
        %v2674 = vrcp.pop %v2282
        %v2675 = vmul.f32 %v1846, %v2674
        %v2676 = vrcp.pop %v2362
        %v2677 = vmul.f32 %v1852, %v2676
        %v2678 = vrcp.pop %v2363
        %v2679 = vmul.f32 %v1858, %v2678
        %v2680 = vrcp.pop %v2364
        %v2681 = vmul.f32 %v1864, %v2680
        %v2682 = vrcp.pop %v2365
        %v2683 = vmul.f32 %v1870, %v2682
        %v2684 = vrcp.pop %v2366
        %v2685 = vmul.f32 %v1876, %v2684
        %v2686 = vrcp.pop %v2367
        %v2687 = vmul.f32 %v1882, %v2686
        %v2688 = vrcp.pop %v2368
        %v2689 = vmul.f32 %v1888, %v2688
        %v2690 = vrcp.pop %v2283
        %v2691 = vmul.f32 %v1894, %v2690
        %v2692 = vrcp.pop %v2369
        %v2693 = vmul.f32 %v1900, %v2692
        %v2694 = vrcp.pop %v2370
        %v2695 = vmul.f32 %v1906, %v2694
        %v2696 = vrcp.pop %v2371
        %v2697 = vmul.f32 %v1912, %v2696
        %v2698 = vrcp.pop %v2372
        %v2699 = vmul.f32 %v1918, %v2698
        %v2700 = vrcp.pop %v2373
        %v2701 = vmul.f32 %v1924, %v2700
        %v2702 = vrcp.pop %v2374
        %v2703 = vmul.f32 %v1930, %v2702
        %v2704 = vrcp.pop %v2375
        %v2705 = vmul.f32 %v1936, %v2704
        %v2706 = vrcp.pop %v2284
        %v2707 = vmul.f32 %v1942, %v2706
        %v2708 = vrcp.pop %v2376
        %v2709 = vmul.f32 %v1948, %v2708
        %v2710 = vrcp.pop %v2377
        %v2711 = vmul.f32 %v1954, %v2710
        %v2712 = vrcp.pop %v2378
        %v2713 = vmul.f32 %v1960, %v2712
        %v2714 = vrcp.pop %v2379
        %v2715 = vmul.f32 %v1966, %v2714
        %v2716 = vrcp.pop %v2380
        %v2717 = vmul.f32 %v1972, %v2716
        %v2718 = vrcp.pop %v2381
        %v2719 = vmul.f32 %v1978, %v2718
        %v2720 = vrcp.pop %v2382
        %v2721 = vmul.f32 %v1984, %v2720
        %v2722 = vrcp.pop %v2285
        %v2723 = vmul.f32 %v1990, %v2722
        %v2724 = vrcp.pop %v2383
        %v2725 = vmul.f32 %v1996, %v2724
        %v2726 = vrcp.pop %v2384
        %v2727 = vmul.f32 %v2002, %v2726
        %v2728 = vrcp.pop %v2385
        %v2729 = vmul.f32 %v2008, %v2728
        %v2730 = vrcp.pop %v2386
        %v2731 = vmul.f32 %v2014, %v2730
        %v2732 = vrcp.pop %v2387
        %v2733 = vmul.f32 %v2020, %v2732
        %v2734 = vrcp.pop %v2388
        %v2735 = vmul.f32 %v2026, %v2734
        %v2736 = vrcp.pop %v2389
        %v2737 = vmul.f32 %v2032, %v2736
        %v2738 = vrcp.pop %v2286
        %v2739 = vmul.f32 %v2038, %v2738
        %v2740 = vrcp.pop %v2390
        %v2741 = vmul.f32 %v2044, %v2740
        %v2742 = vrcp.pop %v2391
        %v2743 = vmul.f32 %v2050, %v2742
        %v2744 = vrcp.pop %v2392
        %v2745 = vmul.f32 %v2056, %v2744
        %v2746 = vrcp.pop %v2393
        %v2747 = vmul.f32 %v2062, %v2746
        %v2748 = vrcp.pop %v2394
        %v2749 = vmul.f32 %v2068, %v2748
        %v2750 = vrcp.pop %v2395
        %v2751 = vmul.f32 %v2074, %v2750
        %v2752 = vrcp.pop %v2396
        %v2753 = vmul.f32 %v2080, %v2752
        %v2754 = vrcp.pop %v2287
        %v2755 = vmul.f32 %v2086, %v2754
        %v2756 = vrcp.pop %v2397
        %v2757 = vmul.f32 %v2092, %v2756
        %v2758 = vrcp.pop %v2398
        %v2759 = vmul.f32 %v2098, %v2758
        %v2760 = vrcp.pop %v2399
        %v2761 = vmul.f32 %v2104, %v2760
        %v2762 = vrcp.pop %v2400
        %v2763 = vmul.f32 %v2110, %v2762
        %v2764 = vrcp.pop %v2401
        %v2765 = vmul.f32 %v2116, %v2764
        %v2766 = vrcp.pop %v2402
        %v2767 = vmul.f32 %v2122, %v2766
        %v2768 = vrcp.pop %v2403
        %v2769 = vmul.f32 %v2128, %v2768
        %v2770 = vrcp.pop %v2288
        %v2771 = vmul.f32 %v2134, %v2770
        %v2772 = vrcp.pop %v2404
        %v2773 = vmul.f32 %v2140, %v2772
        %v2774 = vrcp.pop %v2405
        %v2775 = vmul.f32 %v2146, %v2774
        %v2776 = vrcp.pop %v2406
        %v2777 = vmul.f32 %v2152, %v2776
        %v2778 = vrcp.pop %v2407
        %v2779 = vmul.f32 %v2158, %v2778
        %v2780 = vrcp.pop %v2408
        %v2781 = vmul.f32 %v2164, %v2780
        %v2782 = vrcp.pop %v2409
        %v2783 = vmul.f32 %v2170, %v2782
        %v2784 = vrcp.pop %v2410
        %v2785 = vmul.f32 %v2176, %v2784
        %v2786 = vrcp.pop %v2289
        %v2787 = vmul.f32 %v2182, %v2786
        %v2788 = vrcp.pop %v2411
        %v2789 = vmul.f32 %v2188, %v2788
        %v2790 = vrcp.pop %v2412
        %v2791 = vmul.f32 %v2194, %v2790
        %v2792 = vrcp.pop %v2413
        %v2793 = vmul.f32 %v2200, %v2792
        %v2794 = vrcp.pop %v2414
        %v2795 = vmul.f32 %v2206, %v2794
        %v2796 = vrcp.pop %v2415
        %v2797 = vmul.f32 %v2212, %v2796
        %v2798 = vrcp.pop %v2416
        %v2799 = vmul.f32 %v2218, %v2798
        %v2800 = vrcp.pop %v2417
        %v2801 = vmul.f32 %v2224, %v2800
        %v2802 = vpack.c.bf16 %v2547, %v2547
        %v2803 = vpack.c.bf16 %v2549, %v2549
        %v2804 = vpack.c.bf16 %v2551, %v2551
        %v2805 = vpack.c.bf16 %v2553, %v2553
        %v2806 = vpack.c.bf16 %v2555, %v2555
        %v2807 = vpack.c.bf16 %v2557, %v2557
        %v2808 = vpack.c.bf16 %v2559, %v2559
        %v2809 = vpack.c.bf16 %v2561, %v2561
        %v2810 = vpack.c.bf16 %v2563, %v2563
        %v2811 = vpack.c.bf16 %v2565, %v2565
        %v2812 = vpack.c.bf16 %v2567, %v2567
        %v2813 = vpack.c.bf16 %v2569, %v2569
        %v2814 = vpack.c.bf16 %v2571, %v2571
        %v2815 = vpack.c.bf16 %v2573, %v2573
        %v2816 = vpack.c.bf16 %v2575, %v2575
        %v2817 = vpack.c.bf16 %v2577, %v2577
        %v2818 = vpack.c.bf16 %v2579, %v2579
        %v2819 = vpack.c.bf16 %v2581, %v2581
        %v2820 = vpack.c.bf16 %v2583, %v2583
        %v2821 = vpack.c.bf16 %v2585, %v2585
        %v2822 = vpack.c.bf16 %v2587, %v2587
        %v2823 = vpack.c.bf16 %v2589, %v2589
        %v2824 = vpack.c.bf16 %v2591, %v2591
        %v2825 = vpack.c.bf16 %v2593, %v2593
        %v2826 = vpack.c.bf16 %v2595, %v2595
        %v2827 = vpack.c.bf16 %v2597, %v2597
        %v2828 = vpack.c.bf16 %v2599, %v2599
        %v2829 = vpack.c.bf16 %v2601, %v2601
        %v2830 = vpack.c.bf16 %v2603, %v2603
        %v2831 = vpack.c.bf16 %v2605, %v2605
        %v2832 = vpack.c.bf16 %v2607, %v2607
        %v2833 = vpack.c.bf16 %v2609, %v2609
        %v2834 = vpack.c.bf16 %v2611, %v2611
        %v2835 = vpack.c.bf16 %v2613, %v2613
        %v2836 = vpack.c.bf16 %v2615, %v2615
        %v2837 = vpack.c.bf16 %v2617, %v2617
        %v2838 = vpack.c.bf16 %v2619, %v2619
        %v2839 = vpack.c.bf16 %v2621, %v2621
        %v2840 = vpack.c.bf16 %v2623, %v2623
        %v2841 = vpack.c.bf16 %v2625, %v2625
        %v2842 = vpack.c.bf16 %v2627, %v2627
        %v2843 = vpack.c.bf16 %v2629, %v2629
        %v2844 = vpack.c.bf16 %v2631, %v2631
        %v2845 = vpack.c.bf16 %v2633, %v2633
        %v2846 = vpack.c.bf16 %v2635, %v2635
        %v2847 = vpack.c.bf16 %v2637, %v2637
        %v2848 = vpack.c.bf16 %v2639, %v2639
        %v2849 = vpack.c.bf16 %v2641, %v2641
        %v2850 = vpack.c.bf16 %v2643, %v2643
        %v2851 = vpack.c.bf16 %v2645, %v2645
        %v2852 = vpack.c.bf16 %v2647, %v2647
        %v2853 = vpack.c.bf16 %v2649, %v2649
        %v2854 = vpack.c.bf16 %v2651, %v2651
        %v2855 = vpack.c.bf16 %v2653, %v2653
        %v2856 = vpack.c.bf16 %v2655, %v2655
        %v2857 = vpack.c.bf16 %v2657, %v2657
        %v2858 = vpack.c.bf16 %v2659, %v2659
        %v2859 = vpack.c.bf16 %v2661, %v2661
        %v2860 = vpack.c.bf16 %v2663, %v2663
        %v2861 = vpack.c.bf16 %v2665, %v2665
        %v2862 = vpack.c.bf16 %v2667, %v2667
        %v2863 = vpack.c.bf16 %v2669, %v2669
        %v2864 = vpack.c.bf16 %v2671, %v2671
        %v2865 = vpack.c.bf16 %v2673, %v2673
        %v2866 = vpack.c.bf16 %v2675, %v2675
        %v2867 = vpack.c.bf16 %v2677, %v2677
        %v2868 = vpack.c.bf16 %v2679, %v2679
        %v2869 = vpack.c.bf16 %v2681, %v2681
        %v2870 = vpack.c.bf16 %v2683, %v2683
        %v2871 = vpack.c.bf16 %v2685, %v2685
        %v2872 = vpack.c.bf16 %v2687, %v2687
        %v2873 = vpack.c.bf16 %v2689, %v2689
        %v2874 = vpack.c.bf16 %v2691, %v2691
        %v2875 = vpack.c.bf16 %v2693, %v2693
        %v2876 = vpack.c.bf16 %v2695, %v2695
        %v2877 = vpack.c.bf16 %v2697, %v2697
        %v2878 = vpack.c.bf16 %v2699, %v2699
        %v2879 = vpack.c.bf16 %v2701, %v2701
        %v2880 = vpack.c.bf16 %v2703, %v2703
        %v2881 = vpack.c.bf16 %v2705, %v2705
        %v2882 = vpack.c.bf16 %v2707, %v2707
        %v2883 = vpack.c.bf16 %v2709, %v2709
        %v2884 = vpack.c.bf16 %v2711, %v2711
        %v2885 = vpack.c.bf16 %v2713, %v2713
        %v2886 = vpack.c.bf16 %v2715, %v2715
        %v2887 = vpack.c.bf16 %v2717, %v2717
        %v2888 = vpack.c.bf16 %v2719, %v2719
        %v2889 = vpack.c.bf16 %v2721, %v2721
        %v2890 = vpack.c.bf16 %v2723, %v2723
        %v2891 = vpack.c.bf16 %v2725, %v2725
        %v2892 = vpack.c.bf16 %v2727, %v2727
        %v2893 = vpack.c.bf16 %v2729, %v2729
        %v2894 = vpack.c.bf16 %v2731, %v2731
        %v2895 = vpack.c.bf16 %v2733, %v2733
        %v2896 = vpack.c.bf16 %v2735, %v2735
        %v2897 = vpack.c.bf16 %v2737, %v2737
        %v2898 = vpack.c.bf16 %v2739, %v2739
        %v2899 = vpack.c.bf16 %v2741, %v2741
        %v2900 = vpack.c.bf16 %v2743, %v2743
        %v2901 = vpack.c.bf16 %v2745, %v2745
        %v2902 = vpack.c.bf16 %v2747, %v2747
        %v2903 = vpack.c.bf16 %v2749, %v2749
        %v2904 = vpack.c.bf16 %v2751, %v2751
        %v2905 = vpack.c.bf16 %v2753, %v2753
        %v2906 = vpack.c.bf16 %v2755, %v2755
        %v2907 = vpack.c.bf16 %v2757, %v2757
        %v2908 = vpack.c.bf16 %v2759, %v2759
        %v2909 = vpack.c.bf16 %v2761, %v2761
        %v2910 = vpack.c.bf16 %v2763, %v2763
        %v2911 = vpack.c.bf16 %v2765, %v2765
        %v2912 = vpack.c.bf16 %v2767, %v2767
        %v2913 = vpack.c.bf16 %v2769, %v2769
        %v2914 = vpack.c.bf16 %v2771, %v2771
        %v2915 = vpack.c.bf16 %v2773, %v2773
        %v2916 = vpack.c.bf16 %v2775, %v2775
        %v2917 = vpack.c.bf16 %v2777, %v2777
        %v2918 = vpack.c.bf16 %v2779, %v2779
        %v2919 = vpack.c.bf16 %v2781, %v2781
        %v2920 = vpack.c.bf16 %v2783, %v2783
        %v2921 = vpack.c.bf16 %v2785, %v2785
        %v2922 = vpack.c.bf16 %v2787, %v2787
        %v2923 = vpack.c.bf16 %v2789, %v2789
        %v2924 = vpack.c.bf16 %v2791, %v2791
        %v2925 = vpack.c.bf16 %v2793, %v2793
        %v2926 = vpack.c.bf16 %v2795, %v2795
        %v2927 = vpack.c.bf16 %v2797, %v2797
        %v2928 = vpack.c.bf16 %v2799, %v2799
        %v2929 = vpack.c.bf16 %v2801, %v2801
        %v2930 = vld [vmem:[%s2] sm:$0xf]
        %v2931 = vld [vmem:[%s2 + $0x4] sm:$0xf]
        %v2932 = vld [vmem:[%s2 + $0x8] sm:$0xf]
        %v2933 = vld [vmem:[%s2 + $0xc] sm:$0xf]
        %v2934 = vld [vmem:[%s2 + $0x10] sm:$0xf]
        %v2935 = vld [vmem:[%s2 + $0x14] sm:$0xf]
        %v2936 = vld [vmem:[%s2 + $0x18] sm:$0xf]
        %v2937 = vld [vmem:[%s2 + $0x1c] sm:$0xf]
        %v2938 = vld [vmem:[%s2 + $0x20] sm:$0xf]
        %v2939 = vld [vmem:[%s2 + $0x24] sm:$0xf]
        %v2940 = vld [vmem:[%s2 + $0x28] sm:$0xf]
        %v2941 = vld [vmem:[%s2 + $0x2c] sm:$0xf]
        %v2942 = vld [vmem:[%s2 + $0x30] sm:$0xf]
        %v2943 = vld [vmem:[%s2 + $0x34] sm:$0xf]
        %v2944 = vld [vmem:[%s2 + $0x38] sm:$0xf]
        %v2945 = vld [vmem:[%s2 + $0x3c] sm:$0xf]
        %v2946 = vld [vmem:[%s3] sm:$0x1]
        %v2948 = vlaneseq
        %v2949 = vshrl.u32 %v2948, 7
        %v2950 = vsub.s32 0, %v2949
        %v2951 = vrot.slane %v2946, %v2950
        %v3081 = vunpack.c.l.b16 %v2802
        %v3082 = vunpack.c.l.b16 %v2803
        %v3083 = vunpack.c.l.b16 %v2804
        %v3084 = vunpack.c.l.b16 %v2805
        %v3085 = vunpack.c.l.b16 %v2806
        %v3086 = vunpack.c.l.b16 %v2807
        %v3087 = vunpack.c.l.b16 %v2808
        %v3088 = vunpack.c.l.b16 %v2809
        %v3089 = vunpack.c.l.b16 %v2810
        %v3090 = vunpack.c.l.b16 %v2811
        %v3091 = vunpack.c.l.b16 %v2812
        %v3092 = vunpack.c.l.b16 %v2813
        %v3093 = vunpack.c.l.b16 %v2814
        %v3094 = vunpack.c.l.b16 %v2815
        %v3095 = vunpack.c.l.b16 %v2816
        %v3096 = vunpack.c.l.b16 %v2817
        %v3097 = vunpack.c.l.b16 %v2818
        %v3098 = vunpack.c.l.b16 %v2819
        %v3099 = vunpack.c.l.b16 %v2820
        %v3100 = vunpack.c.l.b16 %v2821
        %v3101 = vunpack.c.l.b16 %v2822
        %v3102 = vunpack.c.l.b16 %v2823
        %v3103 = vunpack.c.l.b16 %v2824
        %v3104 = vunpack.c.l.b16 %v2825
        %v3105 = vunpack.c.l.b16 %v2826
        %v3106 = vunpack.c.l.b16 %v2827
        %v3107 = vunpack.c.l.b16 %v2828
        %v3108 = vunpack.c.l.b16 %v2829
        %v3109 = vunpack.c.l.b16 %v2830
        %v3110 = vunpack.c.l.b16 %v2831
        %v3111 = vunpack.c.l.b16 %v2832
        %v3112 = vunpack.c.l.b16 %v2833
        %v3113 = vunpack.c.l.b16 %v2834
        %v3114 = vunpack.c.l.b16 %v2835
        %v3115 = vunpack.c.l.b16 %v2836
        %v3116 = vunpack.c.l.b16 %v2837
        %v3117 = vunpack.c.l.b16 %v2838
        %v3118 = vunpack.c.l.b16 %v2839
        %v3119 = vunpack.c.l.b16 %v2840
        %v3120 = vunpack.c.l.b16 %v2841
        %v3121 = vunpack.c.l.b16 %v2842
        %v3122 = vunpack.c.l.b16 %v2843
        %v3123 = vunpack.c.l.b16 %v2844
        %v3124 = vunpack.c.l.b16 %v2845
        %v3125 = vunpack.c.l.b16 %v2846
        %v3126 = vunpack.c.l.b16 %v2847
        %v3127 = vunpack.c.l.b16 %v2848
        %v3128 = vunpack.c.l.b16 %v2849
        %v3129 = vunpack.c.l.b16 %v2850
        %v3130 = vunpack.c.l.b16 %v2851
        %v3131 = vunpack.c.l.b16 %v2852
        %v3132 = vunpack.c.l.b16 %v2853
        %v3133 = vunpack.c.l.b16 %v2854
        %v3134 = vunpack.c.l.b16 %v2855
        %v3135 = vunpack.c.l.b16 %v2856
        %v3136 = vunpack.c.l.b16 %v2857
        %v3137 = vunpack.c.l.b16 %v2858
        %v3138 = vunpack.c.l.b16 %v2859
        %v3139 = vunpack.c.l.b16 %v2860
        %v3140 = vunpack.c.l.b16 %v2861
        %v3141 = vunpack.c.l.b16 %v2862
        %v3142 = vunpack.c.l.b16 %v2863
        %v3143 = vunpack.c.l.b16 %v2864
        %v3144 = vunpack.c.l.b16 %v2865
        %v3145 = vunpack.c.l.b16 %v2866
        %v3146 = vunpack.c.l.b16 %v2867
        %v3147 = vunpack.c.l.b16 %v2868
        %v3148 = vunpack.c.l.b16 %v2869
        %v3149 = vunpack.c.l.b16 %v2870
        %v3150 = vunpack.c.l.b16 %v2871
        %v3151 = vunpack.c.l.b16 %v2872
        %v3152 = vunpack.c.l.b16 %v2873
        %v3153 = vunpack.c.l.b16 %v2874
        %v3154 = vunpack.c.l.b16 %v2875
        %v3155 = vunpack.c.l.b16 %v2876
        %v3156 = vunpack.c.l.b16 %v2877
        %v3157 = vunpack.c.l.b16 %v2878
        %v3158 = vunpack.c.l.b16 %v2879
        %v3159 = vunpack.c.l.b16 %v2880
        %v3160 = vunpack.c.l.b16 %v2881
        %v3161 = vunpack.c.l.b16 %v2882
        %v3162 = vunpack.c.l.b16 %v2883
        %v3163 = vunpack.c.l.b16 %v2884
        %v3164 = vunpack.c.l.b16 %v2885
        %v3165 = vunpack.c.l.b16 %v2886
        %v3166 = vunpack.c.l.b16 %v2887
        %v3167 = vunpack.c.l.b16 %v2888
        %v3168 = vunpack.c.l.b16 %v2889
        %v3169 = vunpack.c.l.b16 %v2890
        %v3170 = vunpack.c.l.b16 %v2891
        %v3171 = vunpack.c.l.b16 %v2892
        %v3172 = vunpack.c.l.b16 %v2893
        %v3173 = vunpack.c.l.b16 %v2894
        %v3174 = vunpack.c.l.b16 %v2895
        %v3175 = vunpack.c.l.b16 %v2896
        %v3176 = vunpack.c.l.b16 %v2897
        %v3177 = vunpack.c.l.b16 %v2898
        %v3178 = vunpack.c.l.b16 %v2899
        %v3179 = vunpack.c.l.b16 %v2900
        %v3180 = vunpack.c.l.b16 %v2901
        %v3181 = vunpack.c.l.b16 %v2902
        %v3182 = vunpack.c.l.b16 %v2903
        %v3183 = vunpack.c.l.b16 %v2904
        %v3184 = vunpack.c.l.b16 %v2905
        %v3185 = vunpack.c.l.b16 %v2906
        %v3186 = vunpack.c.l.b16 %v2907
        %v3187 = vunpack.c.l.b16 %v2908
        %v3188 = vunpack.c.l.b16 %v2909
        %v3189 = vunpack.c.l.b16 %v2910
        %v3190 = vunpack.c.l.b16 %v2911
        %v3191 = vunpack.c.l.b16 %v2912
        %v3192 = vunpack.c.l.b16 %v2913
        %v3193 = vunpack.c.l.b16 %v2914
        %v3194 = vunpack.c.l.b16 %v2915
        %v3195 = vunpack.c.l.b16 %v2916
        %v3196 = vunpack.c.l.b16 %v2917
        %v3197 = vunpack.c.l.b16 %v2918
        %v3198 = vunpack.c.l.b16 %v2919
        %v3199 = vunpack.c.l.b16 %v2920
        %v3200 = vunpack.c.l.b16 %v2921
        %v3201 = vunpack.c.l.b16 %v2922
        %v3202 = vunpack.c.l.b16 %v2923
        %v3203 = vunpack.c.l.b16 %v2924
        %v3204 = vunpack.c.l.b16 %v2925
        %v3205 = vunpack.c.l.b16 %v2926
        %v3206 = vunpack.c.l.b16 %v2927
        %v3207 = vunpack.c.l.b16 %v2928
        %v3208 = vunpack.c.l.b16 %v2929
        %v3209 = vrot.slane %v3082, 7
        %vm3210 = vcmask 1041409
        %v3211 = vsel %vm3210, %v3209, %v3081
        %v3212 = vrot.slane %v3083, 6
        %vm3213 = vcmask 1042434
        %v3214 = vsel %vm3213, %v3212, %v3211
        %v3215 = vrot.slane %v3084, 5
        %vm3216 = vcmask 1043459
        %v3217 = vsel %vm3216, %v3215, %v3214
        %v3218 = vrot.slane %v3085, 4
        %vm3219 = vcmask 1044484
        %v3220 = vsel %vm3219, %v3218, %v3217
        %v3221 = vrot.slane %v3086, 3
        %vm3222 = vcmask 1045509
        %v3223 = vsel %vm3222, %v3221, %v3220
        %v3224 = vrot.slane %v3087, 2
        %vm3225 = vcmask 1046534
        %v3226 = vsel %vm3225, %v3224, %v3223
        %v3227 = vrot.slane %v3088, 1
        %vm3228 = vcmask 1047559
        %v3229 = vsel %vm3228, %v3227, %v3226
        %v3230 = vrot.slane %v3090, 7
        %v3231 = vsel %vm3210, %v3230, %v3089
        %v3232 = vrot.slane %v3091, 6
        %v3233 = vsel %vm3213, %v3232, %v3231
        %v3234 = vrot.slane %v3092, 5
        %v3235 = vsel %vm3216, %v3234, %v3233
        %v3236 = vrot.slane %v3093, 4
        %v3237 = vsel %vm3219, %v3236, %v3235
        %v3238 = vrot.slane %v3094, 3
        %v3239 = vsel %vm3222, %v3238, %v3237
        %v3240 = vrot.slane %v3095, 2
        %v3241 = vsel %vm3225, %v3240, %v3239
        %v3242 = vrot.slane %v3096, 1
        %v3243 = vsel %vm3228, %v3242, %v3241
        %v3244 = vrot.slane %v3098, 7
        %v3245 = vsel %vm3210, %v3244, %v3097
        %v3246 = vrot.slane %v3099, 6
        %v3247 = vsel %vm3213, %v3246, %v3245
        %v3248 = vrot.slane %v3100, 5
        %v3249 = vsel %vm3216, %v3248, %v3247
        %v3250 = vrot.slane %v3101, 4
        %v3251 = vsel %vm3219, %v3250, %v3249
        %v3252 = vrot.slane %v3102, 3
        %v3253 = vsel %vm3222, %v3252, %v3251
        %v3254 = vrot.slane %v3103, 2
        %v3255 = vsel %vm3225, %v3254, %v3253
        %v3256 = vrot.slane %v3104, 1
        %v3257 = vsel %vm3228, %v3256, %v3255
        %v3258 = vrot.slane %v3106, 7
        %v3259 = vsel %vm3210, %v3258, %v3105
        %v3260 = vrot.slane %v3107, 6
        %v3261 = vsel %vm3213, %v3260, %v3259
        %v3262 = vrot.slane %v3108, 5
        %v3263 = vsel %vm3216, %v3262, %v3261
        %v3264 = vrot.slane %v3109, 4
        %v3265 = vsel %vm3219, %v3264, %v3263
        %v3266 = vrot.slane %v3110, 3
        %v3267 = vsel %vm3222, %v3266, %v3265
        %v3268 = vrot.slane %v3111, 2
        %v3269 = vsel %vm3225, %v3268, %v3267
        %v3270 = vrot.slane %v3112, 1
        %v3271 = vsel %vm3228, %v3270, %v3269
        %v3272 = vrot.slane %v3114, 7
        %v3273 = vsel %vm3210, %v3272, %v3113
        %v3274 = vrot.slane %v3115, 6
        %v3275 = vsel %vm3213, %v3274, %v3273
        %v3276 = vrot.slane %v3116, 5
        %v3277 = vsel %vm3216, %v3276, %v3275
        %v3278 = vrot.slane %v3117, 4
        %v3279 = vsel %vm3219, %v3278, %v3277
        %v3280 = vrot.slane %v3118, 3
        %v3281 = vsel %vm3222, %v3280, %v3279
        %v3282 = vrot.slane %v3119, 2
        %v3283 = vsel %vm3225, %v3282, %v3281
        %v3284 = vrot.slane %v3120, 1
        %v3285 = vsel %vm3228, %v3284, %v3283
        %v3286 = vrot.slane %v3122, 7
        %v3287 = vsel %vm3210, %v3286, %v3121
        %v3288 = vrot.slane %v3123, 6
        %v3289 = vsel %vm3213, %v3288, %v3287
        %v3290 = vrot.slane %v3124, 5
        %v3291 = vsel %vm3216, %v3290, %v3289
        %v3292 = vrot.slane %v3125, 4
        %v3293 = vsel %vm3219, %v3292, %v3291
        %v3294 = vrot.slane %v3126, 3
        %v3295 = vsel %vm3222, %v3294, %v3293
        %v3296 = vrot.slane %v3127, 2
        %v3297 = vsel %vm3225, %v3296, %v3295
        %v3298 = vrot.slane %v3128, 1
        %v3299 = vsel %vm3228, %v3298, %v3297
        %v3300 = vrot.slane %v3130, 7
        %v3301 = vsel %vm3210, %v3300, %v3129
        %v3302 = vrot.slane %v3131, 6
        %v3303 = vsel %vm3213, %v3302, %v3301
        %v3304 = vrot.slane %v3132, 5
        %v3305 = vsel %vm3216, %v3304, %v3303
        %v3306 = vrot.slane %v3133, 4
        %v3307 = vsel %vm3219, %v3306, %v3305
        %v3308 = vrot.slane %v3134, 3
        %v3309 = vsel %vm3222, %v3308, %v3307
        %v3310 = vrot.slane %v3135, 2
        %v3311 = vsel %vm3225, %v3310, %v3309
        %v3312 = vrot.slane %v3136, 1
        %v3313 = vsel %vm3228, %v3312, %v3311
        %v3314 = vrot.slane %v3138, 7
        %v3315 = vsel %vm3210, %v3314, %v3137
        %v3316 = vrot.slane %v3139, 6
        %v3317 = vsel %vm3213, %v3316, %v3315
        %v3318 = vrot.slane %v3140, 5
        %v3319 = vsel %vm3216, %v3318, %v3317
        %v3320 = vrot.slane %v3141, 4
        %v3321 = vsel %vm3219, %v3320, %v3319
        %v3322 = vrot.slane %v3142, 3
        %v3323 = vsel %vm3222, %v3322, %v3321
        %v3324 = vrot.slane %v3143, 2
        %v3325 = vsel %vm3225, %v3324, %v3323
        %v3326 = vrot.slane %v3144, 1
        %v3327 = vsel %vm3228, %v3326, %v3325
        %v3328 = vrot.slane %v3146, 7
        %v3329 = vsel %vm3210, %v3328, %v3145
        %v3330 = vrot.slane %v3147, 6
        %v3331 = vsel %vm3213, %v3330, %v3329
        %v3332 = vrot.slane %v3148, 5
        %v3333 = vsel %vm3216, %v3332, %v3331
        %v3334 = vrot.slane %v3149, 4
        %v3335 = vsel %vm3219, %v3334, %v3333
        %v3336 = vrot.slane %v3150, 3
        %v3337 = vsel %vm3222, %v3336, %v3335
        %v3338 = vrot.slane %v3151, 2
        %v3339 = vsel %vm3225, %v3338, %v3337
        %v3340 = vrot.slane %v3152, 1
        %v3341 = vsel %vm3228, %v3340, %v3339
        %v3342 = vrot.slane %v3154, 7
        %v3343 = vsel %vm3210, %v3342, %v3153
        %v3344 = vrot.slane %v3155, 6
        %v3345 = vsel %vm3213, %v3344, %v3343
        %v3346 = vrot.slane %v3156, 5
        %v3347 = vsel %vm3216, %v3346, %v3345
        %v3348 = vrot.slane %v3157, 4
        %v3349 = vsel %vm3219, %v3348, %v3347
        %v3350 = vrot.slane %v3158, 3
        %v3351 = vsel %vm3222, %v3350, %v3349
        %v3352 = vrot.slane %v3159, 2
        %v3353 = vsel %vm3225, %v3352, %v3351
        %v3354 = vrot.slane %v3160, 1
        %v3355 = vsel %vm3228, %v3354, %v3353
        %v3356 = vrot.slane %v3162, 7
        %v3357 = vsel %vm3210, %v3356, %v3161
        %v3358 = vrot.slane %v3163, 6
        %v3359 = vsel %vm3213, %v3358, %v3357
        %v3360 = vrot.slane %v3164, 5
        %v3361 = vsel %vm3216, %v3360, %v3359
        %v3362 = vrot.slane %v3165, 4
        %v3363 = vsel %vm3219, %v3362, %v3361
        %v3364 = vrot.slane %v3166, 3
        %v3365 = vsel %vm3222, %v3364, %v3363
        %v3366 = vrot.slane %v3167, 2
        %v3367 = vsel %vm3225, %v3366, %v3365
        %v3368 = vrot.slane %v3168, 1
        %v3369 = vsel %vm3228, %v3368, %v3367
        %v3370 = vrot.slane %v3170, 7
        %v3371 = vsel %vm3210, %v3370, %v3169
        %v3372 = vrot.slane %v3171, 6
        %v3373 = vsel %vm3213, %v3372, %v3371
        %v3374 = vrot.slane %v3172, 5
        %v3375 = vsel %vm3216, %v3374, %v3373
        %v3376 = vrot.slane %v3173, 4
        %v3377 = vsel %vm3219, %v3376, %v3375
        %v3378 = vrot.slane %v3174, 3
        %v3379 = vsel %vm3222, %v3378, %v3377
        %v3380 = vrot.slane %v3175, 2
        %v3381 = vsel %vm3225, %v3380, %v3379
        %v3382 = vrot.slane %v3176, 1
        %v3383 = vsel %vm3228, %v3382, %v3381
        %v3384 = vrot.slane %v3178, 7
        %v3385 = vsel %vm3210, %v3384, %v3177
        %v3386 = vrot.slane %v3179, 6
        %v3387 = vsel %vm3213, %v3386, %v3385
        %v3388 = vrot.slane %v3180, 5
        %v3389 = vsel %vm3216, %v3388, %v3387
        %v3390 = vrot.slane %v3181, 4
        %v3391 = vsel %vm3219, %v3390, %v3389
        %v3392 = vrot.slane %v3182, 3
        %v3393 = vsel %vm3222, %v3392, %v3391
        %v3394 = vrot.slane %v3183, 2
        %v3395 = vsel %vm3225, %v3394, %v3393
        %v3396 = vrot.slane %v3184, 1
        %v3397 = vsel %vm3228, %v3396, %v3395
        %v3398 = vrot.slane %v3186, 7
        %v3399 = vsel %vm3210, %v3398, %v3185
        %v3400 = vrot.slane %v3187, 6
        %v3401 = vsel %vm3213, %v3400, %v3399
        %v3402 = vrot.slane %v3188, 5
        %v3403 = vsel %vm3216, %v3402, %v3401
        %v3404 = vrot.slane %v3189, 4
        %v3405 = vsel %vm3219, %v3404, %v3403
        %v3406 = vrot.slane %v3190, 3
        %v3407 = vsel %vm3222, %v3406, %v3405
        %v3408 = vrot.slane %v3191, 2
        %v3409 = vsel %vm3225, %v3408, %v3407
        %v3410 = vrot.slane %v3192, 1
        %v3411 = vsel %vm3228, %v3410, %v3409
        %v3412 = vrot.slane %v3194, 7
        %v3413 = vsel %vm3210, %v3412, %v3193
        %v3414 = vrot.slane %v3195, 6
        %v3415 = vsel %vm3213, %v3414, %v3413
        %v3416 = vrot.slane %v3196, 5
        %v3417 = vsel %vm3216, %v3416, %v3415
        %v3418 = vrot.slane %v3197, 4
        %v3419 = vsel %vm3219, %v3418, %v3417
        %v3420 = vrot.slane %v3198, 3
        %v3421 = vsel %vm3222, %v3420, %v3419
        %v3422 = vrot.slane %v3199, 2
        %v3423 = vsel %vm3225, %v3422, %v3421
        %v3424 = vrot.slane %v3200, 1
        %v3425 = vsel %vm3228, %v3424, %v3423
        %v3426 = vrot.slane %v3202, 7
        %v3427 = vsel %vm3210, %v3426, %v3201
        %v3428 = vrot.slane %v3203, 6
        %v3429 = vsel %vm3213, %v3428, %v3427
        %v3430 = vrot.slane %v3204, 5
        %v3431 = vsel %vm3216, %v3430, %v3429
        %v3432 = vrot.slane %v3205, 4
        %v3433 = vsel %vm3219, %v3432, %v3431
        %v3434 = vrot.slane %v3206, 3
        %v3435 = vsel %vm3222, %v3434, %v3433
        %v3436 = vrot.slane %v3207, 2
        %v3437 = vsel %vm3225, %v3436, %v3435
        %v3438 = vrot.slane %v3208, 1
        %v3439 = vsel %vm3228, %v3438, %v3437
        %v3440 = vpack.c.b16 %v3243, %v3229
        %v3441 = vpack.c.b16 %v3271, %v3257
        %v3442 = vpack.c.b16 %v3299, %v3285
        %v3443 = vpack.c.b16 %v3327, %v3313
        %v3444 = vpack.c.b16 %v3355, %v3341
        %v3445 = vpack.c.b16 %v3383, %v3369
        %v3446 = vpack.c.b16 %v3411, %v3397
        %v3447 = vpack.c.b16 %v3439, %v3425
        %v3472 = vunpack.c.l.b16 %v2930
        %v3473 = vunpack.c.l.b16 %v2931
        %v3474 = vunpack.c.l.b16 %v2932
        %v3475 = vunpack.c.l.b16 %v2933
        %v3476 = vunpack.c.l.b16 %v2934
        %v3477 = vunpack.c.l.b16 %v2935
        %v3478 = vunpack.c.l.b16 %v2936
        %v3479 = vunpack.c.l.b16 %v2937
        %v3480 = vunpack.c.l.b16 %v2938
        %v3481 = vunpack.c.l.b16 %v2939
        %v3482 = vunpack.c.l.b16 %v2940
        %v3483 = vunpack.c.l.b16 %v2941
        %v3484 = vunpack.c.l.b16 %v2942
        %v3485 = vunpack.c.l.b16 %v2943
        %v3486 = vunpack.c.l.b16 %v2944
        %v3487 = vunpack.c.l.b16 %v2945
        %v3488 = vpack.c.b16 %v3473, %v3472
        %v3489 = vpack.c.b16 %v3475, %v3474
        %v3490 = vpack.c.b16 %v3477, %v3476
        %v3491 = vpack.c.b16 %v3479, %v3478
        %v3492 = vpack.c.b16 %v3481, %v3480
        %v3493 = vpack.c.b16 %v3483, %v3482
        %v3494 = vpack.c.b16 %v3485, %v3484
        %v3495 = vpack.c.b16 %v3487, %v3486
        %3504 = vmatprep.subr.bf16.mxu0 0
        %3505 = vmatpush1.bf16.msra.mxu0 %v3488
        %3506 = vmatprep.subr.bf16.mxu0 0
        %3507 = vmatpush1.bf16.msra.mxu0 %v3489
        %3508 = vmatprep.subr.bf16.mxu0 0
        %3509 = vmatpush1.bf16.msra.mxu0 %v3490
        %3510 = vmatprep.subr.bf16.mxu0 0
        %3511 = vmatpush1.bf16.msra.mxu0 %v3491
        %3512 = vmatprep.subr.bf16.mxu0 0
        %3513 = vmatpush1.bf16.msra.mxu0 %v3492
        %3514 = vmatprep.subr.bf16.mxu0 0
        %3515 = vmatpush1.bf16.msra.mxu0 %v3493
        %3516 = vmatprep.subr.bf16.mxu0 0
        %3517 = vmatpush1.bf16.msra.mxu0 %v3494
        %3518 = vmatprep.subr.bf16.mxu0 0
        %3519 = vmatpush1.bf16.msra.mxu0 %v3495
        %3520 = vmatprep.subr.bf16.mxu0 0
        %3521 = vmatpush1.bf16.msra.mxu0 0
        %3522 = vmatprep.subr.bf16.mxu0 0
        %3523 = vmatpush1.bf16.msra.mxu0 0
        %3524 = vmatprep.subr.bf16.mxu0 0
        %3525 = vmatpush1.bf16.msra.mxu0 0
        %3526 = vmatprep.subr.bf16.mxu0 0
        %3527 = vmatpush1.bf16.msra.mxu0 0
        %3528 = vmatprep.subr.bf16.mxu0 0
        %3529 = vmatpush1.bf16.msra.mxu0 0
        %3530 = vmatprep.subr.bf16.mxu0 0
        %3531 = vmatpush1.bf16.msra.mxu0 0
        %3532 = vmatprep.subr.bf16.mxu0 0
        %3533 = vmatpush1.bf16.msra.mxu0 0
        %3534 = vmatprep.subr.bf16.mxu0 0
        %3535 = vmatpush1.bf16.msra.mxu0 0
        %3536 = vmatprep.mubr.bf16.mxu0 0
        %3537 = vmatmul.mubr.bf16.gmra.mrb[0].mxu0 %v3440
        %v3538 = vpop.f32.mrb[0].mxu0
        %v3539 = vadd.f32 %v2951, %v3538
        %v3540 = vpop.f32.mrb[0].mxu0
        %v3541 = vpop.f32.mrb[0].mxu0
        %v3542 = vadd.f32 %v2951, %v3541
        %v3543 = vpop.f32.mrb[0].mxu0
        %3544 = vmatprep.mubr.bf16.mxu0 0
        %3545 = vmatmul.mubr.bf16.gmra.mrb[0].mxu0 %v3441
        %v3546 = vpop.f32.mrb[0].mxu0
        %v3547 = vadd.f32 %v2951, %v3546
        %v3548 = vpop.f32.mrb[0].mxu0
        %v3549 = vpop.f32.mrb[0].mxu0
        %v3550 = vadd.f32 %v2951, %v3549
        %v3551 = vpop.f32.mrb[0].mxu0
        %3552 = vmatprep.mubr.bf16.mxu0 0
        %3553 = vmatmul.mubr.bf16.gmra.mrb[0].mxu0 %v3442
        %v3554 = vpop.f32.mrb[0].mxu0
        %v3555 = vadd.f32 %v2951, %v3554
        %v3556 = vpop.f32.mrb[0].mxu0
        %v3557 = vpop.f32.mrb[0].mxu0
        %v3558 = vadd.f32 %v2951, %v3557
        %v3559 = vpop.f32.mrb[0].mxu0
        %3560 = vmatprep.mubr.bf16.mxu0 0
        %3561 = vmatmul.mubr.bf16.gmra.mrb[0].mxu0 %v3443
        %v3562 = vpop.f32.mrb[0].mxu0
        %v3563 = vadd.f32 %v2951, %v3562
        %v3564 = vpop.f32.mrb[0].mxu0
        %v3565 = vpop.f32.mrb[0].mxu0
        %v3566 = vadd.f32 %v2951, %v3565
        %v3567 = vpop.f32.mrb[0].mxu0
        %3568 = vmatprep.mubr.bf16.mxu0 0
        %3569 = vmatmul.mubr.bf16.gmra.mrb[0].mxu0 %v3444
        %v3570 = vpop.f32.mrb[0].mxu0
        %v3571 = vadd.f32 %v2951, %v3570
        %v3572 = vpop.f32.mrb[0].mxu0
        %v3573 = vpop.f32.mrb[0].mxu0
        %v3574 = vadd.f32 %v2951, %v3573
        %v3575 = vpop.f32.mrb[0].mxu0
        %3576 = vmatprep.mubr.bf16.mxu0 0
        %3577 = vmatmul.mubr.bf16.gmra.mrb[0].mxu0 %v3445
        %v3578 = vpop.f32.mrb[0].mxu0
        %v3579 = vadd.f32 %v2951, %v3578
        %v3580 = vpop.f32.mrb[0].mxu0
        %v3581 = vpop.f32.mrb[0].mxu0
        %v3582 = vadd.f32 %v2951, %v3581
        %v3583 = vpop.f32.mrb[0].mxu0
        %3584 = vmatprep.mubr.bf16.mxu0 0
        %3585 = vmatmul.mubr.bf16.gmra.mrb[0].mxu0 %v3446
        %v3586 = vpop.f32.mrb[0].mxu0
        %v3587 = vadd.f32 %v2951, %v3586
        %v3588 = vpop.f32.mrb[0].mxu0
        %v3589 = vpop.f32.mrb[0].mxu0
        %v3590 = vadd.f32 %v2951, %v3589
        %v3591 = vpop.f32.mrb[0].mxu0
        %3592 = vmatprep.mubr.bf16.mxu0 0
        %3593 = vmatmul.mubr.bf16.gmra.mrb[0].mxu0 %v3447
        %v3594 = vpop.f32.mrb[0].mxu0
        %v3595 = vadd.f32 %v2951, %v3594
        %v3596 = vpop.f32.mrb[0].mxu0
        %v3597 = vpop.f32.mrb[0].mxu0
        %v3598 = vadd.f32 %v2951, %v3597
        %v3599 = vpop.f32.mrb[0].mxu0
        %3600 = vdwg.mxu0
        %v3601 = vmax.f32 %v3539, 0.0
        %v3602 = vmax.f32 %v3542, 0.0
        %v3603 = vmax.f32 %v3547, 0.0
        %v3604 = vmax.f32 %v3550, 0.0
        %v3605 = vmax.f32 %v3555, 0.0
        %v3606 = vmax.f32 %v3558, 0.0
        %v3607 = vmax.f32 %v3563, 0.0
        %v3608 = vmax.f32 %v3566, 0.0
        %v3609 = vmax.f32 %v3571, 0.0
        %v3610 = vmax.f32 %v3574, 0.0
        %v3611 = vmax.f32 %v3579, 0.0
        %v3612 = vmax.f32 %v3582, 0.0
        %v3613 = vmax.f32 %v3587, 0.0
        %v3614 = vmax.f32 %v3590, 0.0
        %v3615 = vmax.f32 %v3595, 0.0
        %v3616 = vmax.f32 %v3598, 0.0
        %v3617 = vpack.c.bf16 %v3602, %v3601
        %v3618 = vpack.c.bf16 %v3604, %v3603
        %v3619 = vpack.c.bf16 %v3606, %v3605
        %v3620 = vpack.c.bf16 %v3608, %v3607
        %v3621 = vpack.c.bf16 %v3610, %v3609
        %v3622 = vpack.c.bf16 %v3612, %v3611
        %v3623 = vpack.c.bf16 %v3614, %v3613
        %v3624 = vpack.c.bf16 %v3616, %v3615
        %v3633 = vunpack.c.l.b16 %v3617
        %v3634 = vunpack.c.h.b16 %v3617
        %v3635 = vunpack.c.l.b16 %v3618
        %v3636 = vunpack.c.h.b16 %v3618
        %v3637 = vunpack.c.l.b16 %v3619
        %v3638 = vunpack.c.h.b16 %v3619
        %v3639 = vunpack.c.l.b16 %v3620
        %v3640 = vunpack.c.h.b16 %v3620
        %v3641 = vunpack.c.l.b16 %v3621
        %v3642 = vunpack.c.h.b16 %v3621
        %v3643 = vunpack.c.l.b16 %v3622
        %v3644 = vunpack.c.h.b16 %v3622
        %v3645 = vunpack.c.l.b16 %v3623
        %v3646 = vunpack.c.h.b16 %v3623
        %v3647 = vunpack.c.l.b16 %v3624
        %v3648 = vunpack.c.h.b16 %v3624
        %v3649 = vpack.c.b16 %v3633, %v3633
        %v3650 = vpack.c.b16 %v3634, %v3634
        %v3651 = vpack.c.b16 %v3635, %v3635
        %v3652 = vpack.c.b16 %v3636, %v3636
        %v3653 = vpack.c.b16 %v3637, %v3637
        %v3654 = vpack.c.b16 %v3638, %v3638
        %v3655 = vpack.c.b16 %v3639, %v3639
        %v3656 = vpack.c.b16 %v3640, %v3640
        %v3657 = vpack.c.b16 %v3641, %v3641
        %v3658 = vpack.c.b16 %v3642, %v3642
        %v3659 = vpack.c.b16 %v3643, %v3643
        %v3660 = vpack.c.b16 %v3644, %v3644
        %v3661 = vpack.c.b16 %v3645, %v3645
        %v3662 = vpack.c.b16 %v3646, %v3646
        %v3663 = vpack.c.b16 %v3647, %v3647
        %v3664 = vpack.c.b16 %v3648, %v3648
        %3681 = vst [vmem:[%s231] sm:$0xf] %v3649
        %3682 = vst [vmem:[%s231 + $0x4] sm:$0xf] %v3650
        %3683 = vst [vmem:[%s231 + $0x8] sm:$0xf] %v3651
        %3684 = vst [vmem:[%s231 + $0xc] sm:$0xf] %v3652
        %3685 = vst [vmem:[%s231 + $0x10] sm:$0xf] %v3653
        %3686 = vst [vmem:[%s231 + $0x14] sm:$0xf] %v3654
        %3687 = vst [vmem:[%s231 + $0x18] sm:$0xf] %v3655
        %3688 = vst [vmem:[%s231 + $0x1c] sm:$0xf] %v3656
        %3689 = vst [vmem:[%s231 + $0x20] sm:$0xf] %v3657
        %3690 = vst [vmem:[%s231 + $0x24] sm:$0xf] %v3658
        %3691 = vst [vmem:[%s231 + $0x28] sm:$0xf] %v3659
        %3692 = vst [vmem:[%s231 + $0x2c] sm:$0xf] %v3660
        %3693 = vst [vmem:[%s231 + $0x30] sm:$0xf] %v3661
        %3694 = vst [vmem:[%s231 + $0x34] sm:$0xf] %v3662
        %3695 = vst [vmem:[%s231 + $0x38] sm:$0xf] %v3663
        %3696 = vst [vmem:[%s231 + $0x3c] sm:$0xf] %v3664
        %s3697 = sand.u32 %s123, 1
        %s3698 = scalar_lea.sflag [#allocation4], %s3697
        %s3699 = sand.u32 %s123, 1
        %s3700 = smul.addr %s3699, 64
        %s3701 = scalar_lea.vmem [#allocation5], %s3700
        // Predicated region
        $region41: #{tpu_custom_call.1} parent=35 // pred_check
          %p3702 = pneg %p133
        $region42: #{tpu_custom_call.1} parent=35 // pred_check_branch
          %3704 = sbr.rel (%p3702) target = $region44
        $region43: #{tpu_custom_call.1} parent=35 // pred_region
          %s3705 = smul.u32 16, %s21
          %s3707 = ssub.s32 1024, 1024
          %3708 = vsyncadd %s3698, %s3707
          %s3709 = smul.addr %s3705, 64
          %s3710 = scalar_lea.hbm %s4, %s3709
          %s3711 = sshll.u32 %s3701, 4
          %s3712 = int_to_ptr.vmem [resolvable:$true] %s3711
          %3717 = dma.vmem_to_hbm [thread:$0]  %s3712, 1024, %s3710, %s3698, 64, 64, 4
        $region44: #{tpu_custom_call.1} parent=35 // pred_fallthru
          _
      $region36: #{tpu_custom_call.1} parent=5 // pred_fallthru
        _
      %p3718 = scmp.le.s32.totalorder 2, %s16
      // Predicated region
      $region45: #{tpu_custom_call.1} parent=5 // pred_check
        %p3719 = pneg %p3718
      $region46: #{tpu_custom_call.1} parent=5 // pred_check_branch
        %3721 = sbr.rel (%p3719) target = $region48
      $region47: #{tpu_custom_call.1} parent=5 // pred_region
        %s3722 = ssub.s32 %s16, 2
        // Predicated region
        $region49: #{tpu_custom_call.1} parent=47 // pred_check
          %p3723 = pneg %p139
        $region50: #{tpu_custom_call.1} parent=47 // pred_check_branch
          %3725 = sbr.rel (%p3723) target = $region52
        $region51: #{tpu_custom_call.1} parent=47 // pred_region
          %s3726 = sand.u32 %s124, 1
          %s3727 = scalar_lea.sflag [#allocation4], %s3726
          %s3728 = sand.u32 %s124, 1
          %s3729 = smul.addr %s3728, 64
          %s3730 = scalar_lea.vmem [#allocation5], %s3729
          %3731 = dma.done %s3727, 1024
        $region52: #{tpu_custom_call.1} parent=47 // pred_fallthru
          _
      $region48: #{tpu_custom_call.1} parent=5 // pred_fallthru
        _
    $region6: #{tpu_custom_call.1} parent=1 // loop_footer
      %s20 = sadd.s32 1, %s16
    $region7: #{tpu_custom_call.1} parent=1 // loop_footer_branch
      %15 = sbr.rel target = $region3
    $region8: #{tpu_custom_call.1} parent=1 // loop_exit
      _
    %3732 = vsyncpa [#allocation3], 1
    %s3733 = scalar_lea.sflag [#allocation3], 1
    %3734 = vsyncpa %s3733, 1
    %3735 = vsyncpa [#allocation4], 1
    %s3736 = scalar_lea.sflag [#allocation4], 1
    %3737 = vsyncpa %s3736, 1

</llo_original>
